<compile_context>
chip_gen: v6e
topology: v6e:2x2x1
jax: 0.10.0
libtpu: 0.0.40
codegen_flags: <defaults>
</compile_context>

<pallas_src>
import functools

import jax
import jax.numpy as jnp
from jax.experimental import pallas as pl
from jax.experimental.pallas import tpu as pltpu


def _gru2d_wavefront_kernel(nrows, ncols, hidden, batch,
                            gx_ref, wh1_ref, wh2_ref, o_ref):
    """Anti-diagonal wavefront 2D-GRU recurrence.

    gx_ref : (D, S*B, 4H) f32  lane-dense precomputed input gates [r|z|bn1|n]
    wh1_ref: (H, 4H)      bf16 top-hidden weight  -> [r_h1 | z_h1 | n_h1 | 0]
    wh2_ref: (H, 4H)      bf16 left-hidden weight -> [r_h2 | z_h2 | 0 | n_h2]
    o_ref  : (D, S*B, H)  f32  hidden states, diagonal-packed (write-only)

    D = R+C-1 diagonals, S = R slots per diagonal (slot k == row i), slot-major.
    """
    R, C, H, B = nrows, ncols, hidden, batch
    D, SB, _ = gx_ref.shape

    # Loop-invariant: weights + a row-index iota (no captured array constants).
    wh1 = wh1_ref[...]
    wh2 = wh2_ref[...]
    row = jax.lax.broadcasted_iota(jnp.int32, (SB, H), 0)

    h_prev = jnp.zeros((SB, H), jnp.float32)      # previous diagonal, in vregs

    for d in range(D):                            # R+C-1 serial wavefront steps
        # Top neighbour of slot k is previous-diagonal slot k-1: sublane roll
        # through the XLU (otherwise idle) instead of a VPU sublane concat.
        h_top = pltpu.roll(h_prev, shift=B, axis=0)
        if d >= R:
            # Wrapped-in rows hold stale valid data only once d >= R (for d < R
            # they are already exactly zero); enforce the i=0 zero boundary.
            h_top = jnp.where(row < B, 0.0, h_top)
        h_left = h_prev

        # Two accumulating MXU pushes, bf16 operands / f32 accumulation.
        gh = (jnp.dot(h_top.astype(wh1.dtype), wh1,
                      preferred_element_type=jnp.float32) +
              jnp.dot(h_left.astype(wh2.dtype), wh2,
                      preferred_element_type=jnp.float32))

        # gx is pre-packed lane-dense as [r | z | bn1 | n]: one full-vreg add.
        g = gx_ref[d] + gh
        r = jax.nn.sigmoid(g[:, 0:H])
        z = jax.nn.sigmoid(g[:, H:2 * H])
        n = jnp.tanh(g[:, 3 * H:4 * H] + r * g[:, 2 * H:3 * H])
        h = (1.0 - z) * n + z * h_top

        # Zero the j<0 frontier slots (slot > d) so the next diagonal's
        # left-boundary reads for column j=0 see the zero halo.  Slots with
        # j >= C are never read by valid cells, so they are left untouched.
        if d < R - 1:
            h = jnp.where(row < (d + 1) * B, h, 0.0)

        o_ref[d] = h            # write-only store, off the serial chain
        h_prev = h


def _fuse_params(params):
    """Fold biases / build the padded per-neighbour hidden weights."""
    wx, bx, wh1, bh1, wh2, bh2 = params
    H = wh1.shape[0]
    # Biases not under the reset gate are folded into the precomputed gx.
    bias_rz = bx[:, :2 * H] + bh1[:, :2 * H] + bh2[:, :2 * H]   # (1, 2H)
    bias_n = bx[:, 2 * H:] + bh2[:, 2 * H:]                     # (1, H)
    bn1 = bh1[:, 2 * H:]                                        # (1, H) stays under r
    zeros = jnp.zeros((H, H), jnp.float32)
    # h_top  @ Wh1f -> [r_h1 | z_h1 | n_h1 |   0 ]
    # h_left @ Wh2f -> [r_h2 | z_h2 |   0  | n_h2]
    wh1f = jnp.concatenate([wh1[:, :2 * H], wh1[:, 2 * H:], zeros], axis=-1)
    wh2f = jnp.concatenate([wh2[:, :2 * H], zeros, wh2[:, 2 * H:]], axis=-1)
    # bf16 is an MXU-operand-only cast; accumulation and gate math stay f32.
    return bias_rz, bias_n, bn1, wh1f.astype(jnp.bfloat16), wh2f.astype(jnp.bfloat16)


def recurrent2d_forward(x_nchw, params):
    """x_nchw: (B, D_in, R, C) float32 -> hidden grid (B, H, R, C) float32."""
    wx, bx, wh1, bh1, wh2, bh2 = params
    B, Din, R, C = x_nchw.shape
    H = wh1.shape[0]
    D = R + C - 1
    S = R
    bias_rz, bias_n, bn1, wh1f, wh2f = _fuse_params(params)

    # Input-path gates for every cell as one big matmul (off the serial path),
    # packed lane-dense as 4H = [r | z | bn1 | n].
    gx = jnp.einsum('bdrc,dg->rcbg', x_nchw, wx,
                    precision=jax.lax.Precision.HIGHEST)           # (R, C, B, 3H)
    gx4 = jnp.concatenate([
        gx[..., :2 * H] + bias_rz,                                 # r, z lanes
        jnp.broadcast_to(bn1, (R, C, B, H)),                       # n_h1 lanes
        gx[..., 2 * H:] + bias_n,                                  # n lanes
    ], axis=-1)                                                    # (R, C, B, 4H)

    # Anti-diagonal packing: diag d, slot k <-> cell (i=k, j=d-k); invalid -> 0.
    # TODO(synk): at large R*C replace this gather (and the unpack below) with a
    # pad-and-reshape skew to avoid HBM gathers on low-bandwidth parts (v5e).
    dd = jnp.arange(D)[:, None]
    kk = jnp.arange(S)[None, :]
    jj = dd - kk
    valid = (jj >= 0) & (jj < C)
    gx_diag = jnp.where(valid[..., None, None],
                        gx4[kk, jnp.clip(jj, 0, C - 1)], 0.0)      # (D, S, B, 4H)
    gx_diag = gx_diag.reshape(D, S * B, 4 * H)

    vmem = pl.BlockSpec(memory_space=pltpu.MemorySpace.VMEM)
    io_bytes = (gx_diag.size + D * S * B * H) * 4 + (wh1f.size + wh2f.size) * 2
    h_diag = pl.pallas_call(
        functools.partial(_gru2d_wavefront_kernel, R, C, H, B),
        out_shape=jax.ShapeDtypeStruct((D, S * B, H), jnp.float32),
        in_specs=[vmem, vmem, vmem],
        out_specs=vmem,
        compiler_params=pltpu.CompilerParams(
            # cap well under v7x's 64 MiB physical VMEM
            vmem_limit_bytes=min(int(2 * io_bytes) + (32 << 20), 48 << 20)),
        cost_estimate=pl.CostEstimate(
            flops=16 * D * (S * B) * H * H + 12 * D * S * B * H,
            transcendentals=3 * D * S * B * H,
            bytes_accessed=int(io_bytes)),
    )(gx_diag, wh1f, wh2f)

    # Unpack: cell (i, j) lives at (diag i+j, slot i).
    h_diag = h_diag.reshape(D, S, B, H)
    ii = jnp.arange(R)[:, None]
    jc = jnp.arange(C)[None, :]
    h_grid = h_diag[ii + jc, ii]                                   # (R, C, B, H)
    return jnp.transpose(h_grid, (2, 3, 0, 1))                     # (B, H, R, C)


def init_params(key, input_dim, hidden_dim):
    """Deterministic PyTorch-Linear-style init: U(-1/sqrt(fan_in), +1/sqrt(fan_in))."""
    ks = jax.random.split(key, 6)

    def lin(kw, kb, fan_in, fan_out):
        bound = float(fan_in) ** -0.5
        w = jax.random.uniform(kw, (fan_in, fan_out), jnp.float32, -bound, bound)
        b = jax.random.uniform(kb, (1, fan_out), jnp.float32, -bound, bound)
        return w, b

    wx, bx = lin(ks[0], ks[1], input_dim, 3 * hidden_dim)
    wh1, bh1 = lin(ks[2], ks[3], hidden_dim, 3 * hidden_dim)
    wh2, bh2 = lin(ks[4], ks[5], hidden_dim, 3 * hidden_dim)
    return wx, bx, wh1, bh1, wh2, bh2


def reference_forward(x_nchw, params):
    """Pure-JAX reference of the same 2D-GRU recurrence (Python loops).

    Hidden-path matmul operands are cast to bf16 (f32 accumulation), matching
    the kernel's MXU precision; everything else is f32.
    """
    wx, bx, wh1, bh1, wh2, bh2 = params
    B, Din, R, C = x_nchw.shape
    H = wh1.shape[0]
    xs = jnp.transpose(x_nchw, (2, 3, 0, 1))   # (R, C, B, Din)
    h_grid = jnp.zeros((R, C, B, H), jnp.float32)
    zero_h = jnp.zeros((B, H), jnp.float32)

    def hdot(h, w):
        return jnp.dot(h.astype(jnp.bfloat16), w.astype(jnp.bfloat16),
                       preferred_element_type=jnp.float32)

    for i in range(R):
        for j in range(C):
            h_top = h_grid[i - 1, j] if i > 0 else zero_h
            h_left = h_grid[i, j - 1] if j > 0 else zero_h
            gx = jnp.dot(xs[i, j], wx, precision=jax.lax.Precision.HIGHEST) + bx
            g1 = hdot(h_top, wh1) + bh1
            g2 = hdot(h_left, wh2) + bh2
            r = jax.nn.sigmoid(gx[:, :H] + g1[:, :H] + g2[:, :H])
            z = jax.nn.sigmoid(gx[:, H:2 * H] + g1[:, H:2 * H] + g2[:, H:2 * H])
            n = jnp.tanh(gx[:, 2 * H:] + g2[:, 2 * H:] + r * g1[:, 2 * H:])
            h = (1.0 - z) * n + z * h_top
            h_grid = h_grid.at[i, j].set(h)
    return jnp.transpose(h_grid, (2, 3, 0, 1))


if __name__ == "__main__":
    key = jax.random.PRNGKey(0)
    k_x, k_p = jax.random.split(key)

    B, D_IN, R, C, H = 2, 4, 8, 8, 32   # input_dim1=4, hidden_dim=32, 8x8 grid
    x = jax.random.normal(k_x, (B, D_IN, R, C), jnp.float32)
    params = init_params(k_p, D_IN, H)

    fwd = jax.jit(recurrent2d_forward)
    out = jax.block_until_ready(fwd(x, params))
    ref = jax.block_until_ready(reference_forward(x, params))

    assert out.shape == (B, H, R, C)
    max_err = float(jnp.max(jnp.abs(out - ref)))
    assert jnp.allclose(out, ref, rtol=5e-3, atol=5e-3), f"max abs err {max_err}"
    print("KERNEL_OK")
</pallas_src>

<mosaic_0001>
module attributes {stable_mosaic.version = 11 : i64} {
  func.func @_gru2d_wavefront_kernel(%arg0: memref<15x16x128xf32, #tpu.memory_space<vmem>>, %arg1: memref<32x128xbf16, #tpu.memory_space<vmem>>, %arg2: memref<32x128xbf16, #tpu.memory_space<vmem>>, %arg3: memref<15x16x32xf32, #tpu.memory_space<vmem>>) attributes {dimension_semantics = [], scalar_prefetch = 0 : i64, scratch_operands = 0 : i64, tpu.core_type = #tpu.core_type<tc>} {
    %c0 = arith.constant 0 : index
    %c0_0 = arith.constant 0 : index
    %0 = vector.load %arg1[%c0, %c0_0] : memref<32x128xbf16, #tpu.memory_space<vmem>>, vector<32x128xbf16>
    %c0_1 = arith.constant 0 : index
    %c0_2 = arith.constant 0 : index
    %1 = vector.load %arg2[%c0_1, %c0_2] : memref<32x128xbf16, #tpu.memory_space<vmem>>, vector<32x128xbf16>
    %2 = tpu.iota {dimensions = array<i32: 0>} : vector<16x32xi32>
    %cst = arith.constant 0.000000e+00 : f32
    %3 = vector.broadcast %cst : f32 to vector<16x32xf32>
    %c2_i32 = arith.constant 2 : i32
    %4 = tpu.dynamic_rotate %3 by %c2_i32 dim 0 : vector<16x32xf32>, i32 -> vector<16x32xf32>
    %5 = arith.truncf %4 : vector<16x32xf32> to vector<16x32xbf16>
    %cst_3 = arith.constant dense<0.000000e+00> : vector<16x128xf32>
    %6 = tpu.matmul %5, %0, %cst_3 {dimension_numbers = #tpu.dot_dimension_numbers<[1], [0], [0], [1], [0, 0, 1, 1], [], []>} : vector<16x32xbf16>, vector<32x128xbf16>, vector<16x128xf32> -> vector<16x128xf32>
    %7 = arith.truncf %3 : vector<16x32xf32> to vector<16x32xbf16>
    %cst_4 = arith.constant dense<0.000000e+00> : vector<16x128xf32>
    %8 = tpu.matmul %7, %1, %cst_4 {dimension_numbers = #tpu.dot_dimension_numbers<[1], [0], [0], [1], [0, 0, 1, 1], [], []>} : vector<16x32xbf16>, vector<32x128xbf16>, vector<16x128xf32> -> vector<16x128xf32>
    %9 = arith.addf %6, %8 : vector<16x128xf32>
    %c0_5 = arith.constant 0 : index
    %c0_6 = arith.constant 0 : index
    %c0_7 = arith.constant 0 : index
    %10 = vector.load %arg0[%c0_5, %c0_6, %c0_7] : memref<15x16x128xf32, #tpu.memory_space<vmem>>, vector<1x16x128xf32>
    %11 = vector.shape_cast %10 : vector<1x16x128xf32> to vector<16x128xf32>
    %12 = arith.addf %11, %9 : vector<16x128xf32>
    %13 = vector.extract_strided_slice %12 {offsets = [0, 0], sizes = [16, 32], strides = [1, 1]} : vector<16x128xf32> to vector<16x32xf32>
    %14 = arith.negf %13 : vector<16x32xf32>
    %15 = math.exp %14 : vector<16x32xf32>
    %cst_8 = arith.constant 1.000000e+00 : f32
    %16 = vector.broadcast %cst_8 : f32 to vector<16x32xf32>
    %17 = arith.addf %16, %15 : vector<16x32xf32>
    %18 = arith.divf %16, %17 : vector<16x32xf32>
    %19 = vector.extract_strided_slice %12 {offsets = [0, 32], sizes = [16, 32], strides = [1, 1]} : vector<16x128xf32> to vector<16x32xf32>
    %20 = arith.negf %19 : vector<16x32xf32>
    %21 = math.exp %20 : vector<16x32xf32>
    %cst_9 = arith.constant 1.000000e+00 : f32
    %22 = vector.broadcast %cst_9 : f32 to vector<16x32xf32>
    %23 = arith.addf %22, %21 : vector<16x32xf32>
    %24 = arith.divf %22, %23 : vector<16x32xf32>
    %25 = vector.extract_strided_slice %12 {offsets = [0, 96], sizes = [16, 32], strides = [1, 1]} : vector<16x128xf32> to vector<16x32xf32>
    %26 = vector.extract_strided_slice %12 {offsets = [0, 64], sizes = [16, 32], strides = [1, 1]} : vector<16x128xf32> to vector<16x32xf32>
    %27 = arith.mulf %18, %26 : vector<16x32xf32>
    %28 = arith.addf %25, %27 : vector<16x32xf32>
    %29 = math.tanh %28 : vector<16x32xf32>
    %cst_10 = arith.constant 1.000000e+00 : f32
    %30 = vector.broadcast %cst_10 : f32 to vector<16x32xf32>
    %31 = arith.subf %30, %24 : vector<16x32xf32>
    %32 = arith.mulf %31, %29 : vector<16x32xf32>
    %33 = arith.mulf %24, %4 : vector<16x32xf32>
    %34 = arith.addf %32, %33 : vector<16x32xf32>
    %c2_i32_11 = arith.constant 2 : i32
    %35 = vector.broadcast %c2_i32_11 : i32 to vector<16x32xi32>
    %36 = arith.cmpi slt, %2, %35 : vector<16x32xi32>
    %cst_12 = arith.constant 0.000000e+00 : f32
    %37 = vector.broadcast %cst_12 : f32 to vector<16x32xf32>
    %38 = arith.select %36, %34, %37 : vector<16x32xi1>, vector<16x32xf32>
    %c0_13 = arith.constant 0 : index
    %c0_14 = arith.constant 0 : index
    %c0_15 = arith.constant 0 : index
    %39 = vector.load %arg3[%c0_13, %c0_14, %c0_15] : memref<15x16x32xf32, #tpu.memory_space<vmem>>, vector<1x16x32xf32>
    %40 = vector.shape_cast %39 : vector<1x16x32xf32> to vector<16x32xf32>
    %41 = vector.shape_cast %38 : vector<16x32xf32> to vector<1x16x32xf32>
    tpu.vector_store %arg3[%c0_13, %c0_14, %c0_15], %41 {strides = array<i32>} : memref<15x16x32xf32, #tpu.memory_space<vmem>>, vector<1x16x32xf32>,
    %c2_i32_16 = arith.constant 2 : i32
    %42 = tpu.dynamic_rotate %38 by %c2_i32_16 dim 0 : vector<16x32xf32>, i32 -> vector<16x32xf32>
    %43 = arith.truncf %42 : vector<16x32xf32> to vector<16x32xbf16>
    %cst_17 = arith.constant dense<0.000000e+00> : vector<16x128xf32>
    %44 = tpu.matmul %43, %0, %cst_17 {dimension_numbers = #tpu.dot_dimension_numbers<[1], [0], [0], [1], [0, 0, 1, 1], [], []>} : vector<16x32xbf16>, vector<32x128xbf16>, vector<16x128xf32> -> vector<16x128xf32>
    %45 = arith.truncf %38 : vector<16x32xf32> to vector<16x32xbf16>
    %cst_18 = arith.constant dense<0.000000e+00> : vector<16x128xf32>
    %46 = tpu.matmul %45, %1, %cst_18 {dimension_numbers = #tpu.dot_dimension_numbers<[1], [0], [0], [1], [0, 0, 1, 1], [], []>} : vector<16x32xbf16>, vector<32x128xbf16>, vector<16x128xf32> -> vector<16x128xf32>
    %47 = arith.addf %44, %46 : vector<16x128xf32>
    %c1 = arith.constant 1 : index
    %c0_19 = arith.constant 0 : index
    %c0_20 = arith.constant 0 : index
    %48 = vector.load %arg0[%c1, %c0_19, %c0_20] : memref<15x16x128xf32, #tpu.memory_space<vmem>>, vector<1x16x128xf32>
    %49 = vector.shape_cast %48 : vector<1x16x128xf32> to vector<16x128xf32>
    %50 = arith.addf %49, %47 : vector<16x128xf32>
    %51 = vector.extract_strided_slice %50 {offsets = [0, 0], sizes = [16, 32], strides = [1, 1]} : vector<16x128xf32> to vector<16x32xf32>
    %52 = arith.negf %51 : vector<16x32xf32>
    %53 = math.exp %52 : vector<16x32xf32>
    %cst_21 = arith.constant 1.000000e+00 : f32
    %54 = vector.broadcast %cst_21 : f32 to vector<16x32xf32>
    %55 = arith.addf %54, %53 : vector<16x32xf32>
    %56 = arith.divf %54, %55 : vector<16x32xf32>
    %57 = vector.extract_strided_slice %50 {offsets = [0, 32], sizes = [16, 32], strides = [1, 1]} : vector<16x128xf32> to vector<16x32xf32>
    %58 = arith.negf %57 : vector<16x32xf32>
    %59 = math.exp %58 : vector<16x32xf32>
    %cst_22 = arith.constant 1.000000e+00 : f32
    %60 = vector.broadcast %cst_22 : f32 to vector<16x32xf32>
    %61 = arith.addf %60, %59 : vector<16x32xf32>
    %62 = arith.divf %60, %61 : vector<16x32xf32>
    %63 = vector.extract_strided_slice %50 {offsets = [0, 96], sizes = [16, 32], strides = [1, 1]} : vector<16x128xf32> to vector<16x32xf32>
    %64 = vector.extract_strided_slice %50 {offsets = [0, 64], sizes = [16, 32], strides = [1, 1]} : vector<16x128xf32> to vector<16x32xf32>
    %65 = arith.mulf %56, %64 : vector<16x32xf32>
    %66 = arith.addf %63, %65 : vector<16x32xf32>
    %67 = math.tanh %66 : vector<16x32xf32>
    %cst_23 = arith.constant 1.000000e+00 : f32
    %68 = vector.broadcast %cst_23 : f32 to vector<16x32xf32>
    %69 = arith.subf %68, %62 : vector<16x32xf32>
    %70 = arith.mulf %69, %67 : vector<16x32xf32>
    %71 = arith.mulf %62, %42 : vector<16x32xf32>
    %72 = arith.addf %70, %71 : vector<16x32xf32>
    %c4_i32 = arith.constant 4 : i32
    %73 = vector.broadcast %c4_i32 : i32 to vector<16x32xi32>
    %74 = arith.cmpi slt, %2, %73 : vector<16x32xi32>
    %cst_24 = arith.constant 0.000000e+00 : f32
    %75 = vector.broadcast %cst_24 : f32 to vector<16x32xf32>
    %76 = arith.select %74, %72, %75 : vector<16x32xi1>, vector<16x32xf32>
    %c1_25 = arith.constant 1 : index
    %c0_26 = arith.constant 0 : index
    %c0_27 = arith.constant 0 : index
    %77 = vector.load %arg3[%c1_25, %c0_26, %c0_27] : memref<15x16x32xf32, #tpu.memory_space<vmem>>, vector<1x16x32xf32>
    %78 = vector.shape_cast %77 : vector<1x16x32xf32> to vector<16x32xf32>
    %79 = vector.shape_cast %76 : vector<16x32xf32> to vector<1x16x32xf32>
    tpu.vector_store %arg3[%c1_25, %c0_26, %c0_27], %79 {strides = array<i32>} : memref<15x16x32xf32, #tpu.memory_space<vmem>>, vector<1x16x32xf32>,
    %c2_i32_28 = arith.constant 2 : i32
    %80 = tpu.dynamic_rotate %76 by %c2_i32_28 dim 0 : vector<16x32xf32>, i32 -> vector<16x32xf32>
    %81 = arith.truncf %80 : vector<16x32xf32> to vector<16x32xbf16>
    %cst_29 = arith.constant dense<0.000000e+00> : vector<16x128xf32>
    %82 = tpu.matmul %81, %0, %cst_29 {dimension_numbers = #tpu.dot_dimension_numbers<[1], [0], [0], [1], [0, 0, 1, 1], [], []>} : vector<16x32xbf16>, vector<32x128xbf16>, vector<16x128xf32> -> vector<16x128xf32>
    %83 = arith.truncf %76 : vector<16x32xf32> to vector<16x32xbf16>
    %cst_30 = arith.constant dense<0.000000e+00> : vector<16x128xf32>
    %84 = tpu.matmul %83, %1, %cst_30 {dimension_numbers = #tpu.dot_dimension_numbers<[1], [0], [0], [1], [0, 0, 1, 1], [], []>} : vector<16x32xbf16>, vector<32x128xbf16>, vector<16x128xf32> -> vector<16x128xf32>
    %85 = arith.addf %82, %84 : vector<16x128xf32>
    %c2 = arith.constant 2 : index
    %c0_31 = arith.constant 0 : index
    %c0_32 = arith.constant 0 : index
    %86 = vector.load %arg0[%c2, %c0_31, %c0_32] : memref<15x16x128xf32, #tpu.memory_space<vmem>>, vector<1x16x128xf32>
    %87 = vector.shape_cast %86 : vector<1x16x128xf32> to vector<16x128xf32>
    %88 = arith.addf %87, %85 : vector<16x128xf32>
    %89 = vector.extract_strided_slice %88 {offsets = [0, 0], sizes = [16, 32], strides = [1, 1]} : vector<16x128xf32> to vector<16x32xf32>
    %90 = arith.negf %89 : vector<16x32xf32>
    %91 = math.exp %90 : vector<16x32xf32>
    %cst_33 = arith.constant 1.000000e+00 : f32
    %92 = vector.broadcast %cst_33 : f32 to vector<16x32xf32>
    %93 = arith.addf %92, %91 : vector<16x32xf32>
    %94 = arith.divf %92, %93 : vector<16x32xf32>
    %95 = vector.extract_strided_slice %88 {offsets = [0, 32], sizes = [16, 32], strides = [1, 1]} : vector<16x128xf32> to vector<16x32xf32>
    %96 = arith.negf %95 : vector<16x32xf32>
    %97 = math.exp %96 : vector<16x32xf32>
    %cst_34 = arith.constant 1.000000e+00 : f32
    %98 = vector.broadcast %cst_34 : f32 to vector<16x32xf32>
    %99 = arith.addf %98, %97 : vector<16x32xf32>
    %100 = arith.divf %98, %99 : vector<16x32xf32>
    %101 = vector.extract_strided_slice %88 {offsets = [0, 96], sizes = [16, 32], strides = [1, 1]} : vector<16x128xf32> to vector<16x32xf32>
    %102 = vector.extract_strided_slice %88 {offsets = [0, 64], sizes = [16, 32], strides = [1, 1]} : vector<16x128xf32> to vector<16x32xf32>
    %103 = arith.mulf %94, %102 : vector<16x32xf32>
    %104 = arith.addf %101, %103 : vector<16x32xf32>
    %105 = math.tanh %104 : vector<16x32xf32>
    %cst_35 = arith.constant 1.000000e+00 : f32
    %106 = vector.broadcast %cst_35 : f32 to vector<16x32xf32>
    %107 = arith.subf %106, %100 : vector<16x32xf32>
    %108 = arith.mulf %107, %105 : vector<16x32xf32>
    %109 = arith.mulf %100, %80 : vector<16x32xf32>
    %110 = arith.addf %108, %109 : vector<16x32xf32>
    %c6_i32 = arith.constant 6 : i32
    %111 = vector.broadcast %c6_i32 : i32 to vector<16x32xi32>
    %112 = arith.cmpi slt, %2, %111 : vector<16x32xi32>
    %cst_36 = arith.constant 0.000000e+00 : f32
    %113 = vector.broadcast %cst_36 : f32 to vector<16x32xf32>
    %114 = arith.select %112, %110, %113 : vector<16x32xi1>, vector<16x32xf32>
    %c2_37 = arith.constant 2 : index
    %c0_38 = arith.constant 0 : index
    %c0_39 = arith.constant 0 : index
    %115 = vector.load %arg3[%c2_37, %c0_38, %c0_39] : memref<15x16x32xf32, #tpu.memory_space<vmem>>, vector<1x16x32xf32>
    %116 = vector.shape_cast %115 : vector<1x16x32xf32> to vector<16x32xf32>
    %117 = vector.shape_cast %114 : vector<16x32xf32> to vector<1x16x32xf32>
    tpu.vector_store %arg3[%c2_37, %c0_38, %c0_39], %117 {strides = array<i32>} : memref<15x16x32xf32, #tpu.memory_space<vmem>>, vector<1x16x32xf32>,
    %c2_i32_40 = arith.constant 2 : i32
    %118 = tpu.dynamic_rotate %114 by %c2_i32_40 dim 0 : vector<16x32xf32>, i32 -> vector<16x32xf32>
    %119 = arith.truncf %118 : vector<16x32xf32> to vector<16x32xbf16>
    %cst_41 = arith.constant dense<0.000000e+00> : vector<16x128xf32>
    %120 = tpu.matmul %119, %0, %cst_41 {dimension_numbers = #tpu.dot_dimension_numbers<[1], [0], [0], [1], [0, 0, 1, 1], [], []>} : vector<16x32xbf16>, vector<32x128xbf16>, vector<16x128xf32> -> vector<16x128xf32>
    %121 = arith.truncf %114 : vector<16x32xf32> to vector<16x32xbf16>
    %cst_42 = arith.constant dense<0.000000e+00> : vector<16x128xf32>
    %122 = tpu.matmul %121, %1, %cst_42 {dimension_numbers = #tpu.dot_dimension_numbers<[1], [0], [0], [1], [0, 0, 1, 1], [], []>} : vector<16x32xbf16>, vector<32x128xbf16>, vector<16x128xf32> -> vector<16x128xf32>
    %123 = arith.addf %120, %122 : vector<16x128xf32>
    %c3 = arith.constant 3 : index
    %c0_43 = arith.constant 0 : index
    %c0_44 = arith.constant 0 : index
    %124 = vector.load %arg0[%c3, %c0_43, %c0_44] : memref<15x16x128xf32, #tpu.memory_space<vmem>>, vector<1x16x128xf32>
    %125 = vector.shape_cast %124 : vector<1x16x128xf32> to vector<16x128xf32>
    %126 = arith.addf %125, %123 : vector<16x128xf32>
    %127 = vector.extract_strided_slice %126 {offsets = [0, 0], sizes = [16, 32], strides = [1, 1]} : vector<16x128xf32> to vector<16x32xf32>
    %128 = arith.negf %127 : vector<16x32xf32>
    %129 = math.exp %128 : vector<16x32xf32>
    %cst_45 = arith.constant 1.000000e+00 : f32
    %130 = vector.broadcast %cst_45 : f32 to vector<16x32xf32>
    %131 = arith.addf %130, %129 : vector<16x32xf32>
    %132 = arith.divf %130, %131 : vector<16x32xf32>
    %133 = vector.extract_strided_slice %126 {offsets = [0, 32], sizes = [16, 32], strides = [1, 1]} : vector<16x128xf32> to vector<16x32xf32>
    %134 = arith.negf %133 : vector<16x32xf32>
    %135 = math.exp %134 : vector<16x32xf32>
    %cst_46 = arith.constant 1.000000e+00 : f32
    %136 = vector.broadcast %cst_46 : f32 to vector<16x32xf32>
    %137 = arith.addf %136, %135 : vector<16x32xf32>
    %138 = arith.divf %136, %137 : vector<16x32xf32>
    %139 = vector.extract_strided_slice %126 {offsets = [0, 96], sizes = [16, 32], strides = [1, 1]} : vector<16x128xf32> to vector<16x32xf32>
    %140 = vector.extract_strided_slice %126 {offsets = [0, 64], sizes = [16, 32], strides = [1, 1]} : vector<16x128xf32> to vector<16x32xf32>
    %141 = arith.mulf %132, %140 : vector<16x32xf32>
    %142 = arith.addf %139, %141 : vector<16x32xf32>
    %143 = math.tanh %142 : vector<16x32xf32>
    %cst_47 = arith.constant 1.000000e+00 : f32
    %144 = vector.broadcast %cst_47 : f32 to vector<16x32xf32>
    %145 = arith.subf %144, %138 : vector<16x32xf32>
    %146 = arith.mulf %145, %143 : vector<16x32xf32>
    %147 = arith.mulf %138, %118 : vector<16x32xf32>
    %148 = arith.addf %146, %147 : vector<16x32xf32>
    %c8_i32 = arith.constant 8 : i32
    %149 = vector.broadcast %c8_i32 : i32 to vector<16x32xi32>
    %150 = arith.cmpi slt, %2, %149 : vector<16x32xi32>
    %cst_48 = arith.constant 0.000000e+00 : f32
    %151 = vector.broadcast %cst_48 : f32 to vector<16x32xf32>
    %152 = arith.select %150, %148, %151 : vector<16x32xi1>, vector<16x32xf32>
    %c3_49 = arith.constant 3 : index
    %c0_50 = arith.constant 0 : index
    %c0_51 = arith.constant 0 : index
    %153 = vector.load %arg3[%c3_49, %c0_50, %c0_51] : memref<15x16x32xf32, #tpu.memory_space<vmem>>, vector<1x16x32xf32>
    %154 = vector.shape_cast %153 : vector<1x16x32xf32> to vector<16x32xf32>
    %155 = vector.shape_cast %152 : vector<16x32xf32> to vector<1x16x32xf32>
    tpu.vector_store %arg3[%c3_49, %c0_50, %c0_51], %155 {strides = array<i32>} : memref<15x16x32xf32, #tpu.memory_space<vmem>>, vector<1x16x32xf32>,
    %c2_i32_52 = arith.constant 2 : i32
    %156 = tpu.dynamic_rotate %152 by %c2_i32_52 dim 0 : vector<16x32xf32>, i32 -> vector<16x32xf32>
    %157 = arith.truncf %156 : vector<16x32xf32> to vector<16x32xbf16>
    %cst_53 = arith.constant dense<0.000000e+00> : vector<16x128xf32>
    %158 = tpu.matmul %157, %0, %cst_53 {dimension_numbers = #tpu.dot_dimension_numbers<[1], [0], [0], [1], [0, 0, 1, 1], [], []>} : vector<16x32xbf16>, vector<32x128xbf16>, vector<16x128xf32> -> vector<16x128xf32>
    %159 = arith.truncf %152 : vector<16x32xf32> to vector<16x32xbf16>
    %cst_54 = arith.constant dense<0.000000e+00> : vector<16x128xf32>
    %160 = tpu.matmul %159, %1, %cst_54 {dimension_numbers = #tpu.dot_dimension_numbers<[1], [0], [0], [1], [0, 0, 1, 1], [], []>} : vector<16x32xbf16>, vector<32x128xbf16>, vector<16x128xf32> -> vector<16x128xf32>
    %161 = arith.addf %158, %160 : vector<16x128xf32>
    %c4 = arith.constant 4 : index
    %c0_55 = arith.constant 0 : index
    %c0_56 = arith.constant 0 : index
    %162 = vector.load %arg0[%c4, %c0_55, %c0_56] : memref<15x16x128xf32, #tpu.memory_space<vmem>>, vector<1x16x128xf32>
    %163 = vector.shape_cast %162 : vector<1x16x128xf32> to vector<16x128xf32>
    %164 = arith.addf %163, %161 : vector<16x128xf32>
    %165 = vector.extract_strided_slice %164 {offsets = [0, 0], sizes = [16, 32], strides = [1, 1]} : vector<16x128xf32> to vector<16x32xf32>
    %166 = arith.negf %165 : vector<16x32xf32>
    %167 = math.exp %166 : vector<16x32xf32>
    %cst_57 = arith.constant 1.000000e+00 : f32
    %168 = vector.broadcast %cst_57 : f32 to vector<16x32xf32>
    %169 = arith.addf %168, %167 : vector<16x32xf32>
    %170 = arith.divf %168, %169 : vector<16x32xf32>
    %171 = vector.extract_strided_slice %164 {offsets = [0, 32], sizes = [16, 32], strides = [1, 1]} : vector<16x128xf32> to vector<16x32xf32>
    %172 = arith.negf %171 : vector<16x32xf32>
    %173 = math.exp %172 : vector<16x32xf32>
    %cst_58 = arith.constant 1.000000e+00 : f32
    %174 = vector.broadcast %cst_58 : f32 to vector<16x32xf32>
    %175 = arith.addf %174, %173 : vector<16x32xf32>
    %176 = arith.divf %174, %175 : vector<16x32xf32>
    %177 = vector.extract_strided_slice %164 {offsets = [0, 96], sizes = [16, 32], strides = [1, 1]} : vector<16x128xf32> to vector<16x32xf32>
    %178 = vector.extract_strided_slice %164 {offsets = [0, 64], sizes = [16, 32], strides = [1, 1]} : vector<16x128xf32> to vector<16x32xf32>
    %179 = arith.mulf %170, %178 : vector<16x32xf32>
    %180 = arith.addf %177, %179 : vector<16x32xf32>
    %181 = math.tanh %180 : vector<16x32xf32>
    %cst_59 = arith.constant 1.000000e+00 : f32
    %182 = vector.broadcast %cst_59 : f32 to vector<16x32xf32>
    %183 = arith.subf %182, %176 : vector<16x32xf32>
    %184 = arith.mulf %183, %181 : vector<16x32xf32>
    %185 = arith.mulf %176, %156 : vector<16x32xf32>
    %186 = arith.addf %184, %185 : vector<16x32xf32>
    %c10_i32 = arith.constant 10 : i32
    %187 = vector.broadcast %c10_i32 : i32 to vector<16x32xi32>
    %188 = arith.cmpi slt, %2, %187 : vector<16x32xi32>
    %cst_60 = arith.constant 0.000000e+00 : f32
    %189 = vector.broadcast %cst_60 : f32 to vector<16x32xf32>
    %190 = arith.select %188, %186, %189 : vector<16x32xi1>, vector<16x32xf32>
    %c4_61 = arith.constant 4 : index
    %c0_62 = arith.constant 0 : index
    %c0_63 = arith.constant 0 : index
    %191 = vector.load %arg3[%c4_61, %c0_62, %c0_63] : memref<15x16x32xf32, #tpu.memory_space<vmem>>, vector<1x16x32xf32>
    %192 = vector.shape_cast %191 : vector<1x16x32xf32> to vector<16x32xf32>
    %193 = vector.shape_cast %190 : vector<16x32xf32> to vector<1x16x32xf32>
    tpu.vector_store %arg3[%c4_61, %c0_62, %c0_63], %193 {strides = array<i32>} : memref<15x16x32xf32, #tpu.memory_space<vmem>>, vector<1x16x32xf32>,
    %c2_i32_64 = arith.constant 2 : i32
    %194 = tpu.dynamic_rotate %190 by %c2_i32_64 dim 0 : vector<16x32xf32>, i32 -> vector<16x32xf32>
    %195 = arith.truncf %194 : vector<16x32xf32> to vector<16x32xbf16>
    %cst_65 = arith.constant dense<0.000000e+00> : vector<16x128xf32>
    %196 = tpu.matmul %195, %0, %cst_65 {dimension_numbers = #tpu.dot_dimension_numbers<[1], [0], [0], [1], [0, 0, 1, 1], [], []>} : vector<16x32xbf16>, vector<32x128xbf16>, vector<16x128xf32> -> vector<16x128xf32>
    %197 = arith.truncf %190 : vector<16x32xf32> to vector<16x32xbf16>
    %cst_66 = arith.constant dense<0.000000e+00> : vector<16x128xf32>
    %198 = tpu.matmul %197, %1, %cst_66 {dimension_numbers = #tpu.dot_dimension_numbers<[1], [0], [0], [1], [0, 0, 1, 1], [], []>} : vector<16x32xbf16>, vector<32x128xbf16>, vector<16x128xf32> -> vector<16x128xf32>
    %199 = arith.addf %196, %198 : vector<16x128xf32>
    %c5 = arith.constant 5 : index
    %c0_67 = arith.constant 0 : index
    %c0_68 = arith.constant 0 : index
    %200 = vector.load %arg0[%c5, %c0_67, %c0_68] : memref<15x16x128xf32, #tpu.memory_space<vmem>>, vector<1x16x128xf32>
    %201 = vector.shape_cast %200 : vector<1x16x128xf32> to vector<16x128xf32>
    %202 = arith.addf %201, %199 : vector<16x128xf32>
    %203 = vector.extract_strided_slice %202 {offsets = [0, 0], sizes = [16, 32], strides = [1, 1]} : vector<16x128xf32> to vector<16x32xf32>
    %204 = arith.negf %203 : vector<16x32xf32>
    %205 = math.exp %204 : vector<16x32xf32>
    %cst_69 = arith.constant 1.000000e+00 : f32
    %206 = vector.broadcast %cst_69 : f32 to vector<16x32xf32>
    %207 = arith.addf %206, %205 : vector<16x32xf32>
    %208 = arith.divf %206, %207 : vector<16x32xf32>
    %209 = vector.extract_strided_slice %202 {offsets = [0, 32], sizes = [16, 32], strides = [1, 1]} : vector<16x128xf32> to vector<16x32xf32>
    %210 = arith.negf %209 : vector<16x32xf32>
    %211 = math.exp %210 : vector<16x32xf32>
    %cst_70 = arith.constant 1.000000e+00 : f32
    %212 = vector.broadcast %cst_70 : f32 to vector<16x32xf32>
    %213 = arith.addf %212, %211 : vector<16x32xf32>
    %214 = arith.divf %212, %213 : vector<16x32xf32>
    %215 = vector.extract_strided_slice %202 {offsets = [0, 96], sizes = [16, 32], strides = [1, 1]} : vector<16x128xf32> to vector<16x32xf32>
    %216 = vector.extract_strided_slice %202 {offsets = [0, 64], sizes = [16, 32], strides = [1, 1]} : vector<16x128xf32> to vector<16x32xf32>
    %217 = arith.mulf %208, %216 : vector<16x32xf32>
    %218 = arith.addf %215, %217 : vector<16x32xf32>
    %219 = math.tanh %218 : vector<16x32xf32>
    %cst_71 = arith.constant 1.000000e+00 : f32
    %220 = vector.broadcast %cst_71 : f32 to vector<16x32xf32>
    %221 = arith.subf %220, %214 : vector<16x32xf32>
    %222 = arith.mulf %221, %219 : vector<16x32xf32>
    %223 = arith.mulf %214, %194 : vector<16x32xf32>
    %224 = arith.addf %222, %223 : vector<16x32xf32>
    %c12_i32 = arith.constant 12 : i32
    %225 = vector.broadcast %c12_i32 : i32 to vector<16x32xi32>
    %226 = arith.cmpi slt, %2, %225 : vector<16x32xi32>
    %cst_72 = arith.constant 0.000000e+00 : f32
    %227 = vector.broadcast %cst_72 : f32 to vector<16x32xf32>
    %228 = arith.select %226, %224, %227 : vector<16x32xi1>, vector<16x32xf32>
    %c5_73 = arith.constant 5 : index
    %c0_74 = arith.constant 0 : index
    %c0_75 = arith.constant 0 : index
    %229 = vector.load %arg3[%c5_73, %c0_74, %c0_75] : memref<15x16x32xf32, #tpu.memory_space<vmem>>, vector<1x16x32xf32>
    %230 = vector.shape_cast %229 : vector<1x16x32xf32> to vector<16x32xf32>
    %231 = vector.shape_cast %228 : vector<16x32xf32> to vector<1x16x32xf32>
    tpu.vector_store %arg3[%c5_73, %c0_74, %c0_75], %231 {strides = array<i32>} : memref<15x16x32xf32, #tpu.memory_space<vmem>>, vector<1x16x32xf32>,
    %c2_i32_76 = arith.constant 2 : i32
    %232 = tpu.dynamic_rotate %228 by %c2_i32_76 dim 0 : vector<16x32xf32>, i32 -> vector<16x32xf32>
    %233 = arith.truncf %232 : vector<16x32xf32> to vector<16x32xbf16>
    %cst_77 = arith.constant dense<0.000000e+00> : vector<16x128xf32>
    %234 = tpu.matmul %233, %0, %cst_77 {dimension_numbers = #tpu.dot_dimension_numbers<[1], [0], [0], [1], [0, 0, 1, 1], [], []>} : vector<16x32xbf16>, vector<32x128xbf16>, vector<16x128xf32> -> vector<16x128xf32>
    %235 = arith.truncf %228 : vector<16x32xf32> to vector<16x32xbf16>
    %cst_78 = arith.constant dense<0.000000e+00> : vector<16x128xf32>
    %236 = tpu.matmul %235, %1, %cst_78 {dimension_numbers = #tpu.dot_dimension_numbers<[1], [0], [0], [1], [0, 0, 1, 1], [], []>} : vector<16x32xbf16>, vector<32x128xbf16>, vector<16x128xf32> -> vector<16x128xf32>
    %237 = arith.addf %234, %236 : vector<16x128xf32>
    %c6 = arith.constant 6 : index
    %c0_79 = arith.constant 0 : index
    %c0_80 = arith.constant 0 : index
    %238 = vector.load %arg0[%c6, %c0_79, %c0_80] : memref<15x16x128xf32, #tpu.memory_space<vmem>>, vector<1x16x128xf32>
    %239 = vector.shape_cast %238 : vector<1x16x128xf32> to vector<16x128xf32>
    %240 = arith.addf %239, %237 : vector<16x128xf32>
    %241 = vector.extract_strided_slice %240 {offsets = [0, 0], sizes = [16, 32], strides = [1, 1]} : vector<16x128xf32> to vector<16x32xf32>
    %242 = arith.negf %241 : vector<16x32xf32>
    %243 = math.exp %242 : vector<16x32xf32>
    %cst_81 = arith.constant 1.000000e+00 : f32
    %244 = vector.broadcast %cst_81 : f32 to vector<16x32xf32>
    %245 = arith.addf %244, %243 : vector<16x32xf32>
    %246 = arith.divf %244, %245 : vector<16x32xf32>
    %247 = vector.extract_strided_slice %240 {offsets = [0, 32], sizes = [16, 32], strides = [1, 1]} : vector<16x128xf32> to vector<16x32xf32>
    %248 = arith.negf %247 : vector<16x32xf32>
    %249 = math.exp %248 : vector<16x32xf32>
    %cst_82 = arith.constant 1.000000e+00 : f32
    %250 = vector.broadcast %cst_82 : f32 to vector<16x32xf32>
    %251 = arith.addf %250, %249 : vector<16x32xf32>
    %252 = arith.divf %250, %251 : vector<16x32xf32>
    %253 = vector.extract_strided_slice %240 {offsets = [0, 96], sizes = [16, 32], strides = [1, 1]} : vector<16x128xf32> to vector<16x32xf32>
    %254 = vector.extract_strided_slice %240 {offsets = [0, 64], sizes = [16, 32], strides = [1, 1]} : vector<16x128xf32> to vector<16x32xf32>
    %255 = arith.mulf %246, %254 : vector<16x32xf32>
    %256 = arith.addf %253, %255 : vector<16x32xf32>
    %257 = math.tanh %256 : vector<16x32xf32>
    %cst_83 = arith.constant 1.000000e+00 : f32
    %258 = vector.broadcast %cst_83 : f32 to vector<16x32xf32>
    %259 = arith.subf %258, %252 : vector<16x32xf32>
    %260 = arith.mulf %259, %257 : vector<16x32xf32>
    %261 = arith.mulf %252, %232 : vector<16x32xf32>
    %262 = arith.addf %260, %261 : vector<16x32xf32>
    %c14_i32 = arith.constant 14 : i32
    %263 = vector.broadcast %c14_i32 : i32 to vector<16x32xi32>
    %264 = arith.cmpi slt, %2, %263 : vector<16x32xi32>
    %cst_84 = arith.constant 0.000000e+00 : f32
    %265 = vector.broadcast %cst_84 : f32 to vector<16x32xf32>
    %266 = arith.select %264, %262, %265 : vector<16x32xi1>, vector<16x32xf32>
    %c6_85 = arith.constant 6 : index
    %c0_86 = arith.constant 0 : index
    %c0_87 = arith.constant 0 : index
    %267 = vector.load %arg3[%c6_85, %c0_86, %c0_87] : memref<15x16x32xf32, #tpu.memory_space<vmem>>, vector<1x16x32xf32>
    %268 = vector.shape_cast %267 : vector<1x16x32xf32> to vector<16x32xf32>
    %269 = vector.shape_cast %266 : vector<16x32xf32> to vector<1x16x32xf32>
    tpu.vector_store %arg3[%c6_85, %c0_86, %c0_87], %269 {strides = array<i32>} : memref<15x16x32xf32, #tpu.memory_space<vmem>>, vector<1x16x32xf32>,
    %c2_i32_88 = arith.constant 2 : i32
    %270 = tpu.dynamic_rotate %266 by %c2_i32_88 dim 0 : vector<16x32xf32>, i32 -> vector<16x32xf32>
    %271 = arith.truncf %270 : vector<16x32xf32> to vector<16x32xbf16>
    %cst_89 = arith.constant dense<0.000000e+00> : vector<16x128xf32>
    %272 = tpu.matmul %271, %0, %cst_89 {dimension_numbers = #tpu.dot_dimension_numbers<[1], [0], [0], [1], [0, 0, 1, 1], [], []>} : vector<16x32xbf16>, vector<32x128xbf16>, vector<16x128xf32> -> vector<16x128xf32>
    %273 = arith.truncf %266 : vector<16x32xf32> to vector<16x32xbf16>
    %cst_90 = arith.constant dense<0.000000e+00> : vector<16x128xf32>
    %274 = tpu.matmul %273, %1, %cst_90 {dimension_numbers = #tpu.dot_dimension_numbers<[1], [0], [0], [1], [0, 0, 1, 1], [], []>} : vector<16x32xbf16>, vector<32x128xbf16>, vector<16x128xf32> -> vector<16x128xf32>
    %275 = arith.addf %272, %274 : vector<16x128xf32>
    %c7 = arith.constant 7 : index
    %c0_91 = arith.constant 0 : index
    %c0_92 = arith.constant 0 : index
    %276 = vector.load %arg0[%c7, %c0_91, %c0_92] : memref<15x16x128xf32, #tpu.memory_space<vmem>>, vector<1x16x128xf32>
    %277 = vector.shape_cast %276 : vector<1x16x128xf32> to vector<16x128xf32>
    %278 = arith.addf %277, %275 : vector<16x128xf32>
    %279 = vector.extract_strided_slice %278 {offsets = [0, 0], sizes = [16, 32], strides = [1, 1]} : vector<16x128xf32> to vector<16x32xf32>
    %280 = arith.negf %279 : vector<16x32xf32>
    %281 = math.exp %280 : vector<16x32xf32>
    %cst_93 = arith.constant 1.000000e+00 : f32
    %282 = vector.broadcast %cst_93 : f32 to vector<16x32xf32>
    %283 = arith.addf %282, %281 : vector<16x32xf32>
    %284 = arith.divf %282, %283 : vector<16x32xf32>
    %285 = vector.extract_strided_slice %278 {offsets = [0, 32], sizes = [16, 32], strides = [1, 1]} : vector<16x128xf32> to vector<16x32xf32>
    %286 = arith.negf %285 : vector<16x32xf32>
    %287 = math.exp %286 : vector<16x32xf32>
    %cst_94 = arith.constant 1.000000e+00 : f32
    %288 = vector.broadcast %cst_94 : f32 to vector<16x32xf32>
    %289 = arith.addf %288, %287 : vector<16x32xf32>
    %290 = arith.divf %288, %289 : vector<16x32xf32>
    %291 = vector.extract_strided_slice %278 {offsets = [0, 96], sizes = [16, 32], strides = [1, 1]} : vector<16x128xf32> to vector<16x32xf32>
    %292 = vector.extract_strided_slice %278 {offsets = [0, 64], sizes = [16, 32], strides = [1, 1]} : vector<16x128xf32> to vector<16x32xf32>
    %293 = arith.mulf %284, %292 : vector<16x32xf32>
    %294 = arith.addf %291, %293 : vector<16x32xf32>
    %295 = math.tanh %294 : vector<16x32xf32>
    %cst_95 = arith.constant 1.000000e+00 : f32
    %296 = vector.broadcast %cst_95 : f32 to vector<16x32xf32>
    %297 = arith.subf %296, %290 : vector<16x32xf32>
    %298 = arith.mulf %297, %295 : vector<16x32xf32>
    %299 = arith.mulf %290, %270 : vector<16x32xf32>
    %300 = arith.addf %298, %299 : vector<16x32xf32>
    %c7_96 = arith.constant 7 : index
    %c0_97 = arith.constant 0 : index
    %c0_98 = arith.constant 0 : index
    %301 = vector.load %arg3[%c7_96, %c0_97, %c0_98] : memref<15x16x32xf32, #tpu.memory_space<vmem>>, vector<1x16x32xf32>
    %302 = vector.shape_cast %301 : vector<1x16x32xf32> to vector<16x32xf32>
    %303 = vector.shape_cast %300 : vector<16x32xf32> to vector<1x16x32xf32>
    tpu.vector_store %arg3[%c7_96, %c0_97, %c0_98], %303 {strides = array<i32>} : memref<15x16x32xf32, #tpu.memory_space<vmem>>, vector<1x16x32xf32>,
    %c2_i32_99 = arith.constant 2 : i32
    %304 = tpu.dynamic_rotate %300 by %c2_i32_99 dim 0 : vector<16x32xf32>, i32 -> vector<16x32xf32>
    %c2_i32_100 = arith.constant 2 : i32
    %305 = vector.broadcast %c2_i32_100 : i32 to vector<16x32xi32>
    %306 = arith.cmpi slt, %2, %305 : vector<16x32xi32>
    %cst_101 = arith.constant 0.000000e+00 : f32
    %307 = vector.broadcast %cst_101 : f32 to vector<16x32xf32>
    %308 = arith.select %306, %307, %304 : vector<16x32xi1>, vector<16x32xf32>
    %309 = arith.truncf %308 : vector<16x32xf32> to vector<16x32xbf16>
    %cst_102 = arith.constant dense<0.000000e+00> : vector<16x128xf32>
    %310 = tpu.matmul %309, %0, %cst_102 {dimension_numbers = #tpu.dot_dimension_numbers<[1], [0], [0], [1], [0, 0, 1, 1], [], []>} : vector<16x32xbf16>, vector<32x128xbf16>, vector<16x128xf32> -> vector<16x128xf32>
    %311 = arith.truncf %300 : vector<16x32xf32> to vector<16x32xbf16>
    %cst_103 = arith.constant dense<0.000000e+00> : vector<16x128xf32>
    %312 = tpu.matmul %311, %1, %cst_103 {dimension_numbers = #tpu.dot_dimension_numbers<[1], [0], [0], [1], [0, 0, 1, 1], [], []>} : vector<16x32xbf16>, vector<32x128xbf16>, vector<16x128xf32> -> vector<16x128xf32>
    %313 = arith.addf %310, %312 : vector<16x128xf32>
    %c8 = arith.constant 8 : index
    %c0_104 = arith.constant 0 : index
    %c0_105 = arith.constant 0 : index
    %314 = vector.load %arg0[%c8, %c0_104, %c0_105] : memref<15x16x128xf32, #tpu.memory_space<vmem>>, vector<1x16x128xf32>
    %315 = vector.shape_cast %314 : vector<1x16x128xf32> to vector<16x128xf32>
    %316 = arith.addf %315, %313 : vector<16x128xf32>
    %317 = vector.extract_strided_slice %316 {offsets = [0, 0], sizes = [16, 32], strides = [1, 1]} : vector<16x128xf32> to vector<16x32xf32>
    %318 = arith.negf %317 : vector<16x32xf32>
    %319 = math.exp %318 : vector<16x32xf32>
    %cst_106 = arith.constant 1.000000e+00 : f32
    %320 = vector.broadcast %cst_106 : f32 to vector<16x32xf32>
    %321 = arith.addf %320, %319 : vector<16x32xf32>
    %322 = arith.divf %320, %321 : vector<16x32xf32>
    %323 = vector.extract_strided_slice %316 {offsets = [0, 32], sizes = [16, 32], strides = [1, 1]} : vector<16x128xf32> to vector<16x32xf32>
    %324 = arith.negf %323 : vector<16x32xf32>
    %325 = math.exp %324 : vector<16x32xf32>
    %cst_107 = arith.constant 1.000000e+00 : f32
    %326 = vector.broadcast %cst_107 : f32 to vector<16x32xf32>
    %327 = arith.addf %326, %325 : vector<16x32xf32>
    %328 = arith.divf %326, %327 : vector<16x32xf32>
    %329 = vector.extract_strided_slice %316 {offsets = [0, 96], sizes = [16, 32], strides = [1, 1]} : vector<16x128xf32> to vector<16x32xf32>
    %330 = vector.extract_strided_slice %316 {offsets = [0, 64], sizes = [16, 32], strides = [1, 1]} : vector<16x128xf32> to vector<16x32xf32>
    %331 = arith.mulf %322, %330 : vector<16x32xf32>
    %332 = arith.addf %329, %331 : vector<16x32xf32>
    %333 = math.tanh %332 : vector<16x32xf32>
    %cst_108 = arith.constant 1.000000e+00 : f32
    %334 = vector.broadcast %cst_108 : f32 to vector<16x32xf32>
    %335 = arith.subf %334, %328 : vector<16x32xf32>
    %336 = arith.mulf %335, %333 : vector<16x32xf32>
    %337 = arith.mulf %328, %308 : vector<16x32xf32>
    %338 = arith.addf %336, %337 : vector<16x32xf32>
    %c8_109 = arith.constant 8 : index
    %c0_110 = arith.constant 0 : index
    %c0_111 = arith.constant 0 : index
    %339 = vector.load %arg3[%c8_109, %c0_110, %c0_111] : memref<15x16x32xf32, #tpu.memory_space<vmem>>, vector<1x16x32xf32>
    %340 = vector.shape_cast %339 : vector<1x16x32xf32> to vector<16x32xf32>
    %341 = vector.shape_cast %338 : vector<16x32xf32> to vector<1x16x32xf32>
    tpu.vector_store %arg3[%c8_109, %c0_110, %c0_111], %341 {strides = array<i32>} : memref<15x16x32xf32, #tpu.memory_space<vmem>>, vector<1x16x32xf32>,
    %c2_i32_112 = arith.constant 2 : i32
    %342 = tpu.dynamic_rotate %338 by %c2_i32_112 dim 0 : vector<16x32xf32>, i32 -> vector<16x32xf32>
    %c2_i32_113 = arith.constant 2 : i32
    %343 = vector.broadcast %c2_i32_113 : i32 to vector<16x32xi32>
    %344 = arith.cmpi slt, %2, %343 : vector<16x32xi32>
    %cst_114 = arith.constant 0.000000e+00 : f32
    %345 = vector.broadcast %cst_114 : f32 to vector<16x32xf32>
    %346 = arith.select %344, %345, %342 : vector<16x32xi1>, vector<16x32xf32>
    %347 = arith.truncf %346 : vector<16x32xf32> to vector<16x32xbf16>
    %cst_115 = arith.constant dense<0.000000e+00> : vector<16x128xf32>
    %348 = tpu.matmul %347, %0, %cst_115 {dimension_numbers = #tpu.dot_dimension_numbers<[1], [0], [0], [1], [0, 0, 1, 1], [], []>} : vector<16x32xbf16>, vector<32x128xbf16>, vector<16x128xf32> -> vector<16x128xf32>
    %349 = arith.truncf %338 : vector<16x32xf32> to vector<16x32xbf16>
    %cst_116 = arith.constant dense<0.000000e+00> : vector<16x128xf32>
    %350 = tpu.matmul %349, %1, %cst_116 {dimension_numbers = #tpu.dot_dimension_numbers<[1], [0], [0], [1], [0, 0, 1, 1], [], []>} : vector<16x32xbf16>, vector<32x128xbf16>, vector<16x128xf32> -> vector<16x128xf32>
    %351 = arith.addf %348, %350 : vector<16x128xf32>
    %c9 = arith.constant 9 : index
    %c0_117 = arith.constant 0 : index
    %c0_118 = arith.constant 0 : index
    %352 = vector.load %arg0[%c9, %c0_117, %c0_118] : memref<15x16x128xf32, #tpu.memory_space<vmem>>, vector<1x16x128xf32>
    %353 = vector.shape_cast %352 : vector<1x16x128xf32> to vector<16x128xf32>
    %354 = arith.addf %353, %351 : vector<16x128xf32>
    %355 = vector.extract_strided_slice %354 {offsets = [0, 0], sizes = [16, 32], strides = [1, 1]} : vector<16x128xf32> to vector<16x32xf32>
    %356 = arith.negf %355 : vector<16x32xf32>
    %357 = math.exp %356 : vector<16x32xf32>
    %cst_119 = arith.constant 1.000000e+00 : f32
    %358 = vector.broadcast %cst_119 : f32 to vector<16x32xf32>
    %359 = arith.addf %358, %357 : vector<16x32xf32>
    %360 = arith.divf %358, %359 : vector<16x32xf32>
    %361 = vector.extract_strided_slice %354 {offsets = [0, 32], sizes = [16, 32], strides = [1, 1]} : vector<16x128xf32> to vector<16x32xf32>
    %362 = arith.negf %361 : vector<16x32xf32>
    %363 = math.exp %362 : vector<16x32xf32>
    %cst_120 = arith.constant 1.000000e+00 : f32
    %364 = vector.broadcast %cst_120 : f32 to vector<16x32xf32>
    %365 = arith.addf %364, %363 : vector<16x32xf32>
    %366 = arith.divf %364, %365 : vector<16x32xf32>
    %367 = vector.extract_strided_slice %354 {offsets = [0, 96], sizes = [16, 32], strides = [1, 1]} : vector<16x128xf32> to vector<16x32xf32>
    %368 = vector.extract_strided_slice %354 {offsets = [0, 64], sizes = [16, 32], strides = [1, 1]} : vector<16x128xf32> to vector<16x32xf32>
    %369 = arith.mulf %360, %368 : vector<16x32xf32>
    %370 = arith.addf %367, %369 : vector<16x32xf32>
    %371 = math.tanh %370 : vector<16x32xf32>
    %cst_121 = arith.constant 1.000000e+00 : f32
    %372 = vector.broadcast %cst_121 : f32 to vector<16x32xf32>
    %373 = arith.subf %372, %366 : vector<16x32xf32>
    %374 = arith.mulf %373, %371 : vector<16x32xf32>
    %375 = arith.mulf %366, %346 : vector<16x32xf32>
    %376 = arith.addf %374, %375 : vector<16x32xf32>
    %c9_122 = arith.constant 9 : index
    %c0_123 = arith.constant 0 : index
    %c0_124 = arith.constant 0 : index
    %377 = vector.load %arg3[%c9_122, %c0_123, %c0_124] : memref<15x16x32xf32, #tpu.memory_space<vmem>>, vector<1x16x32xf32>
    %378 = vector.shape_cast %377 : vector<1x16x32xf32> to vector<16x32xf32>
    %379 = vector.shape_cast %376 : vector<16x32xf32> to vector<1x16x32xf32>
    tpu.vector_store %arg3[%c9_122, %c0_123, %c0_124], %379 {strides = array<i32>} : memref<15x16x32xf32, #tpu.memory_space<vmem>>, vector<1x16x32xf32>,
    %c2_i32_125 = arith.constant 2 : i32
    %380 = tpu.dynamic_rotate %376 by %c2_i32_125 dim 0 : vector<16x32xf32>, i32 -> vector<16x32xf32>
    %c2_i32_126 = arith.constant 2 : i32
    %381 = vector.broadcast %c2_i32_126 : i32 to vector<16x32xi32>
    %382 = arith.cmpi slt, %2, %381 : vector<16x32xi32>
    %cst_127 = arith.constant 0.000000e+00 : f32
    %383 = vector.broadcast %cst_127 : f32 to vector<16x32xf32>
    %384 = arith.select %382, %383, %380 : vector<16x32xi1>, vector<16x32xf32>
    %385 = arith.truncf %384 : vector<16x32xf32> to vector<16x32xbf16>
    %cst_128 = arith.constant dense<0.000000e+00> : vector<16x128xf32>
    %386 = tpu.matmul %385, %0, %cst_128 {dimension_numbers = #tpu.dot_dimension_numbers<[1], [0], [0], [1], [0, 0, 1, 1], [], []>} : vector<16x32xbf16>, vector<32x128xbf16>, vector<16x128xf32> -> vector<16x128xf32>
    %387 = arith.truncf %376 : vector<16x32xf32> to vector<16x32xbf16>
    %cst_129 = arith.constant dense<0.000000e+00> : vector<16x128xf32>
    %388 = tpu.matmul %387, %1, %cst_129 {dimension_numbers = #tpu.dot_dimension_numbers<[1], [0], [0], [1], [0, 0, 1, 1], [], []>} : vector<16x32xbf16>, vector<32x128xbf16>, vector<16x128xf32> -> vector<16x128xf32>
    %389 = arith.addf %386, %388 : vector<16x128xf32>
    %c10 = arith.constant 10 : index
    %c0_130 = arith.constant 0 : index
    %c0_131 = arith.constant 0 : index
    %390 = vector.load %arg0[%c10, %c0_130, %c0_131] : memref<15x16x128xf32, #tpu.memory_space<vmem>>, vector<1x16x128xf32>
    %391 = vector.shape_cast %390 : vector<1x16x128xf32> to vector<16x128xf32>
    %392 = arith.addf %391, %389 : vector<16x128xf32>
    %393 = vector.extract_strided_slice %392 {offsets = [0, 0], sizes = [16, 32], strides = [1, 1]} : vector<16x128xf32> to vector<16x32xf32>
    %394 = arith.negf %393 : vector<16x32xf32>
    %395 = math.exp %394 : vector<16x32xf32>
    %cst_132 = arith.constant 1.000000e+00 : f32
    %396 = vector.broadcast %cst_132 : f32 to vector<16x32xf32>
    %397 = arith.addf %396, %395 : vector<16x32xf32>
    %398 = arith.divf %396, %397 : vector<16x32xf32>
    %399 = vector.extract_strided_slice %392 {offsets = [0, 32], sizes = [16, 32], strides = [1, 1]} : vector<16x128xf32> to vector<16x32xf32>
    %400 = arith.negf %399 : vector<16x32xf32>
    %401 = math.exp %400 : vector<16x32xf32>
    %cst_133 = arith.constant 1.000000e+00 : f32
    %402 = vector.broadcast %cst_133 : f32 to vector<16x32xf32>
    %403 = arith.addf %402, %401 : vector<16x32xf32>
    %404 = arith.divf %402, %403 : vector<16x32xf32>
    %405 = vector.extract_strided_slice %392 {offsets = [0, 96], sizes = [16, 32], strides = [1, 1]} : vector<16x128xf32> to vector<16x32xf32>
    %406 = vector.extract_strided_slice %392 {offsets = [0, 64], sizes = [16, 32], strides = [1, 1]} : vector<16x128xf32> to vector<16x32xf32>
    %407 = arith.mulf %398, %406 : vector<16x32xf32>
    %408 = arith.addf %405, %407 : vector<16x32xf32>
    %409 = math.tanh %408 : vector<16x32xf32>
    %cst_134 = arith.constant 1.000000e+00 : f32
    %410 = vector.broadcast %cst_134 : f32 to vector<16x32xf32>
    %411 = arith.subf %410, %404 : vector<16x32xf32>
    %412 = arith.mulf %411, %409 : vector<16x32xf32>
    %413 = arith.mulf %404, %384 : vector<16x32xf32>
    %414 = arith.addf %412, %413 : vector<16x32xf32>
    %c10_135 = arith.constant 10 : index
    %c0_136 = arith.constant 0 : index
    %c0_137 = arith.constant 0 : index
    %415 = vector.load %arg3[%c10_135, %c0_136, %c0_137] : memref<15x16x32xf32, #tpu.memory_space<vmem>>, vector<1x16x32xf32>
    %416 = vector.shape_cast %415 : vector<1x16x32xf32> to vector<16x32xf32>
    %417 = vector.shape_cast %414 : vector<16x32xf32> to vector<1x16x32xf32>
    tpu.vector_store %arg3[%c10_135, %c0_136, %c0_137], %417 {strides = array<i32>} : memref<15x16x32xf32, #tpu.memory_space<vmem>>, vector<1x16x32xf32>,
    %c2_i32_138 = arith.constant 2 : i32
    %418 = tpu.dynamic_rotate %414 by %c2_i32_138 dim 0 : vector<16x32xf32>, i32 -> vector<16x32xf32>
    %c2_i32_139 = arith.constant 2 : i32
    %419 = vector.broadcast %c2_i32_139 : i32 to vector<16x32xi32>
    %420 = arith.cmpi slt, %2, %419 : vector<16x32xi32>
    %cst_140 = arith.constant 0.000000e+00 : f32
    %421 = vector.broadcast %cst_140 : f32 to vector<16x32xf32>
    %422 = arith.select %420, %421, %418 : vector<16x32xi1>, vector<16x32xf32>
    %423 = arith.truncf %422 : vector<16x32xf32> to vector<16x32xbf16>
    %cst_141 = arith.constant dense<0.000000e+00> : vector<16x128xf32>
    %424 = tpu.matmul %423, %0, %cst_141 {dimension_numbers = #tpu.dot_dimension_numbers<[1], [0], [0], [1], [0, 0, 1, 1], [], []>} : vector<16x32xbf16>, vector<32x128xbf16>, vector<16x128xf32> -> vector<16x128xf32>
    %425 = arith.truncf %414 : vector<16x32xf32> to vector<16x32xbf16>
    %cst_142 = arith.constant dense<0.000000e+00> : vector<16x128xf32>
    %426 = tpu.matmul %425, %1, %cst_142 {dimension_numbers = #tpu.dot_dimension_numbers<[1], [0], [0], [1], [0, 0, 1, 1], [], []>} : vector<16x32xbf16>, vector<32x128xbf16>, vector<16x128xf32> -> vector<16x128xf32>
    %427 = arith.addf %424, %426 : vector<16x128xf32>
    %c11 = arith.constant 11 : index
    %c0_143 = arith.constant 0 : index
    %c0_144 = arith.constant 0 : index
    %428 = vector.load %arg0[%c11, %c0_143, %c0_144] : memref<15x16x128xf32, #tpu.memory_space<vmem>>, vector<1x16x128xf32>
    %429 = vector.shape_cast %428 : vector<1x16x128xf32> to vector<16x128xf32>
    %430 = arith.addf %429, %427 : vector<16x128xf32>
    %431 = vector.extract_strided_slice %430 {offsets = [0, 0], sizes = [16, 32], strides = [1, 1]} : vector<16x128xf32> to vector<16x32xf32>
    %432 = arith.negf %431 : vector<16x32xf32>
    %433 = math.exp %432 : vector<16x32xf32>
    %cst_145 = arith.constant 1.000000e+00 : f32
    %434 = vector.broadcast %cst_145 : f32 to vector<16x32xf32>
    %435 = arith.addf %434, %433 : vector<16x32xf32>
    %436 = arith.divf %434, %435 : vector<16x32xf32>
    %437 = vector.extract_strided_slice %430 {offsets = [0, 32], sizes = [16, 32], strides = [1, 1]} : vector<16x128xf32> to vector<16x32xf32>
    %438 = arith.negf %437 : vector<16x32xf32>
    %439 = math.exp %438 : vector<16x32xf32>
    %cst_146 = arith.constant 1.000000e+00 : f32
    %440 = vector.broadcast %cst_146 : f32 to vector<16x32xf32>
    %441 = arith.addf %440, %439 : vector<16x32xf32>
    %442 = arith.divf %440, %441 : vector<16x32xf32>
    %443 = vector.extract_strided_slice %430 {offsets = [0, 96], sizes = [16, 32], strides = [1, 1]} : vector<16x128xf32> to vector<16x32xf32>
    %444 = vector.extract_strided_slice %430 {offsets = [0, 64], sizes = [16, 32], strides = [1, 1]} : vector<16x128xf32> to vector<16x32xf32>
    %445 = arith.mulf %436, %444 : vector<16x32xf32>
    %446 = arith.addf %443, %445 : vector<16x32xf32>
    %447 = math.tanh %446 : vector<16x32xf32>
    %cst_147 = arith.constant 1.000000e+00 : f32
    %448 = vector.broadcast %cst_147 : f32 to vector<16x32xf32>
    %449 = arith.subf %448, %442 : vector<16x32xf32>
    %450 = arith.mulf %449, %447 : vector<16x32xf32>
    %451 = arith.mulf %442, %422 : vector<16x32xf32>
    %452 = arith.addf %450, %451 : vector<16x32xf32>
    %c11_148 = arith.constant 11 : index
    %c0_149 = arith.constant 0 : index
    %c0_150 = arith.constant 0 : index
    %453 = vector.load %arg3[%c11_148, %c0_149, %c0_150] : memref<15x16x32xf32, #tpu.memory_space<vmem>>, vector<1x16x32xf32>
    %454 = vector.shape_cast %453 : vector<1x16x32xf32> to vector<16x32xf32>
    %455 = vector.shape_cast %452 : vector<16x32xf32> to vector<1x16x32xf32>
    tpu.vector_store %arg3[%c11_148, %c0_149, %c0_150], %455 {strides = array<i32>} : memref<15x16x32xf32, #tpu.memory_space<vmem>>, vector<1x16x32xf32>,
    %c2_i32_151 = arith.constant 2 : i32
    %456 = tpu.dynamic_rotate %452 by %c2_i32_151 dim 0 : vector<16x32xf32>, i32 -> vector<16x32xf32>
    %c2_i32_152 = arith.constant 2 : i32
    %457 = vector.broadcast %c2_i32_152 : i32 to vector<16x32xi32>
    %458 = arith.cmpi slt, %2, %457 : vector<16x32xi32>
    %cst_153 = arith.constant 0.000000e+00 : f32
    %459 = vector.broadcast %cst_153 : f32 to vector<16x32xf32>
    %460 = arith.select %458, %459, %456 : vector<16x32xi1>, vector<16x32xf32>
    %461 = arith.truncf %460 : vector<16x32xf32> to vector<16x32xbf16>
    %cst_154 = arith.constant dense<0.000000e+00> : vector<16x128xf32>
    %462 = tpu.matmul %461, %0, %cst_154 {dimension_numbers = #tpu.dot_dimension_numbers<[1], [0], [0], [1], [0, 0, 1, 1], [], []>} : vector<16x32xbf16>, vector<32x128xbf16>, vector<16x128xf32> -> vector<16x128xf32>
    %463 = arith.truncf %452 : vector<16x32xf32> to vector<16x32xbf16>
    %cst_155 = arith.constant dense<0.000000e+00> : vector<16x128xf32>
    %464 = tpu.matmul %463, %1, %cst_155 {dimension_numbers = #tpu.dot_dimension_numbers<[1], [0], [0], [1], [0, 0, 1, 1], [], []>} : vector<16x32xbf16>, vector<32x128xbf16>, vector<16x128xf32> -> vector<16x128xf32>
    %465 = arith.addf %462, %464 : vector<16x128xf32>
    %c12 = arith.constant 12 : index
    %c0_156 = arith.constant 0 : index
    %c0_157 = arith.constant 0 : index
    %466 = vector.load %arg0[%c12, %c0_156, %c0_157] : memref<15x16x128xf32, #tpu.memory_space<vmem>>, vector<1x16x128xf32>
    %467 = vector.shape_cast %466 : vector<1x16x128xf32> to vector<16x128xf32>
    %468 = arith.addf %467, %465 : vector<16x128xf32>
    %469 = vector.extract_strided_slice %468 {offsets = [0, 0], sizes = [16, 32], strides = [1, 1]} : vector<16x128xf32> to vector<16x32xf32>
    %470 = arith.negf %469 : vector<16x32xf32>
    %471 = math.exp %470 : vector<16x32xf32>
    %cst_158 = arith.constant 1.000000e+00 : f32
    %472 = vector.broadcast %cst_158 : f32 to vector<16x32xf32>
    %473 = arith.addf %472, %471 : vector<16x32xf32>
    %474 = arith.divf %472, %473 : vector<16x32xf32>
    %475 = vector.extract_strided_slice %468 {offsets = [0, 32], sizes = [16, 32], strides = [1, 1]} : vector<16x128xf32> to vector<16x32xf32>
    %476 = arith.negf %475 : vector<16x32xf32>
    %477 = math.exp %476 : vector<16x32xf32>
    %cst_159 = arith.constant 1.000000e+00 : f32
    %478 = vector.broadcast %cst_159 : f32 to vector<16x32xf32>
    %479 = arith.addf %478, %477 : vector<16x32xf32>
    %480 = arith.divf %478, %479 : vector<16x32xf32>
    %481 = vector.extract_strided_slice %468 {offsets = [0, 96], sizes = [16, 32], strides = [1, 1]} : vector<16x128xf32> to vector<16x32xf32>
    %482 = vector.extract_strided_slice %468 {offsets = [0, 64], sizes = [16, 32], strides = [1, 1]} : vector<16x128xf32> to vector<16x32xf32>
    %483 = arith.mulf %474, %482 : vector<16x32xf32>
    %484 = arith.addf %481, %483 : vector<16x32xf32>
    %485 = math.tanh %484 : vector<16x32xf32>
    %cst_160 = arith.constant 1.000000e+00 : f32
    %486 = vector.broadcast %cst_160 : f32 to vector<16x32xf32>
    %487 = arith.subf %486, %480 : vector<16x32xf32>
    %488 = arith.mulf %487, %485 : vector<16x32xf32>
    %489 = arith.mulf %480, %460 : vector<16x32xf32>
    %490 = arith.addf %488, %489 : vector<16x32xf32>
    %c12_161 = arith.constant 12 : index
    %c0_162 = arith.constant 0 : index
    %c0_163 = arith.constant 0 : index
    %491 = vector.load %arg3[%c12_161, %c0_162, %c0_163] : memref<15x16x32xf32, #tpu.memory_space<vmem>>, vector<1x16x32xf32>
    %492 = vector.shape_cast %491 : vector<1x16x32xf32> to vector<16x32xf32>
    %493 = vector.shape_cast %490 : vector<16x32xf32> to vector<1x16x32xf32>
    tpu.vector_store %arg3[%c12_161, %c0_162, %c0_163], %493 {strides = array<i32>} : memref<15x16x32xf32, #tpu.memory_space<vmem>>, vector<1x16x32xf32>,
    %c2_i32_164 = arith.constant 2 : i32
    %494 = tpu.dynamic_rotate %490 by %c2_i32_164 dim 0 : vector<16x32xf32>, i32 -> vector<16x32xf32>
    %c2_i32_165 = arith.constant 2 : i32
    %495 = vector.broadcast %c2_i32_165 : i32 to vector<16x32xi32>
    %496 = arith.cmpi slt, %2, %495 : vector<16x32xi32>
    %cst_166 = arith.constant 0.000000e+00 : f32
    %497 = vector.broadcast %cst_166 : f32 to vector<16x32xf32>
    %498 = arith.select %496, %497, %494 : vector<16x32xi1>, vector<16x32xf32>
    %499 = arith.truncf %498 : vector<16x32xf32> to vector<16x32xbf16>
    %cst_167 = arith.constant dense<0.000000e+00> : vector<16x128xf32>
    %500 = tpu.matmul %499, %0, %cst_167 {dimension_numbers = #tpu.dot_dimension_numbers<[1], [0], [0], [1], [0, 0, 1, 1], [], []>} : vector<16x32xbf16>, vector<32x128xbf16>, vector<16x128xf32> -> vector<16x128xf32>
    %501 = arith.truncf %490 : vector<16x32xf32> to vector<16x32xbf16>
    %cst_168 = arith.constant dense<0.000000e+00> : vector<16x128xf32>
    %502 = tpu.matmul %501, %1, %cst_168 {dimension_numbers = #tpu.dot_dimension_numbers<[1], [0], [0], [1], [0, 0, 1, 1], [], []>} : vector<16x32xbf16>, vector<32x128xbf16>, vector<16x128xf32> -> vector<16x128xf32>
    %503 = arith.addf %500, %502 : vector<16x128xf32>
    %c13 = arith.constant 13 : index
    %c0_169 = arith.constant 0 : index
    %c0_170 = arith.constant 0 : index
    %504 = vector.load %arg0[%c13, %c0_169, %c0_170] : memref<15x16x128xf32, #tpu.memory_space<vmem>>, vector<1x16x128xf32>
    %505 = vector.shape_cast %504 : vector<1x16x128xf32> to vector<16x128xf32>
    %506 = arith.addf %505, %503 : vector<16x128xf32>
    %507 = vector.extract_strided_slice %506 {offsets = [0, 0], sizes = [16, 32], strides = [1, 1]} : vector<16x128xf32> to vector<16x32xf32>
    %508 = arith.negf %507 : vector<16x32xf32>
    %509 = math.exp %508 : vector<16x32xf32>
    %cst_171 = arith.constant 1.000000e+00 : f32
    %510 = vector.broadcast %cst_171 : f32 to vector<16x32xf32>
    %511 = arith.addf %510, %509 : vector<16x32xf32>
    %512 = arith.divf %510, %511 : vector<16x32xf32>
    %513 = vector.extract_strided_slice %506 {offsets = [0, 32], sizes = [16, 32], strides = [1, 1]} : vector<16x128xf32> to vector<16x32xf32>
    %514 = arith.negf %513 : vector<16x32xf32>
    %515 = math.exp %514 : vector<16x32xf32>
    %cst_172 = arith.constant 1.000000e+00 : f32
    %516 = vector.broadcast %cst_172 : f32 to vector<16x32xf32>
    %517 = arith.addf %516, %515 : vector<16x32xf32>
    %518 = arith.divf %516, %517 : vector<16x32xf32>
    %519 = vector.extract_strided_slice %506 {offsets = [0, 96], sizes = [16, 32], strides = [1, 1]} : vector<16x128xf32> to vector<16x32xf32>
    %520 = vector.extract_strided_slice %506 {offsets = [0, 64], sizes = [16, 32], strides = [1, 1]} : vector<16x128xf32> to vector<16x32xf32>
    %521 = arith.mulf %512, %520 : vector<16x32xf32>
    %522 = arith.addf %519, %521 : vector<16x32xf32>
    %523 = math.tanh %522 : vector<16x32xf32>
    %cst_173 = arith.constant 1.000000e+00 : f32
    %524 = vector.broadcast %cst_173 : f32 to vector<16x32xf32>
    %525 = arith.subf %524, %518 : vector<16x32xf32>
    %526 = arith.mulf %525, %523 : vector<16x32xf32>
    %527 = arith.mulf %518, %498 : vector<16x32xf32>
    %528 = arith.addf %526, %527 : vector<16x32xf32>
    %c13_174 = arith.constant 13 : index
    %c0_175 = arith.constant 0 : index
    %c0_176 = arith.constant 0 : index
    %529 = vector.load %arg3[%c13_174, %c0_175, %c0_176] : memref<15x16x32xf32, #tpu.memory_space<vmem>>, vector<1x16x32xf32>
    %530 = vector.shape_cast %529 : vector<1x16x32xf32> to vector<16x32xf32>
    %531 = vector.shape_cast %528 : vector<16x32xf32> to vector<1x16x32xf32>
    tpu.vector_store %arg3[%c13_174, %c0_175, %c0_176], %531 {strides = array<i32>} : memref<15x16x32xf32, #tpu.memory_space<vmem>>, vector<1x16x32xf32>,
    %c2_i32_177 = arith.constant 2 : i32
    %532 = tpu.dynamic_rotate %528 by %c2_i32_177 dim 0 : vector<16x32xf32>, i32 -> vector<16x32xf32>
    %c2_i32_178 = arith.constant 2 : i32
    %533 = vector.broadcast %c2_i32_178 : i32 to vector<16x32xi32>
    %534 = arith.cmpi slt, %2, %533 : vector<16x32xi32>
    %cst_179 = arith.constant 0.000000e+00 : f32
    %535 = vector.broadcast %cst_179 : f32 to vector<16x32xf32>
    %536 = arith.select %534, %535, %532 : vector<16x32xi1>, vector<16x32xf32>
    %537 = arith.truncf %536 : vector<16x32xf32> to vector<16x32xbf16>
    %cst_180 = arith.constant dense<0.000000e+00> : vector<16x128xf32>
    %538 = tpu.matmul %537, %0, %cst_180 {dimension_numbers = #tpu.dot_dimension_numbers<[1], [0], [0], [1], [0, 0, 1, 1], [], []>} : vector<16x32xbf16>, vector<32x128xbf16>, vector<16x128xf32> -> vector<16x128xf32>
    %539 = arith.truncf %528 : vector<16x32xf32> to vector<16x32xbf16>
    %cst_181 = arith.constant dense<0.000000e+00> : vector<16x128xf32>
    %540 = tpu.matmul %539, %1, %cst_181 {dimension_numbers = #tpu.dot_dimension_numbers<[1], [0], [0], [1], [0, 0, 1, 1], [], []>} : vector<16x32xbf16>, vector<32x128xbf16>, vector<16x128xf32> -> vector<16x128xf32>
    %541 = arith.addf %538, %540 : vector<16x128xf32>
    %c14 = arith.constant 14 : index
    %c0_182 = arith.constant 0 : index
    %c0_183 = arith.constant 0 : index
    %542 = vector.load %arg0[%c14, %c0_182, %c0_183] : memref<15x16x128xf32, #tpu.memory_space<vmem>>, vector<1x16x128xf32>
    %543 = vector.shape_cast %542 : vector<1x16x128xf32> to vector<16x128xf32>
    %544 = arith.addf %543, %541 : vector<16x128xf32>
    %545 = vector.extract_strided_slice %544 {offsets = [0, 0], sizes = [16, 32], strides = [1, 1]} : vector<16x128xf32> to vector<16x32xf32>
    %546 = arith.negf %545 : vector<16x32xf32>
    %547 = math.exp %546 : vector<16x32xf32>
    %cst_184 = arith.constant 1.000000e+00 : f32
    %548 = vector.broadcast %cst_184 : f32 to vector<16x32xf32>
    %549 = arith.addf %548, %547 : vector<16x32xf32>
    %550 = arith.divf %548, %549 : vector<16x32xf32>
    %551 = vector.extract_strided_slice %544 {offsets = [0, 32], sizes = [16, 32], strides = [1, 1]} : vector<16x128xf32> to vector<16x32xf32>
    %552 = arith.negf %551 : vector<16x32xf32>
    %553 = math.exp %552 : vector<16x32xf32>
    %cst_185 = arith.constant 1.000000e+00 : f32
    %554 = vector.broadcast %cst_185 : f32 to vector<16x32xf32>
    %555 = arith.addf %554, %553 : vector<16x32xf32>
    %556 = arith.divf %554, %555 : vector<16x32xf32>
    %557 = vector.extract_strided_slice %544 {offsets = [0, 96], sizes = [16, 32], strides = [1, 1]} : vector<16x128xf32> to vector<16x32xf32>
    %558 = vector.extract_strided_slice %544 {offsets = [0, 64], sizes = [16, 32], strides = [1, 1]} : vector<16x128xf32> to vector<16x32xf32>
    %559 = arith.mulf %550, %558 : vector<16x32xf32>
    %560 = arith.addf %557, %559 : vector<16x32xf32>
    %561 = math.tanh %560 : vector<16x32xf32>
    %cst_186 = arith.constant 1.000000e+00 : f32
    %562 = vector.broadcast %cst_186 : f32 to vector<16x32xf32>
    %563 = arith.subf %562, %556 : vector<16x32xf32>
    %564 = arith.mulf %563, %561 : vector<16x32xf32>
    %565 = arith.mulf %556, %536 : vector<16x32xf32>
    %566 = arith.addf %564, %565 : vector<16x32xf32>
    %c14_187 = arith.constant 14 : index
    %c0_188 = arith.constant 0 : index
    %c0_189 = arith.constant 0 : index
    %567 = vector.load %arg3[%c14_187, %c0_188, %c0_189] : memref<15x16x32xf32, #tpu.memory_space<vmem>>, vector<1x16x32xf32>
    %568 = vector.shape_cast %567 : vector<1x16x32xf32> to vector<16x32xf32>
    %569 = vector.shape_cast %566 : vector<16x32xf32> to vector<1x16x32xf32>
    tpu.vector_store %arg3[%c14_187, %c0_188, %c0_189], %569 {strides = array<i32>} : memref<15x16x32xf32, #tpu.memory_space<vmem>>, vector<1x16x32xf32>,
    return
  }
}

</mosaic_0001>

<llo_original>
// kernel: recurrent2d_forward.1
$region0: #{recurrent2d_forward.1}
  #allocation0 [shape = 'u32[]', space=smem, size = 0x4, offset = 0x4, fixed_abs, tag = 'smem constant byte address 0x4 - core index']
  #allocation1 [shape = 'u32[144,128]{1,0:T(1,128)}', space=vmem, size = 0x12000, scoped, tag = 'internal scratch']
  %s0 = inlined_call_operand.vmem [shape: f32[15,16,128], index: 0, kind: input, shape index: {}]
  %s1 = inlined_call_operand.vmem [shape: bf16[32,128], index: 1, kind: input, shape index: {}]
  %s2 = inlined_call_operand.vmem [shape: bf16[32,128], index: 2, kind: input, shape index: {}]
  %s3 = inlined_call_operand.vmem [shape: f32[15,16,32], index: 3, kind: output, shape index: {}]
  %s4 = sld [smem:[#allocation0]]
  $region22: #{recurrent2d_forward.1} parent=0
    _
  %s6 = ssub.s32 1, %s4
  %s7 = scalar_select 0, %s6, %s4
  // Predicated region
  $region2: #{recurrent2d_forward.1} parent=0 // pred_check
    _
  $region3: #{recurrent2d_forward.1} parent=0 // pred_check_branch
    %9 = sbr.rel (0) target = $region5
  $region4: #{recurrent2d_forward.1} parent=0 // pred_region
    _
  $region5: #{recurrent2d_forward.1} parent=0 // pred_fallthru
    _
  // Predicated region
  $region6: #{recurrent2d_forward.1} parent=0 // pred_check
    _
  $region7: #{recurrent2d_forward.1} parent=0 // pred_check_branch
    %11 = sbr.rel (0) target = $region9
  $region8: #{recurrent2d_forward.1} parent=0 // pred_region
    _
  $region9: #{recurrent2d_forward.1} parent=0 // pred_fallthru
    _
  // Predicated region
  $region10: #{recurrent2d_forward.1} parent=0 // pred_check
    _
  $region11: #{recurrent2d_forward.1} parent=0 // pred_check_branch
    %13 = sbr.rel (0) target = $region13
  $region12: #{recurrent2d_forward.1} parent=0 // pred_region
    _
  $region13: #{recurrent2d_forward.1} parent=0 // pred_fallthru
    _
  %v15 = vld [vmem:[%s1] sm:$0xf]
  %v16 = vld [vmem:[%s1 + $0x4] sm:$0xf]
  %v17 = vld [vmem:[%s1 + $0x8] sm:$0xf]
  %v18 = vld [vmem:[%s1 + $0xc] sm:$0xf]
  %v19 = vld [vmem:[%s2] sm:$0xf]
  %v20 = vld [vmem:[%s2 + $0x4] sm:$0xf]
  %v21 = vld [vmem:[%s2 + $0x8] sm:$0xf]
  %v22 = vld [vmem:[%s2 + $0xc] sm:$0xf]
  %v23 = vlaneseq
  %v24 = vshrl.u32 %v23, 7
  %v25 = vadd.s32 %v24, 8
  %vm26 = vcmp.lt.s32.totalorder %v24, 2
  %v27 = vpack.c.bf16 0.0, 0.0
  %v32 = vunpack.c.l.b16 %v19
  %v33 = vunpack.c.l.b16 %v20
  %v34 = vunpack.c.l.b16 %v21
  %v35 = vunpack.c.l.b16 %v22
  %v36 = vpack.c.b16 %v33, %v32
  %v37 = vpack.c.b16 %v35, %v34
  %vm40 = vcmask 261120
  %v42 = vsel %vm40, 0, 0
  %44 = vmatprep.subr.bf16.mxu0 0
  %45 = vmatpush1.bf16.msra.mxu0 0
  %46 = vmatprep.subr.bf16.mxu0 0
  %47 = vmatpush1.bf16.msra.mxu0 0
  %48 = vmatprep.subr.bf16.mxu0 0
  %49 = vmatpush1.bf16.msra.mxu0 0
  %50 = vmatprep.subr.bf16.mxu0 0
  %51 = vmatpush1.bf16.msra.mxu0 0
  %52 = vmatprep.subr.bf16.mxu0 0
  %53 = vmatpush1.bf16.msra.mxu0 0
  %54 = vmatprep.subr.bf16.mxu0 0
  %55 = vmatpush1.bf16.msra.mxu0 0
  %56 = vmatprep.subr.bf16.mxu0 0
  %57 = vmatpush1.bf16.msra.mxu0 %v37
  %58 = vmatprep.subr.bf16.mxu0 0
  %59 = vmatpush1.bf16.msra.mxu0 %v36
  %60 = vmatprep.subr.bf16.mxu0 0
  %61 = vmatpush2.bf16.msra.mxu0 0
  %62 = vmatprep.subr.bf16.mxu0 0
  %63 = vmatpush2.bf16.msra.mxu0 0
  %64 = vmatprep.subr.bf16.mxu0 0
  %65 = vmatpush2.bf16.msra.mxu0 0
  %66 = vmatprep.subr.bf16.mxu0 0
  %67 = vmatpush2.bf16.msra.mxu0 0
  %68 = vmatprep.subr.bf16.mxu0 0
  %69 = vmatpush2.bf16.msra.mxu0 0
  %70 = vmatprep.subr.bf16.mxu0 0
  %71 = vmatpush2.bf16.msra.mxu0 0
  %72 = vmatprep.subr.bf16.mxu0 0
  %73 = vmatpush2.bf16.msra.mxu0 0
  %74 = vmatprep.subr.bf16.mxu0 0
  %75 = vmatpush2.bf16.msra.mxu0 0
  %76 = vmatprep.mubr.bf16.mxu0 0
  %77 = vmatmul.mubr.bf16.gmra.mxu0 %v42
  %v78 = vpop.f32.mrf.mxu0
  %v79 = vadd.f32 0.0, %v78
  %v80 = vpop.f32.mrf.mxu0
  %v81 = vpop.f32.mrf.mxu0
  %v82 = vadd.f32 0.0, %v81
  %v83 = vpop.f32.mrf.mxu0
  %84 = vdwg.mxu0
  %v89 = vunpack.c.l.b16 %v15
  %v90 = vunpack.c.l.b16 %v16
  %v91 = vunpack.c.l.b16 %v17
  %v92 = vunpack.c.l.b16 %v18
  %v93 = vpack.c.b16 %v90, %v89
  %v94 = vpack.c.b16 %v92, %v91
  %v98 = vsel %vm40, %v27, 0
  %100 = vmatprep.subr.bf16.mxu0 0
  %101 = vmatpush1.bf16.msra.mxu0 0
  %102 = vmatprep.subr.bf16.mxu0 0
  %103 = vmatpush1.bf16.msra.mxu0 0
  %104 = vmatprep.subr.bf16.mxu0 0
  %105 = vmatpush1.bf16.msra.mxu0 0
  %106 = vmatprep.subr.bf16.mxu0 0
  %107 = vmatpush1.bf16.msra.mxu0 0
  %108 = vmatprep.subr.bf16.mxu0 0
  %109 = vmatpush1.bf16.msra.mxu0 0
  %110 = vmatprep.subr.bf16.mxu0 0
  %111 = vmatpush1.bf16.msra.mxu0 0
  %112 = vmatprep.subr.bf16.mxu0 0
  %113 = vmatpush1.bf16.msra.mxu0 %v94
  %114 = vmatprep.subr.bf16.mxu0 0
  %115 = vmatpush1.bf16.msra.mxu0 %v93
  %116 = vmatprep.subr.bf16.mxu0 0
  %117 = vmatpush2.bf16.msra.mxu0 0
  %118 = vmatprep.subr.bf16.mxu0 0
  %119 = vmatpush2.bf16.msra.mxu0 0
  %120 = vmatprep.subr.bf16.mxu0 0
  %121 = vmatpush2.bf16.msra.mxu0 0
  %122 = vmatprep.subr.bf16.mxu0 0
  %123 = vmatpush2.bf16.msra.mxu0 0
  %124 = vmatprep.subr.bf16.mxu0 0
  %125 = vmatpush2.bf16.msra.mxu0 0
  %126 = vmatprep.subr.bf16.mxu0 0
  %127 = vmatpush2.bf16.msra.mxu0 0
  %128 = vmatprep.subr.bf16.mxu0 0
  %129 = vmatpush2.bf16.msra.mxu0 0
  %130 = vmatprep.subr.bf16.mxu0 0
  %131 = vmatpush2.bf16.msra.mxu0 0
  %132 = vmatprep.mubr.bf16.mxu0 0
  %133 = vmatmul.mubr.bf16.gmra.mxu0 %v98
  %v134 = vpop.f32.mrf.mxu0
  %v135 = vadd.f32 %v79, %v134
  %v136 = vpop.f32.mrf.mxu0
  %v137 = vpop.f32.mrf.mxu0
  %v138 = vadd.f32 %v82, %v137
  %v139 = vpop.f32.mrf.mxu0
  %140 = vdwg.mxu0
  %v141 = vld [vmem:[%s0] sm:$0xff]
  %v142 = vld [vmem:[%s0 + $0x8] sm:$0xff]
  %v143 = vadd.f32 %v141, %v135
  %v144 = vadd.f32 %v142, %v138
  %v145 = vxor.u32 %v143, 2147483648
  %v146 = vxor.u32 %v144, 2147483648
  %v147 = vmul.f32 %v145, 1.442695
  %v148 = vpow.pop %v147
  %v149 = vmul.f32 %v146, 1.442695
  %v150 = vpow.pop %v149
  %v151 = vadd.f32 %v148, 1.0
  %v152 = vadd.f32 %v150, 1.0
  %v153 = vrcp.pop %v151
  %v154 = vmul.f32 1.0, %v153
  %v155 = vrcp.pop %v152
  %v156 = vmul.f32 1.0, %v155
  %159 = vrot.lane.b32.xlu0 %v143, 64
  %v160 = vpop.permute.xlu0 %159
  %161 = vrot.lane.b32.xlu0 %v144, 64
  %v162 = vpop.permute.xlu0 %161
  %v165 = vmul.f32 %v154, %v160
  %v166 = vmul.f32 %v156, %v162
  %169 = vrot.lane.b32.xlu0 %v165, 96
  %v170 = vpop.permute.xlu0 %169
  %171 = vrot.lane.b32.xlu0 %v166, 96
  %v172 = vpop.permute.xlu0 %171
  %v175 = vadd.f32 %v143, %v170
  %v176 = vadd.f32 %v144, %v172
  %v177 = vtanh.pop %v175
  %v178 = vtanh.pop %v176
  %v179 = vsub.f32 1.0, %v154
  %v180 = vsub.f32 1.0, %v156
  %183 = vrot.lane.b32.xlu0 %v177, 64
  %v184 = vpop.permute.xlu0 %183
  %185 = vrot.lane.b32.xlu0 %v178, 64
  %v186 = vpop.permute.xlu0 %185
  %v189 = vmul.f32 %v179, %v184
  %v190 = vmul.f32 %v180, %v186
  %192 = vrot.lane.b32.xlu0 0.0, 32
  %v193 = vpop.permute.xlu0 %192
  %v195 = vmul.f32 %v154, %v193
  %v196 = vmul.f32 %v156, %v193
  %v197 = vadd.f32 %v189, %v195
  %v198 = vadd.f32 %v190, %v196
  %vm199 = vcmp.lt.s32.totalorder %v25, 2
  %v200 = vsel %vm26, %v197, 0.0
  %v201 = vsel %vm199, %v198, 0.0
  %204 = vrot.lane.b32.xlu0 %v200, 96
  %v205 = vpop.permute.xlu0 %204
  %206 = vrot.lane.b32.xlu0 %v201, 96
  %v207 = vpop.permute.xlu0 %206
  %210 = vst.msk [vmem:[%s3] sm:$0xff] %vm40, %v205
  %211 = vst.msk [vmem:[%s3 + $0x8] sm:$0xff] %vm40, %v207
  %v212 = vrot.slane %v205, 6
  %v213 = vrot.slane %v207, 6
  %v214 = vsel %vm26, %v212, %v213
  %v215 = vsel %vm26, %v213, %v212
  %v216 = vpack.c.bf16 %v214, %v215
  %v217 = vpack.c.bf16 %v201, %v200
  %219 = vrot.lane.b32.xlu0 %v217, 96
  %v220 = vpop.permute.xlu0 %219
  %v222 = vsel %vm40, %v220, 0
  %224 = vmatprep.subr.bf16.mxu0 0
  %225 = vmatpush1.bf16.msra.mxu0 0
  %226 = vmatprep.subr.bf16.mxu0 0
  %227 = vmatpush1.bf16.msra.mxu0 0
  %228 = vmatprep.subr.bf16.mxu0 0
  %229 = vmatpush1.bf16.msra.mxu0 0
  %230 = vmatprep.subr.bf16.mxu0 0
  %231 = vmatpush1.bf16.msra.mxu0 0
  %232 = vmatprep.subr.bf16.mxu0 0
  %233 = vmatpush1.bf16.msra.mxu0 0
  %234 = vmatprep.subr.bf16.mxu0 0
  %235 = vmatpush1.bf16.msra.mxu0 0
  %236 = vmatprep.subr.bf16.mxu0 0
  %237 = vmatpush1.bf16.msra.mxu0 %v37
  %238 = vmatprep.subr.bf16.mxu0 0
  %239 = vmatpush1.bf16.msra.mxu0 %v36
  %240 = vmatprep.subr.bf16.mxu0 0
  %241 = vmatpush2.bf16.msra.mxu0 0
  %242 = vmatprep.subr.bf16.mxu0 0
  %243 = vmatpush2.bf16.msra.mxu0 0
  %244 = vmatprep.subr.bf16.mxu0 0
  %245 = vmatpush2.bf16.msra.mxu0 0
  %246 = vmatprep.subr.bf16.mxu0 0
  %247 = vmatpush2.bf16.msra.mxu0 0
  %248 = vmatprep.subr.bf16.mxu0 0
  %249 = vmatpush2.bf16.msra.mxu0 0
  %250 = vmatprep.subr.bf16.mxu0 0
  %251 = vmatpush2.bf16.msra.mxu0 0
  %252 = vmatprep.subr.bf16.mxu0 0
  %253 = vmatpush2.bf16.msra.mxu0 0
  %254 = vmatprep.subr.bf16.mxu0 0
  %255 = vmatpush2.bf16.msra.mxu0 0
  %256 = vmatprep.mubr.bf16.mxu0 0
  %257 = vmatmul.mubr.bf16.gmra.mxu0 %v222
  %v258 = vpop.f32.mrf.mxu0
  %v259 = vadd.f32 0.0, %v258
  %v260 = vpop.f32.mrf.mxu0
  %v261 = vpop.f32.mrf.mxu0
  %v262 = vadd.f32 0.0, %v261
  %v263 = vpop.f32.mrf.mxu0
  %264 = vdwg.mxu0
  %v266 = vsel %vm40, %v216, 0
  %268 = vmatprep.subr.bf16.mxu0 0
  %269 = vmatpush1.bf16.msra.mxu0 0
  %270 = vmatprep.subr.bf16.mxu0 0
  %271 = vmatpush1.bf16.msra.mxu0 0
  %272 = vmatprep.subr.bf16.mxu0 0
  %273 = vmatpush1.bf16.msra.mxu0 0
  %274 = vmatprep.subr.bf16.mxu0 0
  %275 = vmatpush1.bf16.msra.mxu0 0
  %276 = vmatprep.subr.bf16.mxu0 0
  %277 = vmatpush1.bf16.msra.mxu0 0
  %278 = vmatprep.subr.bf16.mxu0 0
  %279 = vmatpush1.bf16.msra.mxu0 0
  %280 = vmatprep.subr.bf16.mxu0 0
  %281 = vmatpush1.bf16.msra.mxu0 %v94
  %282 = vmatprep.subr.bf16.mxu0 0
  %283 = vmatpush1.bf16.msra.mxu0 %v93
  %284 = vmatprep.subr.bf16.mxu0 0
  %285 = vmatpush2.bf16.msra.mxu0 0
  %286 = vmatprep.subr.bf16.mxu0 0
  %287 = vmatpush2.bf16.msra.mxu0 0
  %288 = vmatprep.subr.bf16.mxu0 0
  %289 = vmatpush2.bf16.msra.mxu0 0
  %290 = vmatprep.subr.bf16.mxu0 0
  %291 = vmatpush2.bf16.msra.mxu0 0
  %292 = vmatprep.subr.bf16.mxu0 0
  %293 = vmatpush2.bf16.msra.mxu0 0
  %294 = vmatprep.subr.bf16.mxu0 0
  %295 = vmatpush2.bf16.msra.mxu0 0
  %296 = vmatprep.subr.bf16.mxu0 0
  %297 = vmatpush2.bf16.msra.mxu0 0
  %298 = vmatprep.subr.bf16.mxu0 0
  %299 = vmatpush2.bf16.msra.mxu0 0
  %300 = vmatprep.mubr.bf16.mxu0 0
  %301 = vmatmul.mubr.bf16.gmra.mxu0 %v266
  %v302 = vpop.f32.mrf.mxu0
  %v303 = vadd.f32 %v259, %v302
  %v304 = vpop.f32.mrf.mxu0
  %v305 = vpop.f32.mrf.mxu0
  %v306 = vadd.f32 %v262, %v305
  %v307 = vpop.f32.mrf.mxu0
  %308 = vdwg.mxu0
  %s309 = scalar_lea.vmem %s0, 16
  %v310 = vld [vmem:[%s309] sm:$0xff]
  %v311 = vld [vmem:[%s309 + $0x8] sm:$0xff]
  %v312 = vadd.f32 %v310, %v303
  %v313 = vadd.f32 %v311, %v306
  %v314 = vxor.u32 %v312, 2147483648
  %v315 = vxor.u32 %v313, 2147483648
  %v316 = vmul.f32 %v314, 1.442695
  %v317 = vpow.pop %v316
  %v318 = vmul.f32 %v315, 1.442695
  %v319 = vpow.pop %v318
  %v320 = vadd.f32 %v317, 1.0
  %v321 = vadd.f32 %v319, 1.0
  %v322 = vrcp.pop %v320
  %v323 = vmul.f32 1.0, %v322
  %v324 = vrcp.pop %v321
  %v325 = vmul.f32 1.0, %v324
  %328 = vrot.lane.b32.xlu0 %v312, 64
  %v329 = vpop.permute.xlu0 %328
  %330 = vrot.lane.b32.xlu0 %v313, 64
  %v331 = vpop.permute.xlu0 %330
  %v334 = vmul.f32 %v323, %v329
  %v335 = vmul.f32 %v325, %v331
  %338 = vrot.lane.b32.xlu0 %v334, 96
  %v339 = vpop.permute.xlu0 %338
  %340 = vrot.lane.b32.xlu0 %v335, 96
  %v341 = vpop.permute.xlu0 %340
  %v344 = vadd.f32 %v312, %v339
  %v345 = vadd.f32 %v313, %v341
  %v346 = vtanh.pop %v344
  %v347 = vtanh.pop %v345
  %v348 = vsub.f32 1.0, %v323
  %v349 = vsub.f32 1.0, %v325
  %352 = vrot.lane.b32.xlu0 %v346, 64
  %v353 = vpop.permute.xlu0 %352
  %354 = vrot.lane.b32.xlu0 %v347, 64
  %v355 = vpop.permute.xlu0 %354
  %v358 = vmul.f32 %v348, %v353
  %v359 = vmul.f32 %v349, %v355
  %362 = vrot.lane.b32.xlu0 %v215, 32
  %v363 = vpop.permute.xlu0 %362
  %364 = vrot.lane.b32.xlu0 %v214, 32
  %v365 = vpop.permute.xlu0 %364
  %v368 = vmul.f32 %v323, %v363
  %v369 = vmul.f32 %v325, %v365
  %v370 = vadd.f32 %v358, %v368
  %v371 = vadd.f32 %v359, %v369
  %vm372 = vcmp.lt.s32.totalorder %v24, 4
  %vm373 = vcmp.lt.s32.totalorder %v25, 4
  %v374 = vsel %vm372, %v370, 0.0
  %v375 = vsel %vm373, %v371, 0.0
  %378 = vrot.lane.b32.xlu0 %v374, 96
  %v379 = vpop.permute.xlu0 %378
  %380 = vrot.lane.b32.xlu0 %v375, 96
  %v381 = vpop.permute.xlu0 %380
  %s384 = scalar_lea.vmem %s3, 16
  %385 = vst.msk [vmem:[%s384] sm:$0xff] %vm40, %v379
  %386 = vst.msk [vmem:[%s384 + $0x8] sm:$0xff] %vm40, %v381
  %v387 = vrot.slane %v379, 6
  %v388 = vrot.slane %v381, 6
  %v389 = vsel %vm26, %v387, %v388
  %v390 = vsel %vm26, %v388, %v387
  %v391 = vpack.c.bf16 %v389, %v390
  %v392 = vpack.c.bf16 %v375, %v374
  %394 = vrot.lane.b32.xlu0 %v392, 96
  %v395 = vpop.permute.xlu0 %394
  %v397 = vsel %vm40, %v395, 0
  %399 = vmatprep.subr.bf16.mxu0 0
  %400 = vmatpush1.bf16.msra.mxu0 0
  %401 = vmatprep.subr.bf16.mxu0 0
  %402 = vmatpush1.bf16.msra.mxu0 0
  %403 = vmatprep.subr.bf16.mxu0 0
  %404 = vmatpush1.bf16.msra.mxu0 0
  %405 = vmatprep.subr.bf16.mxu0 0
  %406 = vmatpush1.bf16.msra.mxu0 0
  %407 = vmatprep.subr.bf16.mxu0 0
  %408 = vmatpush1.bf16.msra.mxu0 0
  %409 = vmatprep.subr.bf16.mxu0 0
  %410 = vmatpush1.bf16.msra.mxu0 0
  %411 = vmatprep.subr.bf16.mxu0 0
  %412 = vmatpush1.bf16.msra.mxu0 %v37
  %413 = vmatprep.subr.bf16.mxu0 0
  %414 = vmatpush1.bf16.msra.mxu0 %v36
  %415 = vmatprep.subr.bf16.mxu0 0
  %416 = vmatpush2.bf16.msra.mxu0 0
  %417 = vmatprep.subr.bf16.mxu0 0
  %418 = vmatpush2.bf16.msra.mxu0 0
  %419 = vmatprep.subr.bf16.mxu0 0
  %420 = vmatpush2.bf16.msra.mxu0 0
  %421 = vmatprep.subr.bf16.mxu0 0
  %422 = vmatpush2.bf16.msra.mxu0 0
  %423 = vmatprep.subr.bf16.mxu0 0
  %424 = vmatpush2.bf16.msra.mxu0 0
  %425 = vmatprep.subr.bf16.mxu0 0
  %426 = vmatpush2.bf16.msra.mxu0 0
  %427 = vmatprep.subr.bf16.mxu0 0
  %428 = vmatpush2.bf16.msra.mxu0 0
  %429 = vmatprep.subr.bf16.mxu0 0
  %430 = vmatpush2.bf16.msra.mxu0 0
  %431 = vmatprep.mubr.bf16.mxu0 0
  %432 = vmatmul.mubr.bf16.gmra.mxu0 %v397
  %v433 = vpop.f32.mrf.mxu0
  %v434 = vadd.f32 0.0, %v433
  %v435 = vpop.f32.mrf.mxu0
  %v436 = vpop.f32.mrf.mxu0
  %v437 = vadd.f32 0.0, %v436
  %v438 = vpop.f32.mrf.mxu0
  %439 = vdwg.mxu0
  %v441 = vsel %vm40, %v391, 0
  %443 = vmatprep.subr.bf16.mxu0 0
  %444 = vmatpush1.bf16.msra.mxu0 0
  %445 = vmatprep.subr.bf16.mxu0 0
  %446 = vmatpush1.bf16.msra.mxu0 0
  %447 = vmatprep.subr.bf16.mxu0 0
  %448 = vmatpush1.bf16.msra.mxu0 0
  %449 = vmatprep.subr.bf16.mxu0 0
  %450 = vmatpush1.bf16.msra.mxu0 0
  %451 = vmatprep.subr.bf16.mxu0 0
  %452 = vmatpush1.bf16.msra.mxu0 0
  %453 = vmatprep.subr.bf16.mxu0 0
  %454 = vmatpush1.bf16.msra.mxu0 0
  %455 = vmatprep.subr.bf16.mxu0 0
  %456 = vmatpush1.bf16.msra.mxu0 %v94
  %457 = vmatprep.subr.bf16.mxu0 0
  %458 = vmatpush1.bf16.msra.mxu0 %v93
  %459 = vmatprep.subr.bf16.mxu0 0
  %460 = vmatpush2.bf16.msra.mxu0 0
  %461 = vmatprep.subr.bf16.mxu0 0
  %462 = vmatpush2.bf16.msra.mxu0 0
  %463 = vmatprep.subr.bf16.mxu0 0
  %464 = vmatpush2.bf16.msra.mxu0 0
  %465 = vmatprep.subr.bf16.mxu0 0
  %466 = vmatpush2.bf16.msra.mxu0 0
  %467 = vmatprep.subr.bf16.mxu0 0
  %468 = vmatpush2.bf16.msra.mxu0 0
  %469 = vmatprep.subr.bf16.mxu0 0
  %470 = vmatpush2.bf16.msra.mxu0 0
  %471 = vmatprep.subr.bf16.mxu0 0
  %472 = vmatpush2.bf16.msra.mxu0 0
  %473 = vmatprep.subr.bf16.mxu0 0
  %474 = vmatpush2.bf16.msra.mxu0 0
  %475 = vmatprep.mubr.bf16.mxu0 0
  %476 = vmatmul.mubr.bf16.gmra.mxu0 %v441
  %v477 = vpop.f32.mrf.mxu0
  %v478 = vadd.f32 %v434, %v477
  %v479 = vpop.f32.mrf.mxu0
  %v480 = vpop.f32.mrf.mxu0
  %v481 = vadd.f32 %v437, %v480
  %v482 = vpop.f32.mrf.mxu0
  %483 = vdwg.mxu0
  %s484 = scalar_lea.vmem %s0, 32
  %v485 = vld [vmem:[%s484] sm:$0xff]
  %v486 = vld [vmem:[%s484 + $0x8] sm:$0xff]
  %v487 = vadd.f32 %v485, %v478
  %v488 = vadd.f32 %v486, %v481
  %v489 = vxor.u32 %v487, 2147483648
  %v490 = vxor.u32 %v488, 2147483648
  %v491 = vmul.f32 %v489, 1.442695
  %v492 = vpow.pop %v491
  %v493 = vmul.f32 %v490, 1.442695
  %v494 = vpow.pop %v493
  %v495 = vadd.f32 %v492, 1.0
  %v496 = vadd.f32 %v494, 1.0
  %v497 = vrcp.pop %v495
  %v498 = vmul.f32 1.0, %v497
  %v499 = vrcp.pop %v496
  %v500 = vmul.f32 1.0, %v499
  %503 = vrot.lane.b32.xlu0 %v487, 64
  %v504 = vpop.permute.xlu0 %503
  %505 = vrot.lane.b32.xlu0 %v488, 64
  %v506 = vpop.permute.xlu0 %505
  %v509 = vmul.f32 %v498, %v504
  %v510 = vmul.f32 %v500, %v506
  %513 = vrot.lane.b32.xlu0 %v509, 96
  %v514 = vpop.permute.xlu0 %513
  %515 = vrot.lane.b32.xlu0 %v510, 96
  %v516 = vpop.permute.xlu0 %515
  %v519 = vadd.f32 %v487, %v514
  %v520 = vadd.f32 %v488, %v516
  %v521 = vtanh.pop %v519
  %v522 = vtanh.pop %v520
  %v523 = vsub.f32 1.0, %v498
  %v524 = vsub.f32 1.0, %v500
  %527 = vrot.lane.b32.xlu0 %v521, 64
  %v528 = vpop.permute.xlu0 %527
  %529 = vrot.lane.b32.xlu0 %v522, 64
  %v530 = vpop.permute.xlu0 %529
  %v533 = vmul.f32 %v523, %v528
  %v534 = vmul.f32 %v524, %v530
  %537 = vrot.lane.b32.xlu0 %v390, 32
  %v538 = vpop.permute.xlu0 %537
  %539 = vrot.lane.b32.xlu0 %v389, 32
  %v540 = vpop.permute.xlu0 %539
  %v543 = vmul.f32 %v498, %v538
  %v544 = vmul.f32 %v500, %v540
  %v545 = vadd.f32 %v533, %v543
  %v546 = vadd.f32 %v534, %v544
  %vm547 = vcmp.lt.s32.totalorder %v24, 6
  %vm548 = vcmp.lt.s32.totalorder %v25, 6
  %v549 = vsel %vm547, %v545, 0.0
  %v550 = vsel %vm548, %v546, 0.0
  %553 = vrot.lane.b32.xlu0 %v549, 96
  %v554 = vpop.permute.xlu0 %553
  %555 = vrot.lane.b32.xlu0 %v550, 96
  %v556 = vpop.permute.xlu0 %555
  %s559 = scalar_lea.vmem %s3, 32
  %560 = vst.msk [vmem:[%s559] sm:$0xff] %vm40, %v554
  %561 = vst.msk [vmem:[%s559 + $0x8] sm:$0xff] %vm40, %v556
  %v562 = vrot.slane %v554, 6
  %v563 = vrot.slane %v556, 6
  %v564 = vsel %vm26, %v562, %v563
  %v565 = vsel %vm26, %v563, %v562
  %v566 = vpack.c.bf16 %v564, %v565
  %v567 = vpack.c.bf16 %v550, %v549
  %569 = vrot.lane.b32.xlu0 %v567, 96
  %v570 = vpop.permute.xlu0 %569
  %v572 = vsel %vm40, %v570, 0
  %574 = vmatprep.subr.bf16.mxu0 0
  %575 = vmatpush1.bf16.msra.mxu0 0
  %576 = vmatprep.subr.bf16.mxu0 0
  %577 = vmatpush1.bf16.msra.mxu0 0
  %578 = vmatprep.subr.bf16.mxu0 0
  %579 = vmatpush1.bf16.msra.mxu0 0
  %580 = vmatprep.subr.bf16.mxu0 0
  %581 = vmatpush1.bf16.msra.mxu0 0
  %582 = vmatprep.subr.bf16.mxu0 0
  %583 = vmatpush1.bf16.msra.mxu0 0
  %584 = vmatprep.subr.bf16.mxu0 0
  %585 = vmatpush1.bf16.msra.mxu0 0
  %586 = vmatprep.subr.bf16.mxu0 0
  %587 = vmatpush1.bf16.msra.mxu0 %v37
  %588 = vmatprep.subr.bf16.mxu0 0
  %589 = vmatpush1.bf16.msra.mxu0 %v36
  %590 = vmatprep.subr.bf16.mxu0 0
  %591 = vmatpush2.bf16.msra.mxu0 0
  %592 = vmatprep.subr.bf16.mxu0 0
  %593 = vmatpush2.bf16.msra.mxu0 0
  %594 = vmatprep.subr.bf16.mxu0 0
  %595 = vmatpush2.bf16.msra.mxu0 0
  %596 = vmatprep.subr.bf16.mxu0 0
  %597 = vmatpush2.bf16.msra.mxu0 0
  %598 = vmatprep.subr.bf16.mxu0 0
  %599 = vmatpush2.bf16.msra.mxu0 0
  %600 = vmatprep.subr.bf16.mxu0 0
  %601 = vmatpush2.bf16.msra.mxu0 0
  %602 = vmatprep.subr.bf16.mxu0 0
  %603 = vmatpush2.bf16.msra.mxu0 0
  %604 = vmatprep.subr.bf16.mxu0 0
  %605 = vmatpush2.bf16.msra.mxu0 0
  %606 = vmatprep.mubr.bf16.mxu0 0
  %607 = vmatmul.mubr.bf16.gmra.mxu0 %v572
  %v608 = vpop.f32.mrf.mxu0
  %v609 = vadd.f32 0.0, %v608
  %v610 = vpop.f32.mrf.mxu0
  %v611 = vpop.f32.mrf.mxu0
  %v612 = vadd.f32 0.0, %v611
  %v613 = vpop.f32.mrf.mxu0
  %614 = vdwg.mxu0
  %v616 = vsel %vm40, %v566, 0
  %618 = vmatprep.subr.bf16.mxu0 0
  %619 = vmatpush1.bf16.msra.mxu0 0
  %620 = vmatprep.subr.bf16.mxu0 0
  %621 = vmatpush1.bf16.msra.mxu0 0
  %622 = vmatprep.subr.bf16.mxu0 0
  %623 = vmatpush1.bf16.msra.mxu0 0
  %624 = vmatprep.subr.bf16.mxu0 0
  %625 = vmatpush1.bf16.msra.mxu0 0
  %626 = vmatprep.subr.bf16.mxu0 0
  %627 = vmatpush1.bf16.msra.mxu0 0
  %628 = vmatprep.subr.bf16.mxu0 0
  %629 = vmatpush1.bf16.msra.mxu0 0
  %630 = vmatprep.subr.bf16.mxu0 0
  %631 = vmatpush1.bf16.msra.mxu0 %v94
  %632 = vmatprep.subr.bf16.mxu0 0
  %633 = vmatpush1.bf16.msra.mxu0 %v93
  %634 = vmatprep.subr.bf16.mxu0 0
  %635 = vmatpush2.bf16.msra.mxu0 0
  %636 = vmatprep.subr.bf16.mxu0 0
  %637 = vmatpush2.bf16.msra.mxu0 0
  %638 = vmatprep.subr.bf16.mxu0 0
  %639 = vmatpush2.bf16.msra.mxu0 0
  %640 = vmatprep.subr.bf16.mxu0 0
  %641 = vmatpush2.bf16.msra.mxu0 0
  %642 = vmatprep.subr.bf16.mxu0 0
  %643 = vmatpush2.bf16.msra.mxu0 0
  %644 = vmatprep.subr.bf16.mxu0 0
  %645 = vmatpush2.bf16.msra.mxu0 0
  %646 = vmatprep.subr.bf16.mxu0 0
  %647 = vmatpush2.bf16.msra.mxu0 0
  %648 = vmatprep.subr.bf16.mxu0 0
  %649 = vmatpush2.bf16.msra.mxu0 0
  %650 = vmatprep.mubr.bf16.mxu0 0
  %651 = vmatmul.mubr.bf16.gmra.mxu0 %v616
  %v652 = vpop.f32.mrf.mxu0
  %v653 = vadd.f32 %v609, %v652
  %v654 = vpop.f32.mrf.mxu0
  %v655 = vpop.f32.mrf.mxu0
  %v656 = vadd.f32 %v612, %v655
  %v657 = vpop.f32.mrf.mxu0
  %658 = vdwg.mxu0
  %s659 = scalar_lea.vmem %s0, 48
  %v660 = vld [vmem:[%s659] sm:$0xff]
  %v661 = vld [vmem:[%s659 + $0x8] sm:$0xff]
  %v662 = vadd.f32 %v660, %v653
  %v663 = vadd.f32 %v661, %v656
  %v664 = vxor.u32 %v662, 2147483648
  %v665 = vxor.u32 %v663, 2147483648
  %v666 = vmul.f32 %v664, 1.442695
  %v667 = vpow.pop %v666
  %v668 = vmul.f32 %v665, 1.442695
  %v669 = vpow.pop %v668
  %v670 = vadd.f32 %v667, 1.0
  %v671 = vadd.f32 %v669, 1.0
  %v672 = vrcp.pop %v670
  %v673 = vmul.f32 1.0, %v672
  %v674 = vrcp.pop %v671
  %v675 = vmul.f32 1.0, %v674
  %678 = vrot.lane.b32.xlu0 %v662, 64
  %v679 = vpop.permute.xlu0 %678
  %680 = vrot.lane.b32.xlu0 %v663, 64
  %v681 = vpop.permute.xlu0 %680
  %v684 = vmul.f32 %v673, %v679
  %v685 = vmul.f32 %v675, %v681
  %688 = vrot.lane.b32.xlu0 %v684, 96
  %v689 = vpop.permute.xlu0 %688
  %690 = vrot.lane.b32.xlu0 %v685, 96
  %v691 = vpop.permute.xlu0 %690
  %v694 = vadd.f32 %v662, %v689
  %v695 = vadd.f32 %v663, %v691
  %v696 = vtanh.pop %v694
  %v697 = vtanh.pop %v695
  %v698 = vsub.f32 1.0, %v673
  %v699 = vsub.f32 1.0, %v675
  %702 = vrot.lane.b32.xlu0 %v696, 64
  %v703 = vpop.permute.xlu0 %702
  %704 = vrot.lane.b32.xlu0 %v697, 64
  %v705 = vpop.permute.xlu0 %704
  %v708 = vmul.f32 %v698, %v703
  %v709 = vmul.f32 %v699, %v705
  %712 = vrot.lane.b32.xlu0 %v565, 32
  %v713 = vpop.permute.xlu0 %712
  %714 = vrot.lane.b32.xlu0 %v564, 32
  %v715 = vpop.permute.xlu0 %714
  %v718 = vmul.f32 %v673, %v713
  %v719 = vmul.f32 %v675, %v715
  %v720 = vadd.f32 %v708, %v718
  %v721 = vadd.f32 %v709, %v719
  %vm722 = vcmp.lt.s32.totalorder %v24, 8
  %vm723 = vcmp.lt.s32.totalorder %v25, 8
  %v724 = vsel %vm722, %v720, 0.0
  %v725 = vsel %vm723, %v721, 0.0
  %728 = vrot.lane.b32.xlu0 %v724, 96
  %v729 = vpop.permute.xlu0 %728
  %730 = vrot.lane.b32.xlu0 %v725, 96
  %v731 = vpop.permute.xlu0 %730
  %s734 = scalar_lea.vmem %s3, 48
  %735 = vst.msk [vmem:[%s734] sm:$0xff] %vm40, %v729
  %736 = vst.msk [vmem:[%s734 + $0x8] sm:$0xff] %vm40, %v731
  %v737 = vrot.slane %v729, 6
  %v738 = vrot.slane %v731, 6
  %v739 = vsel %vm26, %v737, %v738
  %v740 = vsel %vm26, %v738, %v737
  %v741 = vpack.c.bf16 %v739, %v740
  %v742 = vpack.c.bf16 %v725, %v724
  %744 = vrot.lane.b32.xlu0 %v742, 96
  %v745 = vpop.permute.xlu0 %744
  %v747 = vsel %vm40, %v745, 0
  %749 = vmatprep.subr.bf16.mxu0 0
  %750 = vmatpush1.bf16.msra.mxu0 0
  %751 = vmatprep.subr.bf16.mxu0 0
  %752 = vmatpush1.bf16.msra.mxu0 0
  %753 = vmatprep.subr.bf16.mxu0 0
  %754 = vmatpush1.bf16.msra.mxu0 0
  %755 = vmatprep.subr.bf16.mxu0 0
  %756 = vmatpush1.bf16.msra.mxu0 0
  %757 = vmatprep.subr.bf16.mxu0 0
  %758 = vmatpush1.bf16.msra.mxu0 0
  %759 = vmatprep.subr.bf16.mxu0 0
  %760 = vmatpush1.bf16.msra.mxu0 0
  %761 = vmatprep.subr.bf16.mxu0 0
  %762 = vmatpush1.bf16.msra.mxu0 %v37
  %763 = vmatprep.subr.bf16.mxu0 0
  %764 = vmatpush1.bf16.msra.mxu0 %v36
  %765 = vmatprep.subr.bf16.mxu0 0
  %766 = vmatpush2.bf16.msra.mxu0 0
  %767 = vmatprep.subr.bf16.mxu0 0
  %768 = vmatpush2.bf16.msra.mxu0 0
  %769 = vmatprep.subr.bf16.mxu0 0
  %770 = vmatpush2.bf16.msra.mxu0 0
  %771 = vmatprep.subr.bf16.mxu0 0
  %772 = vmatpush2.bf16.msra.mxu0 0
  %773 = vmatprep.subr.bf16.mxu0 0
  %774 = vmatpush2.bf16.msra.mxu0 0
  %775 = vmatprep.subr.bf16.mxu0 0
  %776 = vmatpush2.bf16.msra.mxu0 0
  %777 = vmatprep.subr.bf16.mxu0 0
  %778 = vmatpush2.bf16.msra.mxu0 0
  %779 = vmatprep.subr.bf16.mxu0 0
  %780 = vmatpush2.bf16.msra.mxu0 0
  %781 = vmatprep.mubr.bf16.mxu0 0
  %782 = vmatmul.mubr.bf16.gmra.mxu0 %v747
  %v783 = vpop.f32.mrf.mxu0
  %v784 = vadd.f32 0.0, %v783
  %v785 = vpop.f32.mrf.mxu0
  %v786 = vpop.f32.mrf.mxu0
  %v787 = vadd.f32 0.0, %v786
  %v788 = vpop.f32.mrf.mxu0
  %789 = vdwg.mxu0
  %v791 = vsel %vm40, %v741, 0
  %793 = vmatprep.subr.bf16.mxu0 0
  %794 = vmatpush1.bf16.msra.mxu0 0
  %795 = vmatprep.subr.bf16.mxu0 0
  %796 = vmatpush1.bf16.msra.mxu0 0
  %797 = vmatprep.subr.bf16.mxu0 0
  %798 = vmatpush1.bf16.msra.mxu0 0
  %799 = vmatprep.subr.bf16.mxu0 0
  %800 = vmatpush1.bf16.msra.mxu0 0
  %801 = vmatprep.subr.bf16.mxu0 0
  %802 = vmatpush1.bf16.msra.mxu0 0
  %803 = vmatprep.subr.bf16.mxu0 0
  %804 = vmatpush1.bf16.msra.mxu0 0
  %805 = vmatprep.subr.bf16.mxu0 0
  %806 = vmatpush1.bf16.msra.mxu0 %v94
  %807 = vmatprep.subr.bf16.mxu0 0
  %808 = vmatpush1.bf16.msra.mxu0 %v93
  %809 = vmatprep.subr.bf16.mxu0 0
  %810 = vmatpush2.bf16.msra.mxu0 0
  %811 = vmatprep.subr.bf16.mxu0 0
  %812 = vmatpush2.bf16.msra.mxu0 0
  %813 = vmatprep.subr.bf16.mxu0 0
  %814 = vmatpush2.bf16.msra.mxu0 0
  %815 = vmatprep.subr.bf16.mxu0 0
  %816 = vmatpush2.bf16.msra.mxu0 0
  %817 = vmatprep.subr.bf16.mxu0 0
  %818 = vmatpush2.bf16.msra.mxu0 0
  %819 = vmatprep.subr.bf16.mxu0 0
  %820 = vmatpush2.bf16.msra.mxu0 0
  %821 = vmatprep.subr.bf16.mxu0 0
  %822 = vmatpush2.bf16.msra.mxu0 0
  %823 = vmatprep.subr.bf16.mxu0 0
  %824 = vmatpush2.bf16.msra.mxu0 0
  %825 = vmatprep.mubr.bf16.mxu0 0
  %826 = vmatmul.mubr.bf16.gmra.mxu0 %v791
  %v827 = vpop.f32.mrf.mxu0
  %v828 = vadd.f32 %v784, %v827
  %v829 = vpop.f32.mrf.mxu0
  %v830 = vpop.f32.mrf.mxu0
  %v831 = vadd.f32 %v787, %v830
  %v832 = vpop.f32.mrf.mxu0
  %833 = vdwg.mxu0
  %s834 = scalar_lea.vmem %s0, 64
  %v835 = vld [vmem:[%s834] sm:$0xff]
  %v836 = vld [vmem:[%s834 + $0x8] sm:$0xff]
  %v837 = vadd.f32 %v835, %v828
  %v838 = vadd.f32 %v836, %v831
  %v839 = vxor.u32 %v837, 2147483648
  %v840 = vxor.u32 %v838, 2147483648
  %v841 = vmul.f32 %v839, 1.442695
  %v842 = vpow.pop %v841
  %v843 = vmul.f32 %v840, 1.442695
  %v844 = vpow.pop %v843
  %v845 = vadd.f32 %v842, 1.0
  %v846 = vadd.f32 %v844, 1.0
  %v847 = vrcp.pop %v845
  %v848 = vmul.f32 1.0, %v847
  %v849 = vrcp.pop %v846
  %v850 = vmul.f32 1.0, %v849
  %853 = vrot.lane.b32.xlu0 %v837, 64
  %v854 = vpop.permute.xlu0 %853
  %855 = vrot.lane.b32.xlu0 %v838, 64
  %v856 = vpop.permute.xlu0 %855
  %v859 = vmul.f32 %v848, %v854
  %v860 = vmul.f32 %v850, %v856
  %863 = vrot.lane.b32.xlu0 %v859, 96
  %v864 = vpop.permute.xlu0 %863
  %865 = vrot.lane.b32.xlu0 %v860, 96
  %v866 = vpop.permute.xlu0 %865
  %v869 = vadd.f32 %v837, %v864
  %v870 = vadd.f32 %v838, %v866
  %v871 = vtanh.pop %v869
  %v872 = vtanh.pop %v870
  %v873 = vsub.f32 1.0, %v848
  %v874 = vsub.f32 1.0, %v850
  %877 = vrot.lane.b32.xlu0 %v871, 64
  %v878 = vpop.permute.xlu0 %877
  %879 = vrot.lane.b32.xlu0 %v872, 64
  %v880 = vpop.permute.xlu0 %879
  %v883 = vmul.f32 %v873, %v878
  %v884 = vmul.f32 %v874, %v880
  %887 = vrot.lane.b32.xlu0 %v740, 32
  %v888 = vpop.permute.xlu0 %887
  %889 = vrot.lane.b32.xlu0 %v739, 32
  %v890 = vpop.permute.xlu0 %889
  %v893 = vmul.f32 %v848, %v888
  %v894 = vmul.f32 %v850, %v890
  %v895 = vadd.f32 %v883, %v893
  %v896 = vadd.f32 %v884, %v894
  %vm897 = vcmp.lt.s32.totalorder %v24, 10
  %vm898 = vcmp.lt.s32.totalorder %v25, 10
  %v899 = vsel %vm897, %v895, 0.0
  %v900 = vsel %vm898, %v896, 0.0
  %903 = vrot.lane.b32.xlu0 %v899, 96
  %v904 = vpop.permute.xlu0 %903
  %905 = vrot.lane.b32.xlu0 %v900, 96
  %v906 = vpop.permute.xlu0 %905
  %s909 = scalar_lea.vmem %s3, 64
  %910 = vst.msk [vmem:[%s909] sm:$0xff] %vm40, %v904
  %911 = vst.msk [vmem:[%s909 + $0x8] sm:$0xff] %vm40, %v906
  %v912 = vrot.slane %v904, 6
  %v913 = vrot.slane %v906, 6
  %v914 = vsel %vm26, %v912, %v913
  %v915 = vsel %vm26, %v913, %v912
  %v916 = vpack.c.bf16 %v914, %v915
  %v917 = vpack.c.bf16 %v900, %v899
  %919 = vrot.lane.b32.xlu0 %v917, 96
  %v920 = vpop.permute.xlu0 %919
  %v922 = vsel %vm40, %v920, 0
  %924 = vmatprep.subr.bf16.mxu0 0
  %925 = vmatpush1.bf16.msra.mxu0 0
  %926 = vmatprep.subr.bf16.mxu0 0
  %927 = vmatpush1.bf16.msra.mxu0 0
  %928 = vmatprep.subr.bf16.mxu0 0
  %929 = vmatpush1.bf16.msra.mxu0 0
  %930 = vmatprep.subr.bf16.mxu0 0
  %931 = vmatpush1.bf16.msra.mxu0 0
  %932 = vmatprep.subr.bf16.mxu0 0
  %933 = vmatpush1.bf16.msra.mxu0 0
  %934 = vmatprep.subr.bf16.mxu0 0
  %935 = vmatpush1.bf16.msra.mxu0 0
  %936 = vmatprep.subr.bf16.mxu0 0
  %937 = vmatpush1.bf16.msra.mxu0 %v37
  %938 = vmatprep.subr.bf16.mxu0 0
  %939 = vmatpush1.bf16.msra.mxu0 %v36
  %940 = vmatprep.subr.bf16.mxu0 0
  %941 = vmatpush2.bf16.msra.mxu0 0
  %942 = vmatprep.subr.bf16.mxu0 0
  %943 = vmatpush2.bf16.msra.mxu0 0
  %944 = vmatprep.subr.bf16.mxu0 0
  %945 = vmatpush2.bf16.msra.mxu0 0
  %946 = vmatprep.subr.bf16.mxu0 0
  %947 = vmatpush2.bf16.msra.mxu0 0
  %948 = vmatprep.subr.bf16.mxu0 0
  %949 = vmatpush2.bf16.msra.mxu0 0
  %950 = vmatprep.subr.bf16.mxu0 0
  %951 = vmatpush2.bf16.msra.mxu0 0
  %952 = vmatprep.subr.bf16.mxu0 0
  %953 = vmatpush2.bf16.msra.mxu0 0
  %954 = vmatprep.subr.bf16.mxu0 0
  %955 = vmatpush2.bf16.msra.mxu0 0
  %956 = vmatprep.mubr.bf16.mxu0 0
  %957 = vmatmul.mubr.bf16.gmra.mxu0 %v922
  %v958 = vpop.f32.mrf.mxu0
  %v959 = vadd.f32 0.0, %v958
  %v960 = vpop.f32.mrf.mxu0
  %v961 = vpop.f32.mrf.mxu0
  %v962 = vadd.f32 0.0, %v961
  %v963 = vpop.f32.mrf.mxu0
  %964 = vdwg.mxu0
  %v966 = vsel %vm40, %v916, 0
  %968 = vmatprep.subr.bf16.mxu0 0
  %969 = vmatpush1.bf16.msra.mxu0 0
  %970 = vmatprep.subr.bf16.mxu0 0
  %971 = vmatpush1.bf16.msra.mxu0 0
  %972 = vmatprep.subr.bf16.mxu0 0
  %973 = vmatpush1.bf16.msra.mxu0 0
  %974 = vmatprep.subr.bf16.mxu0 0
  %975 = vmatpush1.bf16.msra.mxu0 0
  %976 = vmatprep.subr.bf16.mxu0 0
  %977 = vmatpush1.bf16.msra.mxu0 0
  %978 = vmatprep.subr.bf16.mxu0 0
  %979 = vmatpush1.bf16.msra.mxu0 0
  %980 = vmatprep.subr.bf16.mxu0 0
  %981 = vmatpush1.bf16.msra.mxu0 %v94
  %982 = vmatprep.subr.bf16.mxu0 0
  %983 = vmatpush1.bf16.msra.mxu0 %v93
  %984 = vmatprep.subr.bf16.mxu0 0
  %985 = vmatpush2.bf16.msra.mxu0 0
  %986 = vmatprep.subr.bf16.mxu0 0
  %987 = vmatpush2.bf16.msra.mxu0 0
  %988 = vmatprep.subr.bf16.mxu0 0
  %989 = vmatpush2.bf16.msra.mxu0 0
  %990 = vmatprep.subr.bf16.mxu0 0
  %991 = vmatpush2.bf16.msra.mxu0 0
  %992 = vmatprep.subr.bf16.mxu0 0
  %993 = vmatpush2.bf16.msra.mxu0 0
  %994 = vmatprep.subr.bf16.mxu0 0
  %995 = vmatpush2.bf16.msra.mxu0 0
  %996 = vmatprep.subr.bf16.mxu0 0
  %997 = vmatpush2.bf16.msra.mxu0 0
  %998 = vmatprep.subr.bf16.mxu0 0
  %999 = vmatpush2.bf16.msra.mxu0 0
  %1000 = vmatprep.mubr.bf16.mxu0 0
  %1001 = vmatmul.mubr.bf16.gmra.mxu0 %v966
  %v1002 = vpop.f32.mrf.mxu0
  %v1003 = vadd.f32 %v959, %v1002
  %v1004 = vpop.f32.mrf.mxu0
  %v1005 = vpop.f32.mrf.mxu0
  %v1006 = vadd.f32 %v962, %v1005
  %v1007 = vpop.f32.mrf.mxu0
  %1008 = vdwg.mxu0
  %s1009 = scalar_lea.vmem %s0, 80
  %v1010 = vld [vmem:[%s1009] sm:$0xff]
  %v1011 = vld [vmem:[%s1009 + $0x8] sm:$0xff]
  %v1012 = vadd.f32 %v1010, %v1003
  %v1013 = vadd.f32 %v1011, %v1006
  %v1014 = vxor.u32 %v1012, 2147483648
  %v1015 = vxor.u32 %v1013, 2147483648
  %v1016 = vmul.f32 %v1014, 1.442695
  %v1017 = vpow.pop %v1016
  %v1018 = vmul.f32 %v1015, 1.442695
  %v1019 = vpow.pop %v1018
  %v1020 = vadd.f32 %v1017, 1.0
  %v1021 = vadd.f32 %v1019, 1.0
  %v1022 = vrcp.pop %v1020
  %v1023 = vmul.f32 1.0, %v1022
  %v1024 = vrcp.pop %v1021
  %v1025 = vmul.f32 1.0, %v1024
  %1028 = vrot.lane.b32.xlu0 %v1012, 64
  %v1029 = vpop.permute.xlu0 %1028
  %1030 = vrot.lane.b32.xlu0 %v1013, 64
  %v1031 = vpop.permute.xlu0 %1030
  %v1034 = vmul.f32 %v1023, %v1029
  %v1035 = vmul.f32 %v1025, %v1031
  %1038 = vrot.lane.b32.xlu0 %v1034, 96
  %v1039 = vpop.permute.xlu0 %1038
  %1040 = vrot.lane.b32.xlu0 %v1035, 96
  %v1041 = vpop.permute.xlu0 %1040
  %v1044 = vadd.f32 %v1012, %v1039
  %v1045 = vadd.f32 %v1013, %v1041
  %v1046 = vtanh.pop %v1044
  %v1047 = vtanh.pop %v1045
  %v1048 = vsub.f32 1.0, %v1023
  %v1049 = vsub.f32 1.0, %v1025
  %1052 = vrot.lane.b32.xlu0 %v1046, 64
  %v1053 = vpop.permute.xlu0 %1052
  %1054 = vrot.lane.b32.xlu0 %v1047, 64
  %v1055 = vpop.permute.xlu0 %1054
  %v1058 = vmul.f32 %v1048, %v1053
  %v1059 = vmul.f32 %v1049, %v1055
  %1062 = vrot.lane.b32.xlu0 %v915, 32
  %v1063 = vpop.permute.xlu0 %1062
  %1064 = vrot.lane.b32.xlu0 %v914, 32
  %v1065 = vpop.permute.xlu0 %1064
  %v1068 = vmul.f32 %v1023, %v1063
  %v1069 = vmul.f32 %v1025, %v1065
  %v1070 = vadd.f32 %v1058, %v1068
  %v1071 = vadd.f32 %v1059, %v1069
  %vm1072 = vcmp.lt.s32.totalorder %v24, 12
  %vm1073 = vcmp.lt.s32.totalorder %v25, 12
  %v1074 = vsel %vm1072, %v1070, 0.0
  %v1075 = vsel %vm1073, %v1071, 0.0
  %1078 = vrot.lane.b32.xlu0 %v1074, 96
  %v1079 = vpop.permute.xlu0 %1078
  %1080 = vrot.lane.b32.xlu0 %v1075, 96
  %v1081 = vpop.permute.xlu0 %1080
  %s1084 = scalar_lea.vmem %s3, 80
  %1085 = vst.msk [vmem:[%s1084] sm:$0xff] %vm40, %v1079
  %1086 = vst.msk [vmem:[%s1084 + $0x8] sm:$0xff] %vm40, %v1081
  %v1087 = vrot.slane %v1079, 6
  %v1088 = vrot.slane %v1081, 6
  %v1089 = vsel %vm26, %v1087, %v1088
  %v1090 = vsel %vm26, %v1088, %v1087
  %v1091 = vpack.c.bf16 %v1089, %v1090
  %v1092 = vpack.c.bf16 %v1075, %v1074
  %1094 = vrot.lane.b32.xlu0 %v1092, 96
  %v1095 = vpop.permute.xlu0 %1094
  %v1097 = vsel %vm40, %v1095, 0
  %1099 = vmatprep.subr.bf16.mxu0 0
  %1100 = vmatpush1.bf16.msra.mxu0 0
  %1101 = vmatprep.subr.bf16.mxu0 0
  %1102 = vmatpush1.bf16.msra.mxu0 0
  %1103 = vmatprep.subr.bf16.mxu0 0
  %1104 = vmatpush1.bf16.msra.mxu0 0
  %1105 = vmatprep.subr.bf16.mxu0 0
  %1106 = vmatpush1.bf16.msra.mxu0 0
  %1107 = vmatprep.subr.bf16.mxu0 0
  %1108 = vmatpush1.bf16.msra.mxu0 0
  %1109 = vmatprep.subr.bf16.mxu0 0
  %1110 = vmatpush1.bf16.msra.mxu0 0
  %1111 = vmatprep.subr.bf16.mxu0 0
  %1112 = vmatpush1.bf16.msra.mxu0 %v37
  %1113 = vmatprep.subr.bf16.mxu0 0
  %1114 = vmatpush1.bf16.msra.mxu0 %v36
  %1115 = vmatprep.subr.bf16.mxu0 0
  %1116 = vmatpush2.bf16.msra.mxu0 0
  %1117 = vmatprep.subr.bf16.mxu0 0
  %1118 = vmatpush2.bf16.msra.mxu0 0
  %1119 = vmatprep.subr.bf16.mxu0 0
  %1120 = vmatpush2.bf16.msra.mxu0 0
  %1121 = vmatprep.subr.bf16.mxu0 0
  %1122 = vmatpush2.bf16.msra.mxu0 0
  %1123 = vmatprep.subr.bf16.mxu0 0
  %1124 = vmatpush2.bf16.msra.mxu0 0
  %1125 = vmatprep.subr.bf16.mxu0 0
  %1126 = vmatpush2.bf16.msra.mxu0 0
  %1127 = vmatprep.subr.bf16.mxu0 0
  %1128 = vmatpush2.bf16.msra.mxu0 0
  %1129 = vmatprep.subr.bf16.mxu0 0
  %1130 = vmatpush2.bf16.msra.mxu0 0
  %1131 = vmatprep.mubr.bf16.mxu0 0
  %1132 = vmatmul.mubr.bf16.gmra.mxu0 %v1097
  %v1133 = vpop.f32.mrf.mxu0
  %v1134 = vadd.f32 0.0, %v1133
  %v1135 = vpop.f32.mrf.mxu0
  %v1136 = vpop.f32.mrf.mxu0
  %v1137 = vadd.f32 0.0, %v1136
  %v1138 = vpop.f32.mrf.mxu0
  %1139 = vdwg.mxu0
  %v1141 = vsel %vm40, %v1091, 0
  %1143 = vmatprep.subr.bf16.mxu0 0
  %1144 = vmatpush1.bf16.msra.mxu0 0
  %1145 = vmatprep.subr.bf16.mxu0 0
  %1146 = vmatpush1.bf16.msra.mxu0 0
  %1147 = vmatprep.subr.bf16.mxu0 0
  %1148 = vmatpush1.bf16.msra.mxu0 0
  %1149 = vmatprep.subr.bf16.mxu0 0
  %1150 = vmatpush1.bf16.msra.mxu0 0
  %1151 = vmatprep.subr.bf16.mxu0 0
  %1152 = vmatpush1.bf16.msra.mxu0 0
  %1153 = vmatprep.subr.bf16.mxu0 0
  %1154 = vmatpush1.bf16.msra.mxu0 0
  %1155 = vmatprep.subr.bf16.mxu0 0
  %1156 = vmatpush1.bf16.msra.mxu0 %v94
  %1157 = vmatprep.subr.bf16.mxu0 0
  %1158 = vmatpush1.bf16.msra.mxu0 %v93
  %1159 = vmatprep.subr.bf16.mxu0 0
  %1160 = vmatpush2.bf16.msra.mxu0 0
  %1161 = vmatprep.subr.bf16.mxu0 0
  %1162 = vmatpush2.bf16.msra.mxu0 0
  %1163 = vmatprep.subr.bf16.mxu0 0
  %1164 = vmatpush2.bf16.msra.mxu0 0
  %1165 = vmatprep.subr.bf16.mxu0 0
  %1166 = vmatpush2.bf16.msra.mxu0 0
  %1167 = vmatprep.subr.bf16.mxu0 0
  %1168 = vmatpush2.bf16.msra.mxu0 0
  %1169 = vmatprep.subr.bf16.mxu0 0
  %1170 = vmatpush2.bf16.msra.mxu0 0
  %1171 = vmatprep.subr.bf16.mxu0 0
  %1172 = vmatpush2.bf16.msra.mxu0 0
  %1173 = vmatprep.subr.bf16.mxu0 0
  %1174 = vmatpush2.bf16.msra.mxu0 0
  %1175 = vmatprep.mubr.bf16.mxu0 0
  %1176 = vmatmul.mubr.bf16.gmra.mxu0 %v1141
  %v1177 = vpop.f32.mrf.mxu0
  %v1178 = vadd.f32 %v1134, %v1177
  %v1179 = vpop.f32.mrf.mxu0
  %v1180 = vpop.f32.mrf.mxu0
  %v1181 = vadd.f32 %v1137, %v1180
  %v1182 = vpop.f32.mrf.mxu0
  %1183 = vdwg.mxu0
  %s1184 = scalar_lea.vmem %s0, 96
  %v1185 = vld [vmem:[%s1184] sm:$0xff]
  %v1186 = vld [vmem:[%s1184 + $0x8] sm:$0xff]
  %v1187 = vadd.f32 %v1185, %v1178
  %v1188 = vadd.f32 %v1186, %v1181
  %v1189 = vxor.u32 %v1187, 2147483648
  %v1190 = vxor.u32 %v1188, 2147483648
  %v1191 = vmul.f32 %v1189, 1.442695
  %v1192 = vpow.pop %v1191
  %v1193 = vmul.f32 %v1190, 1.442695
  %v1194 = vpow.pop %v1193
  %v1195 = vadd.f32 %v1192, 1.0
  %v1196 = vadd.f32 %v1194, 1.0
  %v1197 = vrcp.pop %v1195
  %v1198 = vmul.f32 1.0, %v1197
  %v1199 = vrcp.pop %v1196
  %v1200 = vmul.f32 1.0, %v1199
  %1203 = vrot.lane.b32.xlu0 %v1187, 64
  %v1204 = vpop.permute.xlu0 %1203
  %1205 = vrot.lane.b32.xlu0 %v1188, 64
  %v1206 = vpop.permute.xlu0 %1205
  %v1209 = vmul.f32 %v1198, %v1204
  %v1210 = vmul.f32 %v1200, %v1206
  %1213 = vrot.lane.b32.xlu0 %v1209, 96
  %v1214 = vpop.permute.xlu0 %1213
  %1215 = vrot.lane.b32.xlu0 %v1210, 96
  %v1216 = vpop.permute.xlu0 %1215
  %v1219 = vadd.f32 %v1187, %v1214
  %v1220 = vadd.f32 %v1188, %v1216
  %v1221 = vtanh.pop %v1219
  %v1222 = vtanh.pop %v1220
  %v1223 = vsub.f32 1.0, %v1198
  %v1224 = vsub.f32 1.0, %v1200
  %1227 = vrot.lane.b32.xlu0 %v1221, 64
  %v1228 = vpop.permute.xlu0 %1227
  %1229 = vrot.lane.b32.xlu0 %v1222, 64
  %v1230 = vpop.permute.xlu0 %1229
  %v1233 = vmul.f32 %v1223, %v1228
  %v1234 = vmul.f32 %v1224, %v1230
  %1237 = vrot.lane.b32.xlu0 %v1090, 32
  %v1238 = vpop.permute.xlu0 %1237
  %1239 = vrot.lane.b32.xlu0 %v1089, 32
  %v1240 = vpop.permute.xlu0 %1239
  %v1243 = vmul.f32 %v1198, %v1238
  %v1244 = vmul.f32 %v1200, %v1240
  %v1245 = vadd.f32 %v1233, %v1243
  %v1246 = vadd.f32 %v1234, %v1244
  %vm1247 = vcmp.lt.s32.totalorder %v24, 14
  %vm1248 = vcmp.lt.s32.totalorder %v25, 14
  %v1249 = vsel %vm1247, %v1245, 0.0
  %v1250 = vsel %vm1248, %v1246, 0.0
  %1253 = vrot.lane.b32.xlu0 %v1249, 96
  %v1254 = vpop.permute.xlu0 %1253
  %1255 = vrot.lane.b32.xlu0 %v1250, 96
  %v1256 = vpop.permute.xlu0 %1255
  %s1259 = scalar_lea.vmem %s3, 96
  %1260 = vst.msk [vmem:[%s1259] sm:$0xff] %vm40, %v1254
  %1261 = vst.msk [vmem:[%s1259 + $0x8] sm:$0xff] %vm40, %v1256
  %v1262 = vrot.slane %v1254, 6
  %v1263 = vrot.slane %v1256, 6
  %v1264 = vsel %vm26, %v1262, %v1263
  %v1265 = vsel %vm26, %v1263, %v1262
  %v1266 = vpack.c.bf16 %v1264, %v1265
  %v1267 = vpack.c.bf16 %v1250, %v1249
  %1269 = vrot.lane.b32.xlu0 %v1267, 96
  %v1270 = vpop.permute.xlu0 %1269
  %v1272 = vsel %vm40, %v1270, 0
  %1274 = vmatprep.subr.bf16.mxu0 0
  %1275 = vmatpush1.bf16.msra.mxu0 0
  %1276 = vmatprep.subr.bf16.mxu0 0
  %1277 = vmatpush1.bf16.msra.mxu0 0
  %1278 = vmatprep.subr.bf16.mxu0 0
  %1279 = vmatpush1.bf16.msra.mxu0 0
  %1280 = vmatprep.subr.bf16.mxu0 0
  %1281 = vmatpush1.bf16.msra.mxu0 0
  %1282 = vmatprep.subr.bf16.mxu0 0
  %1283 = vmatpush1.bf16.msra.mxu0 0
  %1284 = vmatprep.subr.bf16.mxu0 0
  %1285 = vmatpush1.bf16.msra.mxu0 0
  %1286 = vmatprep.subr.bf16.mxu0 0
  %1287 = vmatpush1.bf16.msra.mxu0 %v37
  %1288 = vmatprep.subr.bf16.mxu0 0
  %1289 = vmatpush1.bf16.msra.mxu0 %v36
  %1290 = vmatprep.subr.bf16.mxu0 0
  %1291 = vmatpush2.bf16.msra.mxu0 0
  %1292 = vmatprep.subr.bf16.mxu0 0
  %1293 = vmatpush2.bf16.msra.mxu0 0
  %1294 = vmatprep.subr.bf16.mxu0 0
  %1295 = vmatpush2.bf16.msra.mxu0 0
  %1296 = vmatprep.subr.bf16.mxu0 0
  %1297 = vmatpush2.bf16.msra.mxu0 0
  %1298 = vmatprep.subr.bf16.mxu0 0
  %1299 = vmatpush2.bf16.msra.mxu0 0
  %1300 = vmatprep.subr.bf16.mxu0 0
  %1301 = vmatpush2.bf16.msra.mxu0 0
  %1302 = vmatprep.subr.bf16.mxu0 0
  %1303 = vmatpush2.bf16.msra.mxu0 0
  %1304 = vmatprep.subr.bf16.mxu0 0
  %1305 = vmatpush2.bf16.msra.mxu0 0
  %1306 = vmatprep.mubr.bf16.mxu0 0
  %1307 = vmatmul.mubr.bf16.gmra.mxu0 %v1272
  %v1308 = vpop.f32.mrf.mxu0
  %v1309 = vadd.f32 0.0, %v1308
  %v1310 = vpop.f32.mrf.mxu0
  %v1311 = vpop.f32.mrf.mxu0
  %v1312 = vadd.f32 0.0, %v1311
  %v1313 = vpop.f32.mrf.mxu0
  %1314 = vdwg.mxu0
  %v1316 = vsel %vm40, %v1266, 0
  %1318 = vmatprep.subr.bf16.mxu0 0
  %1319 = vmatpush1.bf16.msra.mxu0 0
  %1320 = vmatprep.subr.bf16.mxu0 0
  %1321 = vmatpush1.bf16.msra.mxu0 0
  %1322 = vmatprep.subr.bf16.mxu0 0
  %1323 = vmatpush1.bf16.msra.mxu0 0
  %1324 = vmatprep.subr.bf16.mxu0 0
  %1325 = vmatpush1.bf16.msra.mxu0 0
  %1326 = vmatprep.subr.bf16.mxu0 0
  %1327 = vmatpush1.bf16.msra.mxu0 0
  %1328 = vmatprep.subr.bf16.mxu0 0
  %1329 = vmatpush1.bf16.msra.mxu0 0
  %1330 = vmatprep.subr.bf16.mxu0 0
  %1331 = vmatpush1.bf16.msra.mxu0 %v94
  %1332 = vmatprep.subr.bf16.mxu0 0
  %1333 = vmatpush1.bf16.msra.mxu0 %v93
  %1334 = vmatprep.subr.bf16.mxu0 0
  %1335 = vmatpush2.bf16.msra.mxu0 0
  %1336 = vmatprep.subr.bf16.mxu0 0
  %1337 = vmatpush2.bf16.msra.mxu0 0
  %1338 = vmatprep.subr.bf16.mxu0 0
  %1339 = vmatpush2.bf16.msra.mxu0 0
  %1340 = vmatprep.subr.bf16.mxu0 0
  %1341 = vmatpush2.bf16.msra.mxu0 0
  %1342 = vmatprep.subr.bf16.mxu0 0
  %1343 = vmatpush2.bf16.msra.mxu0 0
  %1344 = vmatprep.subr.bf16.mxu0 0
  %1345 = vmatpush2.bf16.msra.mxu0 0
  %1346 = vmatprep.subr.bf16.mxu0 0
  %1347 = vmatpush2.bf16.msra.mxu0 0
  %1348 = vmatprep.subr.bf16.mxu0 0
  %1349 = vmatpush2.bf16.msra.mxu0 0
  %1350 = vmatprep.mubr.bf16.mxu0 0
  %1351 = vmatmul.mubr.bf16.gmra.mxu0 %v1316
  %v1352 = vpop.f32.mrf.mxu0
  %v1353 = vadd.f32 %v1309, %v1352
  %v1354 = vpop.f32.mrf.mxu0
  %v1355 = vpop.f32.mrf.mxu0
  %v1356 = vadd.f32 %v1312, %v1355
  %v1357 = vpop.f32.mrf.mxu0
  %1358 = vdwg.mxu0
  %s1359 = scalar_lea.vmem %s0, 112
  %v1360 = vld [vmem:[%s1359] sm:$0xff]
  %v1361 = vld [vmem:[%s1359 + $0x8] sm:$0xff]
  %v1362 = vadd.f32 %v1360, %v1353
  %v1363 = vadd.f32 %v1361, %v1356
  %v1364 = vxor.u32 %v1362, 2147483648
  %v1365 = vxor.u32 %v1363, 2147483648
  %v1366 = vmul.f32 %v1364, 1.442695
  %v1367 = vpow.pop %v1366
  %v1368 = vmul.f32 %v1365, 1.442695
  %v1369 = vpow.pop %v1368
  %v1370 = vadd.f32 %v1367, 1.0
  %v1371 = vadd.f32 %v1369, 1.0
  %v1372 = vrcp.pop %v1370
  %v1373 = vmul.f32 1.0, %v1372
  %v1374 = vrcp.pop %v1371
  %v1375 = vmul.f32 1.0, %v1374
  %1378 = vrot.lane.b32.xlu0 %v1362, 64
  %v1379 = vpop.permute.xlu0 %1378
  %1380 = vrot.lane.b32.xlu0 %v1363, 64
  %v1381 = vpop.permute.xlu0 %1380
  %v1384 = vmul.f32 %v1373, %v1379
  %v1385 = vmul.f32 %v1375, %v1381
  %1388 = vrot.lane.b32.xlu0 %v1384, 96
  %v1389 = vpop.permute.xlu0 %1388
  %1390 = vrot.lane.b32.xlu0 %v1385, 96
  %v1391 = vpop.permute.xlu0 %1390
  %v1394 = vadd.f32 %v1362, %v1389
  %v1395 = vadd.f32 %v1363, %v1391
  %v1396 = vtanh.pop %v1394
  %v1397 = vtanh.pop %v1395
  %v1398 = vsub.f32 1.0, %v1373
  %v1399 = vsub.f32 1.0, %v1375
  %1402 = vrot.lane.b32.xlu0 %v1396, 64
  %v1403 = vpop.permute.xlu0 %1402
  %1404 = vrot.lane.b32.xlu0 %v1397, 64
  %v1405 = vpop.permute.xlu0 %1404
  %v1408 = vmul.f32 %v1398, %v1403
  %v1409 = vmul.f32 %v1399, %v1405
  %1412 = vrot.lane.b32.xlu0 %v1265, 32
  %v1413 = vpop.permute.xlu0 %1412
  %1414 = vrot.lane.b32.xlu0 %v1264, 32
  %v1415 = vpop.permute.xlu0 %1414
  %v1418 = vmul.f32 %v1373, %v1413
  %v1419 = vmul.f32 %v1375, %v1415
  %v1420 = vadd.f32 %v1408, %v1418
  %v1421 = vadd.f32 %v1409, %v1419
  %1424 = vrot.lane.b32.xlu0 %v1420, 96
  %v1425 = vpop.permute.xlu0 %1424
  %1426 = vrot.lane.b32.xlu0 %v1421, 96
  %v1427 = vpop.permute.xlu0 %1426
  %s1430 = scalar_lea.vmem %s3, 112
  %1431 = vst.msk [vmem:[%s1430] sm:$0xff] %vm40, %v1425
  %1432 = vst.msk [vmem:[%s1430 + $0x8] sm:$0xff] %vm40, %v1427
  %v1433 = vrot.slane %v1425, 6
  %v1434 = vrot.slane %v1427, 6
  %v1435 = vsel %vm26, %v1433, %v1434
  %v1436 = vsel %vm26, %v1434, %v1433
  %v1437 = vsel %vm26, 0.0, %v1436
  %v1438 = vsel %vm199, 0.0, %v1435
  %v1439 = vpack.c.bf16 %v1438, %v1437
  %v1440 = vpack.c.bf16 %v1421, %v1420
  %1442 = vrot.lane.b32.xlu0 %v1440, 96
  %v1443 = vpop.permute.xlu0 %1442
  %v1445 = vsel %vm40, %v1443, 0
  %1447 = vmatprep.subr.bf16.mxu0 0
  %1448 = vmatpush1.bf16.msra.mxu0 0
  %1449 = vmatprep.subr.bf16.mxu0 0
  %1450 = vmatpush1.bf16.msra.mxu0 0
  %1451 = vmatprep.subr.bf16.mxu0 0
  %1452 = vmatpush1.bf16.msra.mxu0 0
  %1453 = vmatprep.subr.bf16.mxu0 0
  %1454 = vmatpush1.bf16.msra.mxu0 0
  %1455 = vmatprep.subr.bf16.mxu0 0
  %1456 = vmatpush1.bf16.msra.mxu0 0
  %1457 = vmatprep.subr.bf16.mxu0 0
  %1458 = vmatpush1.bf16.msra.mxu0 0
  %1459 = vmatprep.subr.bf16.mxu0 0
  %1460 = vmatpush1.bf16.msra.mxu0 %v37
  %1461 = vmatprep.subr.bf16.mxu0 0
  %1462 = vmatpush1.bf16.msra.mxu0 %v36
  %1463 = vmatprep.subr.bf16.mxu0 0
  %1464 = vmatpush2.bf16.msra.mxu0 0
  %1465 = vmatprep.subr.bf16.mxu0 0
  %1466 = vmatpush2.bf16.msra.mxu0 0
  %1467 = vmatprep.subr.bf16.mxu0 0
  %1468 = vmatpush2.bf16.msra.mxu0 0
  %1469 = vmatprep.subr.bf16.mxu0 0
  %1470 = vmatpush2.bf16.msra.mxu0 0
  %1471 = vmatprep.subr.bf16.mxu0 0
  %1472 = vmatpush2.bf16.msra.mxu0 0
  %1473 = vmatprep.subr.bf16.mxu0 0
  %1474 = vmatpush2.bf16.msra.mxu0 0
  %1475 = vmatprep.subr.bf16.mxu0 0
  %1476 = vmatpush2.bf16.msra.mxu0 0
  %1477 = vmatprep.subr.bf16.mxu0 0
  %1478 = vmatpush2.bf16.msra.mxu0 0
  %1479 = vmatprep.mubr.bf16.mxu0 0
  %1480 = vmatmul.mubr.bf16.gmra.mxu0 %v1445
  %v1481 = vpop.f32.mrf.mxu0
  %v1482 = vadd.f32 0.0, %v1481
  %v1483 = vpop.f32.mrf.mxu0
  %v1484 = vpop.f32.mrf.mxu0
  %v1485 = vadd.f32 0.0, %v1484
  %v1486 = vpop.f32.mrf.mxu0
  %1487 = vdwg.mxu0
  %v1489 = vsel %vm40, %v1439, 0
  %1491 = vmatprep.subr.bf16.mxu0 0
  %1492 = vmatpush1.bf16.msra.mxu0 0
  %1493 = vmatprep.subr.bf16.mxu0 0
  %1494 = vmatpush1.bf16.msra.mxu0 0
  %1495 = vmatprep.subr.bf16.mxu0 0
  %1496 = vmatpush1.bf16.msra.mxu0 0
  %1497 = vmatprep.subr.bf16.mxu0 0
  %1498 = vmatpush1.bf16.msra.mxu0 0
  %1499 = vmatprep.subr.bf16.mxu0 0
  %1500 = vmatpush1.bf16.msra.mxu0 0
  %1501 = vmatprep.subr.bf16.mxu0 0
  %1502 = vmatpush1.bf16.msra.mxu0 0
  %1503 = vmatprep.subr.bf16.mxu0 0
  %1504 = vmatpush1.bf16.msra.mxu0 %v94
  %1505 = vmatprep.subr.bf16.mxu0 0
  %1506 = vmatpush1.bf16.msra.mxu0 %v93
  %1507 = vmatprep.subr.bf16.mxu0 0
  %1508 = vmatpush2.bf16.msra.mxu0 0
  %1509 = vmatprep.subr.bf16.mxu0 0
  %1510 = vmatpush2.bf16.msra.mxu0 0
  %1511 = vmatprep.subr.bf16.mxu0 0
  %1512 = vmatpush2.bf16.msra.mxu0 0
  %1513 = vmatprep.subr.bf16.mxu0 0
  %1514 = vmatpush2.bf16.msra.mxu0 0
  %1515 = vmatprep.subr.bf16.mxu0 0
  %1516 = vmatpush2.bf16.msra.mxu0 0
  %1517 = vmatprep.subr.bf16.mxu0 0
  %1518 = vmatpush2.bf16.msra.mxu0 0
  %1519 = vmatprep.subr.bf16.mxu0 0
  %1520 = vmatpush2.bf16.msra.mxu0 0
  %1521 = vmatprep.subr.bf16.mxu0 0
  %1522 = vmatpush2.bf16.msra.mxu0 0
  %1523 = vmatprep.mubr.bf16.mxu0 0
  %1524 = vmatmul.mubr.bf16.gmra.mxu0 %v1489
  %v1525 = vpop.f32.mrf.mxu0
  %v1526 = vadd.f32 %v1482, %v1525
  %v1527 = vpop.f32.mrf.mxu0
  %v1528 = vpop.f32.mrf.mxu0
  %v1529 = vadd.f32 %v1485, %v1528
  %v1530 = vpop.f32.mrf.mxu0
  %1531 = vdwg.mxu0
  %s1532 = scalar_lea.vmem %s0, 128
  %v1533 = vld [vmem:[%s1532] sm:$0xff]
  %v1534 = vld [vmem:[%s1532 + $0x8] sm:$0xff]
  %v1535 = vadd.f32 %v1533, %v1526
  %v1536 = vadd.f32 %v1534, %v1529
  %v1537 = vxor.u32 %v1535, 2147483648
  %v1538 = vxor.u32 %v1536, 2147483648
  %v1539 = vmul.f32 %v1537, 1.442695
  %v1540 = vpow.pop %v1539
  %v1541 = vmul.f32 %v1538, 1.442695
  %v1542 = vpow.pop %v1541
  %v1543 = vadd.f32 %v1540, 1.0
  %v1544 = vadd.f32 %v1542, 1.0
  %v1545 = vrcp.pop %v1543
  %v1546 = vmul.f32 1.0, %v1545
  %v1547 = vrcp.pop %v1544
  %v1548 = vmul.f32 1.0, %v1547
  %1551 = vrot.lane.b32.xlu0 %v1535, 64
  %v1552 = vpop.permute.xlu0 %1551
  %1553 = vrot.lane.b32.xlu0 %v1536, 64
  %v1554 = vpop.permute.xlu0 %1553
  %v1557 = vmul.f32 %v1546, %v1552
  %v1558 = vmul.f32 %v1548, %v1554
  %1561 = vrot.lane.b32.xlu0 %v1557, 96
  %v1562 = vpop.permute.xlu0 %1561
  %1563 = vrot.lane.b32.xlu0 %v1558, 96
  %v1564 = vpop.permute.xlu0 %1563
  %v1567 = vadd.f32 %v1535, %v1562
  %v1568 = vadd.f32 %v1536, %v1564
  %v1569 = vtanh.pop %v1567
  %v1570 = vtanh.pop %v1568
  %v1571 = vsub.f32 1.0, %v1546
  %v1572 = vsub.f32 1.0, %v1548
  %1575 = vrot.lane.b32.xlu0 %v1569, 64
  %v1576 = vpop.permute.xlu0 %1575
  %1577 = vrot.lane.b32.xlu0 %v1570, 64
  %v1578 = vpop.permute.xlu0 %1577
  %v1581 = vmul.f32 %v1571, %v1576
  %v1582 = vmul.f32 %v1572, %v1578
  %1585 = vrot.lane.b32.xlu0 %v1437, 32
  %v1586 = vpop.permute.xlu0 %1585
  %1587 = vrot.lane.b32.xlu0 %v1438, 32
  %v1588 = vpop.permute.xlu0 %1587
  %v1591 = vmul.f32 %v1546, %v1586
  %v1592 = vmul.f32 %v1548, %v1588
  %v1593 = vadd.f32 %v1581, %v1591
  %v1594 = vadd.f32 %v1582, %v1592
  %1597 = vrot.lane.b32.xlu0 %v1593, 96
  %v1598 = vpop.permute.xlu0 %1597
  %1599 = vrot.lane.b32.xlu0 %v1594, 96
  %v1600 = vpop.permute.xlu0 %1599
  %s1603 = scalar_lea.vmem %s3, 128
  %1604 = vst.msk [vmem:[%s1603] sm:$0xff] %vm40, %v1598
  %1605 = vst.msk [vmem:[%s1603 + $0x8] sm:$0xff] %vm40, %v1600
  %v1606 = vrot.slane %v1598, 6
  %v1607 = vrot.slane %v1600, 6
  %v1608 = vsel %vm26, %v1606, %v1607
  %v1609 = vsel %vm26, %v1607, %v1606
  %v1610 = vsel %vm26, 0.0, %v1609
  %v1611 = vsel %vm199, 0.0, %v1608
  %v1612 = vpack.c.bf16 %v1611, %v1610
  %v1613 = vpack.c.bf16 %v1594, %v1593
  %1615 = vrot.lane.b32.xlu0 %v1613, 96
  %v1616 = vpop.permute.xlu0 %1615
  %v1618 = vsel %vm40, %v1616, 0
  %1620 = vmatprep.subr.bf16.mxu0 0
  %1621 = vmatpush1.bf16.msra.mxu0 0
  %1622 = vmatprep.subr.bf16.mxu0 0
  %1623 = vmatpush1.bf16.msra.mxu0 0
  %1624 = vmatprep.subr.bf16.mxu0 0
  %1625 = vmatpush1.bf16.msra.mxu0 0
  %1626 = vmatprep.subr.bf16.mxu0 0
  %1627 = vmatpush1.bf16.msra.mxu0 0
  %1628 = vmatprep.subr.bf16.mxu0 0
  %1629 = vmatpush1.bf16.msra.mxu0 0
  %1630 = vmatprep.subr.bf16.mxu0 0
  %1631 = vmatpush1.bf16.msra.mxu0 0
  %1632 = vmatprep.subr.bf16.mxu0 0
  %1633 = vmatpush1.bf16.msra.mxu0 %v37
  %1634 = vmatprep.subr.bf16.mxu0 0
  %1635 = vmatpush1.bf16.msra.mxu0 %v36
  %1636 = vmatprep.subr.bf16.mxu0 0
  %1637 = vmatpush2.bf16.msra.mxu0 0
  %1638 = vmatprep.subr.bf16.mxu0 0
  %1639 = vmatpush2.bf16.msra.mxu0 0
  %1640 = vmatprep.subr.bf16.mxu0 0
  %1641 = vmatpush2.bf16.msra.mxu0 0
  %1642 = vmatprep.subr.bf16.mxu0 0
  %1643 = vmatpush2.bf16.msra.mxu0 0
  %1644 = vmatprep.subr.bf16.mxu0 0
  %1645 = vmatpush2.bf16.msra.mxu0 0
  %1646 = vmatprep.subr.bf16.mxu0 0
  %1647 = vmatpush2.bf16.msra.mxu0 0
  %1648 = vmatprep.subr.bf16.mxu0 0
  %1649 = vmatpush2.bf16.msra.mxu0 0
  %1650 = vmatprep.subr.bf16.mxu0 0
  %1651 = vmatpush2.bf16.msra.mxu0 0
  %1652 = vmatprep.mubr.bf16.mxu0 0
  %1653 = vmatmul.mubr.bf16.gmra.mxu0 %v1618
  %v1654 = vpop.f32.mrf.mxu0
  %v1655 = vadd.f32 0.0, %v1654
  %v1656 = vpop.f32.mrf.mxu0
  %v1657 = vpop.f32.mrf.mxu0
  %v1658 = vadd.f32 0.0, %v1657
  %v1659 = vpop.f32.mrf.mxu0
  %1660 = vdwg.mxu0
  %v1662 = vsel %vm40, %v1612, 0
  %1664 = vmatprep.subr.bf16.mxu0 0
  %1665 = vmatpush1.bf16.msra.mxu0 0
  %1666 = vmatprep.subr.bf16.mxu0 0
  %1667 = vmatpush1.bf16.msra.mxu0 0
  %1668 = vmatprep.subr.bf16.mxu0 0
  %1669 = vmatpush1.bf16.msra.mxu0 0
  %1670 = vmatprep.subr.bf16.mxu0 0
  %1671 = vmatpush1.bf16.msra.mxu0 0
  %1672 = vmatprep.subr.bf16.mxu0 0
  %1673 = vmatpush1.bf16.msra.mxu0 0
  %1674 = vmatprep.subr.bf16.mxu0 0
  %1675 = vmatpush1.bf16.msra.mxu0 0
  %1676 = vmatprep.subr.bf16.mxu0 0
  %1677 = vmatpush1.bf16.msra.mxu0 %v94
  %1678 = vmatprep.subr.bf16.mxu0 0
  %1679 = vmatpush1.bf16.msra.mxu0 %v93
  %1680 = vmatprep.subr.bf16.mxu0 0
  %1681 = vmatpush2.bf16.msra.mxu0 0
  %1682 = vmatprep.subr.bf16.mxu0 0
  %1683 = vmatpush2.bf16.msra.mxu0 0
  %1684 = vmatprep.subr.bf16.mxu0 0
  %1685 = vmatpush2.bf16.msra.mxu0 0
  %1686 = vmatprep.subr.bf16.mxu0 0
  %1687 = vmatpush2.bf16.msra.mxu0 0
  %1688 = vmatprep.subr.bf16.mxu0 0
  %1689 = vmatpush2.bf16.msra.mxu0 0
  %1690 = vmatprep.subr.bf16.mxu0 0
  %1691 = vmatpush2.bf16.msra.mxu0 0
  %1692 = vmatprep.subr.bf16.mxu0 0
  %1693 = vmatpush2.bf16.msra.mxu0 0
  %1694 = vmatprep.subr.bf16.mxu0 0
  %1695 = vmatpush2.bf16.msra.mxu0 0
  %1696 = vmatprep.mubr.bf16.mxu0 0
  %1697 = vmatmul.mubr.bf16.gmra.mxu0 %v1662
  %v1698 = vpop.f32.mrf.mxu0
  %v1699 = vadd.f32 %v1655, %v1698
  %v1700 = vpop.f32.mrf.mxu0
  %v1701 = vpop.f32.mrf.mxu0
  %v1702 = vadd.f32 %v1658, %v1701
  %v1703 = vpop.f32.mrf.mxu0
  %1704 = vdwg.mxu0
  %s1705 = scalar_lea.vmem %s0, 144
  %v1706 = vld [vmem:[%s1705] sm:$0xff]
  %v1707 = vld [vmem:[%s1705 + $0x8] sm:$0xff]
  %v1708 = vadd.f32 %v1706, %v1699
  %v1709 = vadd.f32 %v1707, %v1702
  %v1710 = vxor.u32 %v1708, 2147483648
  %v1711 = vxor.u32 %v1709, 2147483648
  %v1712 = vmul.f32 %v1710, 1.442695
  %v1713 = vpow.pop %v1712
  %v1714 = vmul.f32 %v1711, 1.442695
  %v1715 = vpow.pop %v1714
  %v1716 = vadd.f32 %v1713, 1.0
  %v1717 = vadd.f32 %v1715, 1.0
  %v1718 = vrcp.pop %v1716
  %v1719 = vmul.f32 1.0, %v1718
  %v1720 = vrcp.pop %v1717
  %v1721 = vmul.f32 1.0, %v1720
  %1724 = vrot.lane.b32.xlu0 %v1708, 64
  %v1725 = vpop.permute.xlu0 %1724
  %1726 = vrot.lane.b32.xlu0 %v1709, 64
  %v1727 = vpop.permute.xlu0 %1726
  %v1730 = vmul.f32 %v1719, %v1725
  %v1731 = vmul.f32 %v1721, %v1727
  %1734 = vrot.lane.b32.xlu0 %v1730, 96
  %v1735 = vpop.permute.xlu0 %1734
  %1736 = vrot.lane.b32.xlu0 %v1731, 96
  %v1737 = vpop.permute.xlu0 %1736
  %v1740 = vadd.f32 %v1708, %v1735
  %v1741 = vadd.f32 %v1709, %v1737
  %v1742 = vtanh.pop %v1740
  %v1743 = vtanh.pop %v1741
  %v1744 = vsub.f32 1.0, %v1719
  %v1745 = vsub.f32 1.0, %v1721
  %1748 = vrot.lane.b32.xlu0 %v1742, 64
  %v1749 = vpop.permute.xlu0 %1748
  %1750 = vrot.lane.b32.xlu0 %v1743, 64
  %v1751 = vpop.permute.xlu0 %1750
  %v1754 = vmul.f32 %v1744, %v1749
  %v1755 = vmul.f32 %v1745, %v1751
  %1758 = vrot.lane.b32.xlu0 %v1610, 32
  %v1759 = vpop.permute.xlu0 %1758
  %1760 = vrot.lane.b32.xlu0 %v1611, 32
  %v1761 = vpop.permute.xlu0 %1760
  %v1764 = vmul.f32 %v1719, %v1759
  %v1765 = vmul.f32 %v1721, %v1761
  %v1766 = vadd.f32 %v1754, %v1764
  %v1767 = vadd.f32 %v1755, %v1765
  %1770 = vrot.lane.b32.xlu0 %v1766, 96
  %v1771 = vpop.permute.xlu0 %1770
  %1772 = vrot.lane.b32.xlu0 %v1767, 96
  %v1773 = vpop.permute.xlu0 %1772
  %s1776 = scalar_lea.vmem %s3, 144
  %1777 = vst.msk [vmem:[%s1776] sm:$0xff] %vm40, %v1771
  %1778 = vst.msk [vmem:[%s1776 + $0x8] sm:$0xff] %vm40, %v1773
  %v1779 = vrot.slane %v1771, 6
  %v1780 = vrot.slane %v1773, 6
  %v1781 = vsel %vm26, %v1779, %v1780
  %v1782 = vsel %vm26, %v1780, %v1779
  %v1783 = vsel %vm26, 0.0, %v1782
  %v1784 = vsel %vm199, 0.0, %v1781
  %v1785 = vpack.c.bf16 %v1784, %v1783
  %v1786 = vpack.c.bf16 %v1767, %v1766
  %1788 = vrot.lane.b32.xlu0 %v1786, 96
  %v1789 = vpop.permute.xlu0 %1788
  %v1791 = vsel %vm40, %v1789, 0
  %1793 = vmatprep.subr.bf16.mxu0 0
  %1794 = vmatpush1.bf16.msra.mxu0 0
  %1795 = vmatprep.subr.bf16.mxu0 0
  %1796 = vmatpush1.bf16.msra.mxu0 0
  %1797 = vmatprep.subr.bf16.mxu0 0
  %1798 = vmatpush1.bf16.msra.mxu0 0
  %1799 = vmatprep.subr.bf16.mxu0 0
  %1800 = vmatpush1.bf16.msra.mxu0 0
  %1801 = vmatprep.subr.bf16.mxu0 0
  %1802 = vmatpush1.bf16.msra.mxu0 0
  %1803 = vmatprep.subr.bf16.mxu0 0
  %1804 = vmatpush1.bf16.msra.mxu0 0
  %1805 = vmatprep.subr.bf16.mxu0 0
  %1806 = vmatpush1.bf16.msra.mxu0 %v37
  %1807 = vmatprep.subr.bf16.mxu0 0
  %1808 = vmatpush1.bf16.msra.mxu0 %v36
  %1809 = vmatprep.subr.bf16.mxu0 0
  %1810 = vmatpush2.bf16.msra.mxu0 0
  %1811 = vmatprep.subr.bf16.mxu0 0
  %1812 = vmatpush2.bf16.msra.mxu0 0
  %1813 = vmatprep.subr.bf16.mxu0 0
  %1814 = vmatpush2.bf16.msra.mxu0 0
  %1815 = vmatprep.subr.bf16.mxu0 0
  %1816 = vmatpush2.bf16.msra.mxu0 0
  %1817 = vmatprep.subr.bf16.mxu0 0
  %1818 = vmatpush2.bf16.msra.mxu0 0
  %1819 = vmatprep.subr.bf16.mxu0 0
  %1820 = vmatpush2.bf16.msra.mxu0 0
  %1821 = vmatprep.subr.bf16.mxu0 0
  %1822 = vmatpush2.bf16.msra.mxu0 0
  %1823 = vmatprep.subr.bf16.mxu0 0
  %1824 = vmatpush2.bf16.msra.mxu0 0
  %1825 = vmatprep.mubr.bf16.mxu0 0
  %1826 = vmatmul.mubr.bf16.gmra.mxu0 %v1791
  %v1827 = vpop.f32.mrf.mxu0
  %v1828 = vadd.f32 0.0, %v1827
  %v1829 = vpop.f32.mrf.mxu0
  %v1830 = vpop.f32.mrf.mxu0
  %v1831 = vadd.f32 0.0, %v1830
  %v1832 = vpop.f32.mrf.mxu0
  %1833 = vdwg.mxu0
  %v1835 = vsel %vm40, %v1785, 0
  %1837 = vmatprep.subr.bf16.mxu0 0
  %1838 = vmatpush1.bf16.msra.mxu0 0
  %1839 = vmatprep.subr.bf16.mxu0 0
  %1840 = vmatpush1.bf16.msra.mxu0 0
  %1841 = vmatprep.subr.bf16.mxu0 0
  %1842 = vmatpush1.bf16.msra.mxu0 0
  %1843 = vmatprep.subr.bf16.mxu0 0
  %1844 = vmatpush1.bf16.msra.mxu0 0
  %1845 = vmatprep.subr.bf16.mxu0 0
  %1846 = vmatpush1.bf16.msra.mxu0 0
  %1847 = vmatprep.subr.bf16.mxu0 0
  %1848 = vmatpush1.bf16.msra.mxu0 0
  %1849 = vmatprep.subr.bf16.mxu0 0
  %1850 = vmatpush1.bf16.msra.mxu0 %v94
  %1851 = vmatprep.subr.bf16.mxu0 0
  %1852 = vmatpush1.bf16.msra.mxu0 %v93
  %1853 = vmatprep.subr.bf16.mxu0 0
  %1854 = vmatpush2.bf16.msra.mxu0 0
  %1855 = vmatprep.subr.bf16.mxu0 0
  %1856 = vmatpush2.bf16.msra.mxu0 0
  %1857 = vmatprep.subr.bf16.mxu0 0
  %1858 = vmatpush2.bf16.msra.mxu0 0
  %1859 = vmatprep.subr.bf16.mxu0 0
  %1860 = vmatpush2.bf16.msra.mxu0 0
  %1861 = vmatprep.subr.bf16.mxu0 0
  %1862 = vmatpush2.bf16.msra.mxu0 0
  %1863 = vmatprep.subr.bf16.mxu0 0
  %1864 = vmatpush2.bf16.msra.mxu0 0
  %1865 = vmatprep.subr.bf16.mxu0 0
  %1866 = vmatpush2.bf16.msra.mxu0 0
  %1867 = vmatprep.subr.bf16.mxu0 0
  %1868 = vmatpush2.bf16.msra.mxu0 0
  %1869 = vmatprep.mubr.bf16.mxu0 0
  %1870 = vmatmul.mubr.bf16.gmra.mxu0 %v1835
  %v1871 = vpop.f32.mrf.mxu0
  %v1872 = vadd.f32 %v1828, %v1871
  %v1873 = vpop.f32.mrf.mxu0
  %v1874 = vpop.f32.mrf.mxu0
  %v1875 = vadd.f32 %v1831, %v1874
  %v1876 = vpop.f32.mrf.mxu0
  %1877 = vdwg.mxu0
  %s1878 = scalar_lea.vmem %s0, 160
  %v1879 = vld [vmem:[%s1878] sm:$0xff]
  %v1880 = vld [vmem:[%s1878 + $0x8] sm:$0xff]
  %v1881 = vadd.f32 %v1879, %v1872
  %v1882 = vadd.f32 %v1880, %v1875
  %v1883 = vxor.u32 %v1881, 2147483648
  %v1884 = vxor.u32 %v1882, 2147483648
  %v1885 = vmul.f32 %v1883, 1.442695
  %v1886 = vpow.pop %v1885
  %v1887 = vmul.f32 %v1884, 1.442695
  %v1888 = vpow.pop %v1887
  %v1889 = vadd.f32 %v1886, 1.0
  %v1890 = vadd.f32 %v1888, 1.0
  %v1891 = vrcp.pop %v1889
  %v1892 = vmul.f32 1.0, %v1891
  %v1893 = vrcp.pop %v1890
  %v1894 = vmul.f32 1.0, %v1893
  %1897 = vrot.lane.b32.xlu0 %v1881, 64
  %v1898 = vpop.permute.xlu0 %1897
  %1899 = vrot.lane.b32.xlu0 %v1882, 64
  %v1900 = vpop.permute.xlu0 %1899
  %v1903 = vmul.f32 %v1892, %v1898
  %v1904 = vmul.f32 %v1894, %v1900
  %1907 = vrot.lane.b32.xlu0 %v1903, 96
  %v1908 = vpop.permute.xlu0 %1907
  %1909 = vrot.lane.b32.xlu0 %v1904, 96
  %v1910 = vpop.permute.xlu0 %1909
  %v1913 = vadd.f32 %v1881, %v1908
  %v1914 = vadd.f32 %v1882, %v1910
  %v1915 = vtanh.pop %v1913
  %v1916 = vtanh.pop %v1914
  %v1917 = vsub.f32 1.0, %v1892
  %v1918 = vsub.f32 1.0, %v1894
  %1921 = vrot.lane.b32.xlu0 %v1915, 64
  %v1922 = vpop.permute.xlu0 %1921
  %1923 = vrot.lane.b32.xlu0 %v1916, 64
  %v1924 = vpop.permute.xlu0 %1923
  %v1927 = vmul.f32 %v1917, %v1922
  %v1928 = vmul.f32 %v1918, %v1924
  %1931 = vrot.lane.b32.xlu0 %v1783, 32
  %v1932 = vpop.permute.xlu0 %1931
  %1933 = vrot.lane.b32.xlu0 %v1784, 32
  %v1934 = vpop.permute.xlu0 %1933
  %v1937 = vmul.f32 %v1892, %v1932
  %v1938 = vmul.f32 %v1894, %v1934
  %v1939 = vadd.f32 %v1927, %v1937
  %v1940 = vadd.f32 %v1928, %v1938
  %1943 = vrot.lane.b32.xlu0 %v1939, 96
  %v1944 = vpop.permute.xlu0 %1943
  %1945 = vrot.lane.b32.xlu0 %v1940, 96
  %v1946 = vpop.permute.xlu0 %1945
  %s1949 = scalar_lea.vmem %s3, 160
  %1950 = vst.msk [vmem:[%s1949] sm:$0xff] %vm40, %v1944
  %1951 = vst.msk [vmem:[%s1949 + $0x8] sm:$0xff] %vm40, %v1946
  %v1952 = vrot.slane %v1944, 6
  %v1953 = vrot.slane %v1946, 6
  %v1954 = vsel %vm26, %v1952, %v1953
  %v1955 = vsel %vm26, %v1953, %v1952
  %v1956 = vsel %vm26, 0.0, %v1955
  %v1957 = vsel %vm199, 0.0, %v1954
  %v1958 = vpack.c.bf16 %v1957, %v1956
  %v1959 = vpack.c.bf16 %v1940, %v1939
  %1961 = vrot.lane.b32.xlu0 %v1959, 96
  %v1962 = vpop.permute.xlu0 %1961
  %v1964 = vsel %vm40, %v1962, 0
  %1966 = vmatprep.subr.bf16.mxu0 0
  %1967 = vmatpush1.bf16.msra.mxu0 0
  %1968 = vmatprep.subr.bf16.mxu0 0
  %1969 = vmatpush1.bf16.msra.mxu0 0
  %1970 = vmatprep.subr.bf16.mxu0 0
  %1971 = vmatpush1.bf16.msra.mxu0 0
  %1972 = vmatprep.subr.bf16.mxu0 0
  %1973 = vmatpush1.bf16.msra.mxu0 0
  %1974 = vmatprep.subr.bf16.mxu0 0
  %1975 = vmatpush1.bf16.msra.mxu0 0
  %1976 = vmatprep.subr.bf16.mxu0 0
  %1977 = vmatpush1.bf16.msra.mxu0 0
  %1978 = vmatprep.subr.bf16.mxu0 0
  %1979 = vmatpush1.bf16.msra.mxu0 %v37
  %1980 = vmatprep.subr.bf16.mxu0 0
  %1981 = vmatpush1.bf16.msra.mxu0 %v36
  %1982 = vmatprep.subr.bf16.mxu0 0
  %1983 = vmatpush2.bf16.msra.mxu0 0
  %1984 = vmatprep.subr.bf16.mxu0 0
  %1985 = vmatpush2.bf16.msra.mxu0 0
  %1986 = vmatprep.subr.bf16.mxu0 0
  %1987 = vmatpush2.bf16.msra.mxu0 0
  %1988 = vmatprep.subr.bf16.mxu0 0
  %1989 = vmatpush2.bf16.msra.mxu0 0
  %1990 = vmatprep.subr.bf16.mxu0 0
  %1991 = vmatpush2.bf16.msra.mxu0 0
  %1992 = vmatprep.subr.bf16.mxu0 0
  %1993 = vmatpush2.bf16.msra.mxu0 0
  %1994 = vmatprep.subr.bf16.mxu0 0
  %1995 = vmatpush2.bf16.msra.mxu0 0
  %1996 = vmatprep.subr.bf16.mxu0 0
  %1997 = vmatpush2.bf16.msra.mxu0 0
  %1998 = vmatprep.mubr.bf16.mxu0 0
  %1999 = vmatmul.mubr.bf16.gmra.mxu0 %v1964
  %v2000 = vpop.f32.mrf.mxu0
  %v2001 = vadd.f32 0.0, %v2000
  %v2002 = vpop.f32.mrf.mxu0
  %v2003 = vpop.f32.mrf.mxu0
  %v2004 = vadd.f32 0.0, %v2003
  %v2005 = vpop.f32.mrf.mxu0
  %2006 = vdwg.mxu0
  %v2008 = vsel %vm40, %v1958, 0
  %2010 = vmatprep.subr.bf16.mxu0 0
  %2011 = vmatpush1.bf16.msra.mxu0 0
  %2012 = vmatprep.subr.bf16.mxu0 0
  %2013 = vmatpush1.bf16.msra.mxu0 0
  %2014 = vmatprep.subr.bf16.mxu0 0
  %2015 = vmatpush1.bf16.msra.mxu0 0
  %2016 = vmatprep.subr.bf16.mxu0 0
  %2017 = vmatpush1.bf16.msra.mxu0 0
  %2018 = vmatprep.subr.bf16.mxu0 0
  %2019 = vmatpush1.bf16.msra.mxu0 0
  %2020 = vmatprep.subr.bf16.mxu0 0
  %2021 = vmatpush1.bf16.msra.mxu0 0
  %2022 = vmatprep.subr.bf16.mxu0 0
  %2023 = vmatpush1.bf16.msra.mxu0 %v94
  %2024 = vmatprep.subr.bf16.mxu0 0
  %2025 = vmatpush1.bf16.msra.mxu0 %v93
  %2026 = vmatprep.subr.bf16.mxu0 0
  %2027 = vmatpush2.bf16.msra.mxu0 0
  %2028 = vmatprep.subr.bf16.mxu0 0
  %2029 = vmatpush2.bf16.msra.mxu0 0
  %2030 = vmatprep.subr.bf16.mxu0 0
  %2031 = vmatpush2.bf16.msra.mxu0 0
  %2032 = vmatprep.subr.bf16.mxu0 0
  %2033 = vmatpush2.bf16.msra.mxu0 0
  %2034 = vmatprep.subr.bf16.mxu0 0
  %2035 = vmatpush2.bf16.msra.mxu0 0
  %2036 = vmatprep.subr.bf16.mxu0 0
  %2037 = vmatpush2.bf16.msra.mxu0 0
  %2038 = vmatprep.subr.bf16.mxu0 0
  %2039 = vmatpush2.bf16.msra.mxu0 0
  %2040 = vmatprep.subr.bf16.mxu0 0
  %2041 = vmatpush2.bf16.msra.mxu0 0
  %2042 = vmatprep.mubr.bf16.mxu0 0
  %2043 = vmatmul.mubr.bf16.gmra.mxu0 %v2008
  %v2044 = vpop.f32.mrf.mxu0
  %v2045 = vadd.f32 %v2001, %v2044
  %v2046 = vpop.f32.mrf.mxu0
  %v2047 = vpop.f32.mrf.mxu0
  %v2048 = vadd.f32 %v2004, %v2047
  %v2049 = vpop.f32.mrf.mxu0
  %2050 = vdwg.mxu0
  %s2051 = scalar_lea.vmem %s0, 176
  %v2052 = vld [vmem:[%s2051] sm:$0xff]
  %v2053 = vld [vmem:[%s2051 + $0x8] sm:$0xff]
  %v2054 = vadd.f32 %v2052, %v2045
  %v2055 = vadd.f32 %v2053, %v2048
  %v2056 = vxor.u32 %v2054, 2147483648
  %v2057 = vxor.u32 %v2055, 2147483648
  %v2058 = vmul.f32 %v2056, 1.442695
  %v2059 = vpow.pop %v2058
  %v2060 = vmul.f32 %v2057, 1.442695
  %v2061 = vpow.pop %v2060
  %v2062 = vadd.f32 %v2059, 1.0
  %v2063 = vadd.f32 %v2061, 1.0
  %v2064 = vrcp.pop %v2062
  %v2065 = vmul.f32 1.0, %v2064
  %v2066 = vrcp.pop %v2063
  %v2067 = vmul.f32 1.0, %v2066
  %2070 = vrot.lane.b32.xlu0 %v2054, 64
  %v2071 = vpop.permute.xlu0 %2070
  %2072 = vrot.lane.b32.xlu0 %v2055, 64
  %v2073 = vpop.permute.xlu0 %2072
  %v2076 = vmul.f32 %v2065, %v2071
  %v2077 = vmul.f32 %v2067, %v2073
  %2080 = vrot.lane.b32.xlu0 %v2076, 96
  %v2081 = vpop.permute.xlu0 %2080
  %2082 = vrot.lane.b32.xlu0 %v2077, 96
  %v2083 = vpop.permute.xlu0 %2082
  %v2086 = vadd.f32 %v2054, %v2081
  %v2087 = vadd.f32 %v2055, %v2083
  %v2088 = vtanh.pop %v2086
  %v2089 = vtanh.pop %v2087
  %v2090 = vsub.f32 1.0, %v2065
  %v2091 = vsub.f32 1.0, %v2067
  %2094 = vrot.lane.b32.xlu0 %v2088, 64
  %v2095 = vpop.permute.xlu0 %2094
  %2096 = vrot.lane.b32.xlu0 %v2089, 64
  %v2097 = vpop.permute.xlu0 %2096
  %v2100 = vmul.f32 %v2090, %v2095
  %v2101 = vmul.f32 %v2091, %v2097
  %2104 = vrot.lane.b32.xlu0 %v1956, 32
  %v2105 = vpop.permute.xlu0 %2104
  %2106 = vrot.lane.b32.xlu0 %v1957, 32
  %v2107 = vpop.permute.xlu0 %2106
  %v2110 = vmul.f32 %v2065, %v2105
  %v2111 = vmul.f32 %v2067, %v2107
  %v2112 = vadd.f32 %v2100, %v2110
  %v2113 = vadd.f32 %v2101, %v2111
  %2116 = vrot.lane.b32.xlu0 %v2112, 96
  %v2117 = vpop.permute.xlu0 %2116
  %2118 = vrot.lane.b32.xlu0 %v2113, 96
  %v2119 = vpop.permute.xlu0 %2118
  %s2122 = scalar_lea.vmem %s3, 176
  %2123 = vst.msk [vmem:[%s2122] sm:$0xff] %vm40, %v2117
  %2124 = vst.msk [vmem:[%s2122 + $0x8] sm:$0xff] %vm40, %v2119
  %v2125 = vrot.slane %v2117, 6
  %v2126 = vrot.slane %v2119, 6
  %v2127 = vsel %vm26, %v2125, %v2126
  %v2128 = vsel %vm26, %v2126, %v2125
  %v2129 = vsel %vm26, 0.0, %v2128
  %v2130 = vsel %vm199, 0.0, %v2127
  %v2131 = vpack.c.bf16 %v2130, %v2129
  %v2132 = vpack.c.bf16 %v2113, %v2112
  %2134 = vrot.lane.b32.xlu0 %v2132, 96
  %v2135 = vpop.permute.xlu0 %2134
  %v2137 = vsel %vm40, %v2135, 0
  %2139 = vmatprep.subr.bf16.mxu0 0
  %2140 = vmatpush1.bf16.msra.mxu0 0
  %2141 = vmatprep.subr.bf16.mxu0 0
  %2142 = vmatpush1.bf16.msra.mxu0 0
  %2143 = vmatprep.subr.bf16.mxu0 0
  %2144 = vmatpush1.bf16.msra.mxu0 0
  %2145 = vmatprep.subr.bf16.mxu0 0
  %2146 = vmatpush1.bf16.msra.mxu0 0
  %2147 = vmatprep.subr.bf16.mxu0 0
  %2148 = vmatpush1.bf16.msra.mxu0 0
  %2149 = vmatprep.subr.bf16.mxu0 0
  %2150 = vmatpush1.bf16.msra.mxu0 0
  %2151 = vmatprep.subr.bf16.mxu0 0
  %2152 = vmatpush1.bf16.msra.mxu0 %v37
  %2153 = vmatprep.subr.bf16.mxu0 0
  %2154 = vmatpush1.bf16.msra.mxu0 %v36
  %2155 = vmatprep.subr.bf16.mxu0 0
  %2156 = vmatpush2.bf16.msra.mxu0 0
  %2157 = vmatprep.subr.bf16.mxu0 0
  %2158 = vmatpush2.bf16.msra.mxu0 0
  %2159 = vmatprep.subr.bf16.mxu0 0
  %2160 = vmatpush2.bf16.msra.mxu0 0
  %2161 = vmatprep.subr.bf16.mxu0 0
  %2162 = vmatpush2.bf16.msra.mxu0 0
  %2163 = vmatprep.subr.bf16.mxu0 0
  %2164 = vmatpush2.bf16.msra.mxu0 0
  %2165 = vmatprep.subr.bf16.mxu0 0
  %2166 = vmatpush2.bf16.msra.mxu0 0
  %2167 = vmatprep.subr.bf16.mxu0 0
  %2168 = vmatpush2.bf16.msra.mxu0 0
  %2169 = vmatprep.subr.bf16.mxu0 0
  %2170 = vmatpush2.bf16.msra.mxu0 0
  %2171 = vmatprep.mubr.bf16.mxu0 0
  %2172 = vmatmul.mubr.bf16.gmra.mxu0 %v2137
  %v2173 = vpop.f32.mrf.mxu0
  %v2174 = vadd.f32 0.0, %v2173
  %v2175 = vpop.f32.mrf.mxu0
  %v2176 = vpop.f32.mrf.mxu0
  %v2177 = vadd.f32 0.0, %v2176
  %v2178 = vpop.f32.mrf.mxu0
  %2179 = vdwg.mxu0
  %v2181 = vsel %vm40, %v2131, 0
  %2183 = vmatprep.subr.bf16.mxu0 0
  %2184 = vmatpush1.bf16.msra.mxu0 0
  %2185 = vmatprep.subr.bf16.mxu0 0
  %2186 = vmatpush1.bf16.msra.mxu0 0
  %2187 = vmatprep.subr.bf16.mxu0 0
  %2188 = vmatpush1.bf16.msra.mxu0 0
  %2189 = vmatprep.subr.bf16.mxu0 0
  %2190 = vmatpush1.bf16.msra.mxu0 0
  %2191 = vmatprep.subr.bf16.mxu0 0
  %2192 = vmatpush1.bf16.msra.mxu0 0
  %2193 = vmatprep.subr.bf16.mxu0 0
  %2194 = vmatpush1.bf16.msra.mxu0 0
  %2195 = vmatprep.subr.bf16.mxu0 0
  %2196 = vmatpush1.bf16.msra.mxu0 %v94
  %2197 = vmatprep.subr.bf16.mxu0 0
  %2198 = vmatpush1.bf16.msra.mxu0 %v93
  %2199 = vmatprep.subr.bf16.mxu0 0
  %2200 = vmatpush2.bf16.msra.mxu0 0
  %2201 = vmatprep.subr.bf16.mxu0 0
  %2202 = vmatpush2.bf16.msra.mxu0 0
  %2203 = vmatprep.subr.bf16.mxu0 0
  %2204 = vmatpush2.bf16.msra.mxu0 0
  %2205 = vmatprep.subr.bf16.mxu0 0
  %2206 = vmatpush2.bf16.msra.mxu0 0
  %2207 = vmatprep.subr.bf16.mxu0 0
  %2208 = vmatpush2.bf16.msra.mxu0 0
  %2209 = vmatprep.subr.bf16.mxu0 0
  %2210 = vmatpush2.bf16.msra.mxu0 0
  %2211 = vmatprep.subr.bf16.mxu0 0
  %2212 = vmatpush2.bf16.msra.mxu0 0
  %2213 = vmatprep.subr.bf16.mxu0 0
  %2214 = vmatpush2.bf16.msra.mxu0 0
  %2215 = vmatprep.mubr.bf16.mxu0 0
  %2216 = vmatmul.mubr.bf16.gmra.mxu0 %v2181
  %v2217 = vpop.f32.mrf.mxu0
  %v2218 = vadd.f32 %v2174, %v2217
  %v2219 = vpop.f32.mrf.mxu0
  %v2220 = vpop.f32.mrf.mxu0
  %v2221 = vadd.f32 %v2177, %v2220
  %v2222 = vpop.f32.mrf.mxu0
  %2223 = vdwg.mxu0
  %s2224 = scalar_lea.vmem %s0, 192
  %v2225 = vld [vmem:[%s2224] sm:$0xff]
  %v2226 = vld [vmem:[%s2224 + $0x8] sm:$0xff]
  %v2227 = vadd.f32 %v2225, %v2218
  %v2228 = vadd.f32 %v2226, %v2221
  %v2229 = vxor.u32 %v2227, 2147483648
  %v2230 = vxor.u32 %v2228, 2147483648
  %v2231 = vmul.f32 %v2229, 1.442695
  %v2232 = vpow.pop %v2231
  %v2233 = vmul.f32 %v2230, 1.442695
  %v2234 = vpow.pop %v2233
  %v2235 = vadd.f32 %v2232, 1.0
  %v2236 = vadd.f32 %v2234, 1.0
  %v2237 = vrcp.pop %v2235
  %v2238 = vmul.f32 1.0, %v2237
  %v2239 = vrcp.pop %v2236
  %v2240 = vmul.f32 1.0, %v2239
  %2243 = vrot.lane.b32.xlu0 %v2227, 64
  %v2244 = vpop.permute.xlu0 %2243
  %2245 = vrot.lane.b32.xlu0 %v2228, 64
  %v2246 = vpop.permute.xlu0 %2245
  %v2249 = vmul.f32 %v2238, %v2244
  %v2250 = vmul.f32 %v2240, %v2246
  %2253 = vrot.lane.b32.xlu0 %v2249, 96
  %v2254 = vpop.permute.xlu0 %2253
  %2255 = vrot.lane.b32.xlu0 %v2250, 96
  %v2256 = vpop.permute.xlu0 %2255
  %v2259 = vadd.f32 %v2227, %v2254
  %v2260 = vadd.f32 %v2228, %v2256
  %v2261 = vtanh.pop %v2259
  %v2262 = vtanh.pop %v2260
  %v2263 = vsub.f32 1.0, %v2238
  %v2264 = vsub.f32 1.0, %v2240
  %2267 = vrot.lane.b32.xlu0 %v2261, 64
  %v2268 = vpop.permute.xlu0 %2267
  %2269 = vrot.lane.b32.xlu0 %v2262, 64
  %v2270 = vpop.permute.xlu0 %2269
  %v2273 = vmul.f32 %v2263, %v2268
  %v2274 = vmul.f32 %v2264, %v2270
  %2277 = vrot.lane.b32.xlu0 %v2129, 32
  %v2278 = vpop.permute.xlu0 %2277
  %2279 = vrot.lane.b32.xlu0 %v2130, 32
  %v2280 = vpop.permute.xlu0 %2279
  %v2283 = vmul.f32 %v2238, %v2278
  %v2284 = vmul.f32 %v2240, %v2280
  %v2285 = vadd.f32 %v2273, %v2283
  %v2286 = vadd.f32 %v2274, %v2284
  %2289 = vrot.lane.b32.xlu0 %v2285, 96
  %v2290 = vpop.permute.xlu0 %2289
  %2291 = vrot.lane.b32.xlu0 %v2286, 96
  %v2292 = vpop.permute.xlu0 %2291
  %s2295 = scalar_lea.vmem %s3, 192
  %2296 = vst.msk [vmem:[%s2295] sm:$0xff] %vm40, %v2290
  %2297 = vst.msk [vmem:[%s2295 + $0x8] sm:$0xff] %vm40, %v2292
  %v2298 = vrot.slane %v2290, 6
  %v2299 = vrot.slane %v2292, 6
  %v2300 = vsel %vm26, %v2298, %v2299
  %v2301 = vsel %vm26, %v2299, %v2298
  %v2302 = vsel %vm26, 0.0, %v2301
  %v2303 = vsel %vm199, 0.0, %v2300
  %v2304 = vpack.c.bf16 %v2303, %v2302
  %v2305 = vpack.c.bf16 %v2286, %v2285
  %2307 = vrot.lane.b32.xlu0 %v2305, 96
  %v2308 = vpop.permute.xlu0 %2307
  %v2310 = vsel %vm40, %v2308, 0
  %2312 = vmatprep.subr.bf16.mxu0 0
  %2313 = vmatpush1.bf16.msra.mxu0 0
  %2314 = vmatprep.subr.bf16.mxu0 0
  %2315 = vmatpush1.bf16.msra.mxu0 0
  %2316 = vmatprep.subr.bf16.mxu0 0
  %2317 = vmatpush1.bf16.msra.mxu0 0
  %2318 = vmatprep.subr.bf16.mxu0 0
  %2319 = vmatpush1.bf16.msra.mxu0 0
  %2320 = vmatprep.subr.bf16.mxu0 0
  %2321 = vmatpush1.bf16.msra.mxu0 0
  %2322 = vmatprep.subr.bf16.mxu0 0
  %2323 = vmatpush1.bf16.msra.mxu0 0
  %2324 = vmatprep.subr.bf16.mxu0 0
  %2325 = vmatpush1.bf16.msra.mxu0 %v37
  %2326 = vmatprep.subr.bf16.mxu0 0
  %2327 = vmatpush1.bf16.msra.mxu0 %v36
  %2328 = vmatprep.subr.bf16.mxu0 0
  %2329 = vmatpush2.bf16.msra.mxu0 0
  %2330 = vmatprep.subr.bf16.mxu0 0
  %2331 = vmatpush2.bf16.msra.mxu0 0
  %2332 = vmatprep.subr.bf16.mxu0 0
  %2333 = vmatpush2.bf16.msra.mxu0 0
  %2334 = vmatprep.subr.bf16.mxu0 0
  %2335 = vmatpush2.bf16.msra.mxu0 0
  %2336 = vmatprep.subr.bf16.mxu0 0
  %2337 = vmatpush2.bf16.msra.mxu0 0
  %2338 = vmatprep.subr.bf16.mxu0 0
  %2339 = vmatpush2.bf16.msra.mxu0 0
  %2340 = vmatprep.subr.bf16.mxu0 0
  %2341 = vmatpush2.bf16.msra.mxu0 0
  %2342 = vmatprep.subr.bf16.mxu0 0
  %2343 = vmatpush2.bf16.msra.mxu0 0
  %2344 = vmatprep.mubr.bf16.mxu0 0
  %2345 = vmatmul.mubr.bf16.gmra.mxu0 %v2310
  %v2346 = vpop.f32.mrf.mxu0
  %v2347 = vadd.f32 0.0, %v2346
  %v2348 = vpop.f32.mrf.mxu0
  %v2349 = vpop.f32.mrf.mxu0
  %v2350 = vadd.f32 0.0, %v2349
  %v2351 = vpop.f32.mrf.mxu0
  %2352 = vdwg.mxu0
  %v2354 = vsel %vm40, %v2304, 0
  %2356 = vmatprep.subr.bf16.mxu0 0
  %2357 = vmatpush1.bf16.msra.mxu0 0
  %2358 = vmatprep.subr.bf16.mxu0 0
  %2359 = vmatpush1.bf16.msra.mxu0 0
  %2360 = vmatprep.subr.bf16.mxu0 0
  %2361 = vmatpush1.bf16.msra.mxu0 0
  %2362 = vmatprep.subr.bf16.mxu0 0
  %2363 = vmatpush1.bf16.msra.mxu0 0
  %2364 = vmatprep.subr.bf16.mxu0 0
  %2365 = vmatpush1.bf16.msra.mxu0 0
  %2366 = vmatprep.subr.bf16.mxu0 0
  %2367 = vmatpush1.bf16.msra.mxu0 0
  %2368 = vmatprep.subr.bf16.mxu0 0
  %2369 = vmatpush1.bf16.msra.mxu0 %v94
  %2370 = vmatprep.subr.bf16.mxu0 0
  %2371 = vmatpush1.bf16.msra.mxu0 %v93
  %2372 = vmatprep.subr.bf16.mxu0 0
  %2373 = vmatpush2.bf16.msra.mxu0 0
  %2374 = vmatprep.subr.bf16.mxu0 0
  %2375 = vmatpush2.bf16.msra.mxu0 0
  %2376 = vmatprep.subr.bf16.mxu0 0
  %2377 = vmatpush2.bf16.msra.mxu0 0
  %2378 = vmatprep.subr.bf16.mxu0 0
  %2379 = vmatpush2.bf16.msra.mxu0 0
  %2380 = vmatprep.subr.bf16.mxu0 0
  %2381 = vmatpush2.bf16.msra.mxu0 0
  %2382 = vmatprep.subr.bf16.mxu0 0
  %2383 = vmatpush2.bf16.msra.mxu0 0
  %2384 = vmatprep.subr.bf16.mxu0 0
  %2385 = vmatpush2.bf16.msra.mxu0 0
  %2386 = vmatprep.subr.bf16.mxu0 0
  %2387 = vmatpush2.bf16.msra.mxu0 0
  %2388 = vmatprep.mubr.bf16.mxu0 0
  %2389 = vmatmul.mubr.bf16.gmra.mxu0 %v2354
  %v2390 = vpop.f32.mrf.mxu0
  %v2391 = vadd.f32 %v2347, %v2390
  %v2392 = vpop.f32.mrf.mxu0
  %v2393 = vpop.f32.mrf.mxu0
  %v2394 = vadd.f32 %v2350, %v2393
  %v2395 = vpop.f32.mrf.mxu0
  %2396 = vdwg.mxu0
  %s2397 = scalar_lea.vmem %s0, 208
  %v2398 = vld [vmem:[%s2397] sm:$0xff]
  %v2399 = vld [vmem:[%s2397 + $0x8] sm:$0xff]
  %v2400 = vadd.f32 %v2398, %v2391
  %v2401 = vadd.f32 %v2399, %v2394
  %v2402 = vxor.u32 %v2400, 2147483648
  %v2403 = vxor.u32 %v2401, 2147483648
  %v2404 = vmul.f32 %v2402, 1.442695
  %v2405 = vpow.pop %v2404
  %v2406 = vmul.f32 %v2403, 1.442695
  %v2407 = vpow.pop %v2406
  %v2408 = vadd.f32 %v2405, 1.0
  %v2409 = vadd.f32 %v2407, 1.0
  %v2410 = vrcp.pop %v2408
  %v2411 = vmul.f32 1.0, %v2410
  %v2412 = vrcp.pop %v2409
  %v2413 = vmul.f32 1.0, %v2412
  %2416 = vrot.lane.b32.xlu0 %v2400, 64
  %v2417 = vpop.permute.xlu0 %2416
  %2418 = vrot.lane.b32.xlu0 %v2401, 64
  %v2419 = vpop.permute.xlu0 %2418
  %v2422 = vmul.f32 %v2411, %v2417
  %v2423 = vmul.f32 %v2413, %v2419
  %2426 = vrot.lane.b32.xlu0 %v2422, 96
  %v2427 = vpop.permute.xlu0 %2426
  %2428 = vrot.lane.b32.xlu0 %v2423, 96
  %v2429 = vpop.permute.xlu0 %2428
  %v2432 = vadd.f32 %v2400, %v2427
  %v2433 = vadd.f32 %v2401, %v2429
  %v2434 = vtanh.pop %v2432
  %v2435 = vtanh.pop %v2433
  %v2436 = vsub.f32 1.0, %v2411
  %v2437 = vsub.f32 1.0, %v2413
  %2440 = vrot.lane.b32.xlu0 %v2434, 64
  %v2441 = vpop.permute.xlu0 %2440
  %2442 = vrot.lane.b32.xlu0 %v2435, 64
  %v2443 = vpop.permute.xlu0 %2442
  %v2446 = vmul.f32 %v2436, %v2441
  %v2447 = vmul.f32 %v2437, %v2443
  %2450 = vrot.lane.b32.xlu0 %v2302, 32
  %v2451 = vpop.permute.xlu0 %2450
  %2452 = vrot.lane.b32.xlu0 %v2303, 32
  %v2453 = vpop.permute.xlu0 %2452
  %v2456 = vmul.f32 %v2411, %v2451
  %v2457 = vmul.f32 %v2413, %v2453
  %v2458 = vadd.f32 %v2446, %v2456
  %v2459 = vadd.f32 %v2447, %v2457
  %2462 = vrot.lane.b32.xlu0 %v2458, 96
  %v2463 = vpop.permute.xlu0 %2462
  %2464 = vrot.lane.b32.xlu0 %v2459, 96
  %v2465 = vpop.permute.xlu0 %2464
  %s2468 = scalar_lea.vmem %s3, 208
  %2469 = vst.msk [vmem:[%s2468] sm:$0xff] %vm40, %v2463
  %2470 = vst.msk [vmem:[%s2468 + $0x8] sm:$0xff] %vm40, %v2465
  %v2471 = vrot.slane %v2463, 6
  %v2472 = vrot.slane %v2465, 6
  %v2473 = vsel %vm26, %v2471, %v2472
  %v2474 = vsel %vm26, %v2472, %v2471
  %v2475 = vsel %vm26, 0.0, %v2474
  %v2476 = vsel %vm199, 0.0, %v2473
  %v2477 = vpack.c.bf16 %v2476, %v2475
  %v2478 = vpack.c.bf16 %v2459, %v2458
  %2480 = vrot.lane.b32.xlu0 %v2478, 96
  %v2481 = vpop.permute.xlu0 %2480
  %v2483 = vsel %vm40, %v2481, 0
  %2485 = vmatprep.subr.bf16.mxu0 0
  %2486 = vmatpush1.bf16.msra.mxu0 0
  %2487 = vmatprep.subr.bf16.mxu0 0
  %2488 = vmatpush1.bf16.msra.mxu0 0
  %2489 = vmatprep.subr.bf16.mxu0 0
  %2490 = vmatpush1.bf16.msra.mxu0 0
  %2491 = vmatprep.subr.bf16.mxu0 0
  %2492 = vmatpush1.bf16.msra.mxu0 0
  %2493 = vmatprep.subr.bf16.mxu0 0
  %2494 = vmatpush1.bf16.msra.mxu0 0
  %2495 = vmatprep.subr.bf16.mxu0 0
  %2496 = vmatpush1.bf16.msra.mxu0 0
  %2497 = vmatprep.subr.bf16.mxu0 0
  %2498 = vmatpush1.bf16.msra.mxu0 %v37
  %2499 = vmatprep.subr.bf16.mxu0 0
  %2500 = vmatpush1.bf16.msra.mxu0 %v36
  %2501 = vmatprep.subr.bf16.mxu0 0
  %2502 = vmatpush2.bf16.msra.mxu0 0
  %2503 = vmatprep.subr.bf16.mxu0 0
  %2504 = vmatpush2.bf16.msra.mxu0 0
  %2505 = vmatprep.subr.bf16.mxu0 0
  %2506 = vmatpush2.bf16.msra.mxu0 0
  %2507 = vmatprep.subr.bf16.mxu0 0
  %2508 = vmatpush2.bf16.msra.mxu0 0
  %2509 = vmatprep.subr.bf16.mxu0 0
  %2510 = vmatpush2.bf16.msra.mxu0 0
  %2511 = vmatprep.subr.bf16.mxu0 0
  %2512 = vmatpush2.bf16.msra.mxu0 0
  %2513 = vmatprep.subr.bf16.mxu0 0
  %2514 = vmatpush2.bf16.msra.mxu0 0
  %2515 = vmatprep.subr.bf16.mxu0 0
  %2516 = vmatpush2.bf16.msra.mxu0 0
  %2517 = vmatprep.mubr.bf16.mxu0 0
  %2518 = vmatmul.mubr.bf16.gmra.mxu0 %v2483
  %v2519 = vpop.f32.mrf.mxu0
  %v2520 = vadd.f32 0.0, %v2519
  %v2521 = vpop.f32.mrf.mxu0
  %v2522 = vpop.f32.mrf.mxu0
  %v2523 = vadd.f32 0.0, %v2522
  %v2524 = vpop.f32.mrf.mxu0
  %2525 = vdwg.mxu0
  %v2527 = vsel %vm40, %v2477, 0
  %2529 = vmatprep.subr.bf16.mxu0 0
  %2530 = vmatpush1.bf16.msra.mxu0 0
  %2531 = vmatprep.subr.bf16.mxu0 0
  %2532 = vmatpush1.bf16.msra.mxu0 0
  %2533 = vmatprep.subr.bf16.mxu0 0
  %2534 = vmatpush1.bf16.msra.mxu0 0
  %2535 = vmatprep.subr.bf16.mxu0 0
  %2536 = vmatpush1.bf16.msra.mxu0 0
  %2537 = vmatprep.subr.bf16.mxu0 0
  %2538 = vmatpush1.bf16.msra.mxu0 0
  %2539 = vmatprep.subr.bf16.mxu0 0
  %2540 = vmatpush1.bf16.msra.mxu0 0
  %2541 = vmatprep.subr.bf16.mxu0 0
  %2542 = vmatpush1.bf16.msra.mxu0 %v94
  %2543 = vmatprep.subr.bf16.mxu0 0
  %2544 = vmatpush1.bf16.msra.mxu0 %v93
  %2545 = vmatprep.subr.bf16.mxu0 0
  %2546 = vmatpush2.bf16.msra.mxu0 0
  %2547 = vmatprep.subr.bf16.mxu0 0
  %2548 = vmatpush2.bf16.msra.mxu0 0
  %2549 = vmatprep.subr.bf16.mxu0 0
  %2550 = vmatpush2.bf16.msra.mxu0 0
  %2551 = vmatprep.subr.bf16.mxu0 0
  %2552 = vmatpush2.bf16.msra.mxu0 0
  %2553 = vmatprep.subr.bf16.mxu0 0
  %2554 = vmatpush2.bf16.msra.mxu0 0
  %2555 = vmatprep.subr.bf16.mxu0 0
  %2556 = vmatpush2.bf16.msra.mxu0 0
  %2557 = vmatprep.subr.bf16.mxu0 0
  %2558 = vmatpush2.bf16.msra.mxu0 0
  %2559 = vmatprep.subr.bf16.mxu0 0
  %2560 = vmatpush2.bf16.msra.mxu0 0
  %2561 = vmatprep.mubr.bf16.mxu0 0
  %2562 = vmatmul.mubr.bf16.gmra.mxu0 %v2527
  %v2563 = vpop.f32.mrf.mxu0
  %v2564 = vadd.f32 %v2520, %v2563
  %v2565 = vpop.f32.mrf.mxu0
  %v2566 = vpop.f32.mrf.mxu0
  %v2567 = vadd.f32 %v2523, %v2566
  %v2568 = vpop.f32.mrf.mxu0
  %2569 = vdwg.mxu0
  %s2570 = scalar_lea.vmem %s0, 224
  %v2571 = vld [vmem:[%s2570] sm:$0xff]
  %v2572 = vld [vmem:[%s2570 + $0x8] sm:$0xff]
  %v2573 = vadd.f32 %v2571, %v2564
  %v2574 = vadd.f32 %v2572, %v2567
  %v2575 = vxor.u32 %v2573, 2147483648
  %v2576 = vxor.u32 %v2574, 2147483648
  %v2577 = vmul.f32 %v2575, 1.442695
  %v2578 = vpow.pop %v2577
  %v2579 = vmul.f32 %v2576, 1.442695
  %v2580 = vpow.pop %v2579
  %v2581 = vadd.f32 %v2578, 1.0
  %v2582 = vadd.f32 %v2580, 1.0
  %v2583 = vrcp.pop %v2581
  %v2584 = vmul.f32 1.0, %v2583
  %v2585 = vrcp.pop %v2582
  %v2586 = vmul.f32 1.0, %v2585
  %2589 = vrot.lane.b32.xlu0 %v2573, 64
  %v2590 = vpop.permute.xlu0 %2589
  %2591 = vrot.lane.b32.xlu0 %v2574, 64
  %v2592 = vpop.permute.xlu0 %2591
  %v2595 = vmul.f32 %v2584, %v2590
  %v2596 = vmul.f32 %v2586, %v2592
  %2599 = vrot.lane.b32.xlu0 %v2595, 96
  %v2600 = vpop.permute.xlu0 %2599
  %2601 = vrot.lane.b32.xlu0 %v2596, 96
  %v2602 = vpop.permute.xlu0 %2601
  %v2605 = vadd.f32 %v2573, %v2600
  %v2606 = vadd.f32 %v2574, %v2602
  %v2607 = vtanh.pop %v2605
  %v2608 = vtanh.pop %v2606
  %v2609 = vsub.f32 1.0, %v2584
  %v2610 = vsub.f32 1.0, %v2586
  %2613 = vrot.lane.b32.xlu0 %v2607, 64
  %v2614 = vpop.permute.xlu0 %2613
  %2615 = vrot.lane.b32.xlu0 %v2608, 64
  %v2616 = vpop.permute.xlu0 %2615
  %v2619 = vmul.f32 %v2609, %v2614
  %v2620 = vmul.f32 %v2610, %v2616
  %2623 = vrot.lane.b32.xlu0 %v2475, 32
  %v2624 = vpop.permute.xlu0 %2623
  %2625 = vrot.lane.b32.xlu0 %v2476, 32
  %v2626 = vpop.permute.xlu0 %2625
  %v2629 = vmul.f32 %v2584, %v2624
  %v2630 = vmul.f32 %v2586, %v2626
  %v2631 = vadd.f32 %v2619, %v2629
  %v2632 = vadd.f32 %v2620, %v2630
  %2635 = vrot.lane.b32.xlu0 %v2631, 96
  %v2636 = vpop.permute.xlu0 %2635
  %2637 = vrot.lane.b32.xlu0 %v2632, 96
  %v2638 = vpop.permute.xlu0 %2637
  %s2641 = scalar_lea.vmem %s3, 224
  %2642 = vst.msk [vmem:[%s2641] sm:$0xff] %vm40, %v2636
  %2643 = vst.msk [vmem:[%s2641 + $0x8] sm:$0xff] %vm40, %v2638
  // Predicated region
  $region14: #{recurrent2d_forward.1} parent=0 // pred_check
    _
  $region15: #{recurrent2d_forward.1} parent=0 // pred_check_branch
    %2645 = sbr.rel (0) target = $region17
  $region16: #{recurrent2d_forward.1} parent=0 // pred_region
    _
  $region17: #{recurrent2d_forward.1} parent=0 // pred_fallthru
    _
  // Predicated region
  $region18: #{recurrent2d_forward.1} parent=0 // pred_check
    _
  $region19: #{recurrent2d_forward.1} parent=0 // pred_check_branch
    %2647 = sbr.rel (0) target = $region21
  $region20: #{recurrent2d_forward.1} parent=0 // pred_region
    _
  $region21: #{recurrent2d_forward.1} parent=0 // pred_fallthru
    _

</llo_original>
